<compile_context>
chip_gen: v7x
topology: tpu7x:2x2x1
jax: 0.10.0
libtpu: 0.0.40
codegen_flags: <defaults>
</compile_context>

<pallas_src>
import jax
import jax.numpy as jnp
from jax import lax
from jax.experimental import pallas as pl
from jax.experimental.pallas import tpu as pltpu

# ---------------- problem sizes (small; GroupNorm needs C % 32 == 0) --------
B = 2
C_IN = 64
C_OUT = 128          # != C_IN  -> nin_shortcut (1x1 conv) path
L = 16
TEMB = 128
GROUPS = 32
EPS = 1e-6

MXU_DTYPE = jnp.bfloat16   # matmul operand dtype (accumulation is always f32)


# ---------------- Pallas kernel ---------------------------------------------
def resnet_block_kernel(x_ref, temb_ref, bsel_ref, bselt_ref, sdown_ref, sup_ref,
                        g1_ref, be1_ref, sel1_ref, sel1t_ref, w1_ref, b1_ref,
                        wt_ref, bt_ref,
                        g2_ref, be2_ref, sel2_ref, sel2t_ref, w2_ref, b2_ref,
                        ws_ref, bs_ref,
                        o_ref):
    f32 = jnp.float32
    x2 = x_ref[...]                              # (B*L, C_in)  f32, channels-last
    bl = x2.shape[0]
    lsz = bl // bsel_ref.shape[0]

    bsel = bsel_ref[...]                         # (B, B*L)   f32, row -> batch sum
    bselt = bselt_ref[...]                       # (B*L, B)   f32, batch -> row bcast
    sdown = sdown_ref[...]                       # (B*L, B*L) bf16, row l <- l-1 (0 at l=0)
    sup = sup_ref[...]                           # (B*L, B*L) bf16, row l <- l+1 (0 at l=L-1)

    def swish(v):
        return v * jax.nn.sigmoid(v)

    def dot32(a, b):
        return jnp.dot(a, b, preferred_element_type=f32)

    def gn_swish(h, gamma, beta, sel, selt):
        # GroupNorm (per batch, per group over L x channels_in_group) without any
        # reshape: reductions and broadcasts are tiny selector matmuls (MXU is idle).
        n = lsz * (h.shape[1] // sel.shape[1])           # elements per group
        s1 = dot32(bsel, h)                              # (B, C)  sum over L
        s2 = dot32(bsel, h * h)                          # (B, C)  sum of squares
        m = dot32(s1, sel) / n                           # (B, G)
        m2 = dot32(s2, sel) / n                          # (B, G)
        var = jnp.maximum(m2 - m * m, 0.0)
        rstd = lax.rsqrt(var + EPS)
        mean_c = dot32(m, selt)                          # (B, C)  group -> channel
        rstd_c = dot32(rstd, selt)                       # (B, C)
        a = rstd_c * gamma                               # gamma/beta: (1, C)
        b = beta - mean_c * a
        a_rows = dot32(bselt, a)                         # (B*L, C) per-batch broadcast
        b_rows = dot32(bselt, b)
        return swish(h * a_rows + b_rows)

    def conv3(h, w_ref, bias):
        # Conv1d(k=3, pad=1): out[l] = h[l-1]@W0 + h[l]@W1 + h[l+1]@W2 + bias.
        # Shifts are exact 0/1 matrices (bf16-exact); taps are lane-dense matmuls.
        hb = h.astype(MXU_DTYPE)
        h_dn = dot32(sdown, hb).astype(MXU_DTYPE)        # rows shifted to l-1
        h_up = dot32(sup, hb).astype(MXU_DTYPE)          # rows shifted to l+1
        acc = dot32(h_dn, w_ref[0])
        acc = acc + dot32(hb, w_ref[1])
        acc = acc + dot32(h_up, w_ref[2])
        return acc + bias                                # bias added once

    # --- main branch ---
    h = gn_swish(x2, g1_ref[...], be1_ref[...], sel1_ref[...], sel1t_ref[...])
    h = conv3(h, w1_ref, b1_ref[...])                    # (B*L, C_out) f32

    # temb projection: one batched (B, TEMB) @ (TEMB, C_out) matmul,
    # broadcast over the L rows of each batch via the batch selector.
    t = swish(temb_ref[...]).astype(MXU_DTYPE)           # (B, TEMB)
    proj = dot32(t, wt_ref[...]) + bt_ref[...]           # (B, C_out)
    h = h + dot32(bselt, proj)

    h = gn_swish(h, g2_ref[...], be2_ref[...], sel2_ref[...], sel2t_ref[...])
    # TODO(synk): nn.Dropout is identity in eval mode; training-mode dropout not implemented.
    h = conv3(h, w2_ref, b2_ref[...])

    # --- shortcut branch (1x1 conv, since in_channels != out_channels) ---
    xs = dot32(x2.astype(MXU_DTYPE), ws_ref[...]) + bs_ref[...]

    o_ref[...] = (xs + h).astype(o_ref.dtype)            # (B*L, 128): lane-dense store


# ---------------- wrapper ----------------------------------------------------
@jax.jit
def resnet_block(x, temb, params):
    (g1, be1, w1, b1, wt, bt, g2, be2, w2, b2, ws, bs) = params
    bsz, cin, lsz = x.shape
    cout = w1.shape[0]
    bl = bsz * lsz

    # channels-last, rows = batch-major (b*L + l); lane axis = channels
    x2 = jnp.transpose(x, (0, 2, 1)).reshape(bl, cin).astype(jnp.float32)

    # weights laid out for (rows, C) @ (C, C_out); bf16 operands for the MXU
    w1_t = jnp.transpose(w1, (2, 1, 0)).astype(MXU_DTYPE)        # (3, C_in, C_out)
    w2_t = jnp.transpose(w2, (2, 1, 0)).astype(MXU_DTYPE)        # (3, C_out, C_out)
    wt_t = jnp.transpose(wt, (1, 0)).astype(MXU_DTYPE)           # (TEMB, C_out)
    ws_t = jnp.transpose(ws[:, :, 0], (1, 0)).astype(MXU_DTYPE)  # (C_in, C_out)

    def row(v):
        return v.reshape(1, -1).astype(jnp.float32)

    # channel -> group one-hot selectors (reshape-free GroupNorm)
    def selectors(c):
        cs = c // GROUPS
        s = (jnp.arange(c)[:, None] // cs == jnp.arange(GROUPS)[None, :])
        s = s.astype(jnp.float32)
        return s, s.T
    sel1, sel1t = selectors(cin)
    sel2, sel2t = selectors(cout)

    # row -> batch selectors (per-batch reductions / broadcasts as matmuls)
    r = jnp.arange(bl)
    bsel = (r[None, :] // lsz == jnp.arange(bsz)[:, None]).astype(jnp.float32)   # (B, B*L)
    bselt = bsel.T                                                               # (B*L, B)

    # shift-and-mask matrices for the k=3, pad=1 conv taps (zero at batch edges)
    sdown = ((r[:, None] - 1 == r[None, :]) &
             ((r % lsz) != 0)[:, None]).astype(MXU_DTYPE)          # row l <- l-1
    sup = ((r[:, None] + 1 == r[None, :]) &
           ((r % lsz) != lsz - 1)[:, None]).astype(MXU_DTYPE)      # row l <- l+1

    args = (x2, temb.astype(jnp.float32), bsel, bselt, sdown, sup,
            row(g1), row(be1), sel1, sel1t, w1_t, row(b1),
            wt_t, row(bt),
            row(g2), row(be2), sel2, sel2t, w2_t, row(b2),
            ws_t, row(bs))

    def full_spec(a):
        zeros = (0,) * a.ndim
        return pl.BlockSpec(a.shape, lambda i: zeros)

    out2 = pl.pallas_call(
        resnet_block_kernel,
        out_shape=jax.ShapeDtypeStruct((bl, cout), jnp.float32),
        grid_spec=pltpu.PrefetchScalarGridSpec(
            num_scalar_prefetch=0,
            grid=(1,),                                   # collapsed grid: one invocation
            in_specs=[full_spec(a) for a in args],
            out_specs=pl.BlockSpec((bl, cout), lambda i: (0, 0)),
        ),
        compiler_params=pltpu.CompilerParams(
            dimension_semantics=("arbitrary",)),
    )(*args)

    # back to the module's NCL layout (layout plumbing outside the kernel)
    return jnp.transpose(out2.reshape(bsz, lsz, cout), (0, 2, 1))


# ---------------- pure-JAX reference (f32, NCL — mirrors the PyTorch module) -
def ref_forward(x, temb, params):
    (g1, be1, w1, b1, wt, bt, g2, be2, w2, b2, ws, bs) = params

    def swish(v):
        return v * jax.nn.sigmoid(v)

    def gn(h, gamma, beta):
        bsz, c, ell = h.shape
        hg = h.reshape(bsz, GROUPS, -1)
        mean = hg.mean(-1, keepdims=True)
        var = ((hg - mean) ** 2).mean(-1, keepdims=True)
        hn = ((hg - mean) / jnp.sqrt(var + EPS)).reshape(bsz, c, ell)
        return hn * gamma.reshape(1, c, 1) + beta.reshape(1, c, 1)

    def conv3(h, w, bias):  # w: (C_out, C_in, 3) — PyTorch Conv1d layout
        hp = jnp.pad(h, ((0, 0), (0, 0), (1, 1)))
        ell = h.shape[-1]
        out = bias.reshape(1, -1, 1)
        for k in range(3):
            out = out + jnp.einsum("oc,bcl->bol", w[:, :, k], hp[:, :, k:k + ell])
        return out

    h = swish(gn(x, g1, be1))
    h = conv3(h, w1, b1)
    h = h + (swish(temb) @ wt.T + bt)[:, :, None]
    h = swish(gn(h, g2, be2))
    h = conv3(h, w2, b2)
    xs = jnp.einsum("oc,bcl->bol", ws[:, :, 0], x) + bs.reshape(1, -1, 1)
    return xs + h


# ---------------- main -------------------------------------------------------
if __name__ == "__main__":
    key = jax.random.PRNGKey(0)
    keys = jax.random.split(key, 16)

    x = jax.random.normal(keys[0], (B, C_IN, L), jnp.float32)
    temb = jax.random.normal(keys[1], (B, TEMB), jnp.float32)

    # synthetic parameters in PyTorch-native shapes
    g1 = 1.0 + 0.1 * jax.random.normal(keys[2], (C_IN,), jnp.float32)
    be1 = 0.1 * jax.random.normal(keys[3], (C_IN,), jnp.float32)
    w1 = jax.random.normal(keys[4], (C_OUT, C_IN, 3), jnp.float32) * 0.05
    b1 = jax.random.normal(keys[5], (C_OUT,), jnp.float32) * 0.05
    wt = jax.random.normal(keys[6], (C_OUT, TEMB), jnp.float32) * 0.05
    bt = jax.random.normal(keys[7], (C_OUT,), jnp.float32) * 0.05
    g2 = 1.0 + 0.1 * jax.random.normal(keys[8], (C_OUT,), jnp.float32)
    be2 = 0.1 * jax.random.normal(keys[9], (C_OUT,), jnp.float32)
    w2 = jax.random.normal(keys[10], (C_OUT, C_OUT, 3), jnp.float32) * 0.05
    b2 = jax.random.normal(keys[11], (C_OUT,), jnp.float32) * 0.05
    ws = jax.random.normal(keys[12], (C_OUT, C_IN, 1), jnp.float32) * 0.05
    bs = jax.random.normal(keys[13], (C_OUT,), jnp.float32) * 0.05

    params = (g1, be1, w1, b1, wt, bt, g2, be2, w2, b2, ws, bs)

    out = jax.block_until_ready(resnet_block(x, temb, params))
    ref = jax.block_until_ready(ref_forward(x, temb, params))

    assert out.shape == (B, C_OUT, L)
    err = float(jnp.max(jnp.abs(out - ref)))
    # bf16 MXU operands (f32 accumulate) vs pure-f32 reference -> loose-ish tolerance
    assert err < 3e-2, f"mismatch vs reference: {err}"

    print("KERNEL_OK")
</pallas_src>

<mosaic_0001>
module attributes {stable_mosaic.version = 11 : i64} {
  func.func @resnet_block_kernel(%arg0: i32, %arg1: memref<32x64xf32, #tpu.memory_space<vmem>>, %arg2: memref<2x128xf32, #tpu.memory_space<vmem>>, %arg3: memref<2x32xf32, #tpu.memory_space<vmem>>, %arg4: memref<32x2xf32, #tpu.memory_space<vmem>>, %arg5: memref<32x32xbf16, #tpu.memory_space<vmem>>, %arg6: memref<32x32xbf16, #tpu.memory_space<vmem>>, %arg7: memref<1x64xf32, #tpu.memory_space<vmem>>, %arg8: memref<1x64xf32, #tpu.memory_space<vmem>>, %arg9: memref<64x32xf32, #tpu.memory_space<vmem>>, %arg10: memref<32x64xf32, #tpu.memory_space<vmem>>, %arg11: memref<3x64x128xbf16, #tpu.memory_space<vmem>>, %arg12: memref<1x128xf32, #tpu.memory_space<vmem>>, %arg13: memref<128x128xbf16, #tpu.memory_space<vmem>>, %arg14: memref<1x128xf32, #tpu.memory_space<vmem>>, %arg15: memref<1x128xf32, #tpu.memory_space<vmem>>, %arg16: memref<1x128xf32, #tpu.memory_space<vmem>>, %arg17: memref<128x32xf32, #tpu.memory_space<vmem>>, %arg18: memref<32x128xf32, #tpu.memory_space<vmem>>, %arg19: memref<3x128x128xbf16, #tpu.memory_space<vmem>>, %arg20: memref<1x128xf32, #tpu.memory_space<vmem>>, %arg21: memref<64x128xbf16, #tpu.memory_space<vmem>>, %arg22: memref<1x128xf32, #tpu.memory_space<vmem>>, %arg23: memref<32x128xf32, #tpu.memory_space<vmem>>) attributes {dimension_semantics = [#tpu.dimension_semantics<arbitrary>], iteration_bounds = array<i64: 1>, scalar_prefetch = 0 : i64, scratch_operands = 0 : i64, tpu.core_type = #tpu.core_type<tc>, window_params = [{pipeline_mode = #tpu.pipeline_mode<synchronous>, transform_indices = @transform_0, window_bounds = array<i64: 32, 64>}, {pipeline_mode = #tpu.pipeline_mode<synchronous>, transform_indices = @transform_1, window_bounds = array<i64: 2, 128>}, {pipeline_mode = #tpu.pipeline_mode<synchronous>, transform_indices = @transform_2, window_bounds = array<i64: 2, 32>}, {pipeline_mode = #tpu.pipeline_mode<synchronous>, transform_indices = @transform_3, window_bounds = array<i64: 32, 2>}, {pipeline_mode = #tpu.pipeline_mode<synchronous>, transform_indices = @transform_4, window_bounds = array<i64: 32, 32>}, {pipeline_mode = #tpu.pipeline_mode<synchronous>, transform_indices = @transform_5, window_bounds = array<i64: 32, 32>}, {pipeline_mode = #tpu.pipeline_mode<synchronous>, transform_indices = @transform_6, window_bounds = array<i64: 1, 64>}, {pipeline_mode = #tpu.pipeline_mode<synchronous>, transform_indices = @transform_7, window_bounds = array<i64: 1, 64>}, {pipeline_mode = #tpu.pipeline_mode<synchronous>, transform_indices = @transform_8, window_bounds = array<i64: 64, 32>}, {pipeline_mode = #tpu.pipeline_mode<synchronous>, transform_indices = @transform_9, window_bounds = array<i64: 32, 64>}, {pipeline_mode = #tpu.pipeline_mode<synchronous>, transform_indices = @transform_10, window_bounds = array<i64: 3, 64, 128>}, {pipeline_mode = #tpu.pipeline_mode<synchronous>, transform_indices = @transform_11, window_bounds = array<i64: 1, 128>}, {pipeline_mode = #tpu.pipeline_mode<synchronous>, transform_indices = @transform_12, window_bounds = array<i64: 128, 128>}, {pipeline_mode = #tpu.pipeline_mode<synchronous>, transform_indices = @transform_13, window_bounds = array<i64: 1, 128>}, {pipeline_mode = #tpu.pipeline_mode<synchronous>, transform_indices = @transform_14, window_bounds = array<i64: 1, 128>}, {pipeline_mode = #tpu.pipeline_mode<synchronous>, transform_indices = @transform_15, window_bounds = array<i64: 1, 128>}, {pipeline_mode = #tpu.pipeline_mode<synchronous>, transform_indices = @transform_16, window_bounds = array<i64: 128, 32>}, {pipeline_mode = #tpu.pipeline_mode<synchronous>, transform_indices = @transform_17, window_bounds = array<i64: 32, 128>}, {pipeline_mode = #tpu.pipeline_mode<synchronous>, transform_indices = @transform_18, window_bounds = array<i64: 3, 128, 128>}, {pipeline_mode = #tpu.pipeline_mode<synchronous>, transform_indices = @transform_19, window_bounds = array<i64: 1, 128>}, {pipeline_mode = #tpu.pipeline_mode<synchronous>, transform_indices = @transform_20, window_bounds = array<i64: 64, 128>}, {pipeline_mode = #tpu.pipeline_mode<synchronous>, transform_indices = @transform_21, window_bounds = array<i64: 1, 128>}, {pipeline_mode = #tpu.pipeline_mode<synchronous>, transform_indices = @transform_22, window_bounds = array<i64: 32, 128>}]} {
    %c0 = arith.constant 0 : index
    %c0_0 = arith.constant 0 : index
    %0 = vector.load %arg1[%c0, %c0_0] : memref<32x64xf32, #tpu.memory_space<vmem>>, vector<32x64xf32>
    %c0_1 = arith.constant 0 : index
    %c0_2 = arith.constant 0 : index
    %1 = vector.load %arg3[%c0_1, %c0_2] : memref<2x32xf32, #tpu.memory_space<vmem>>, vector<2x32xf32>
    %c0_3 = arith.constant 0 : index
    %c0_4 = arith.constant 0 : index
    %2 = vector.load %arg4[%c0_3, %c0_4] : memref<32x2xf32, #tpu.memory_space<vmem>>, vector<32x2xf32>
    %c0_5 = arith.constant 0 : index
    %c0_6 = arith.constant 0 : index
    %3 = vector.load %arg5[%c0_5, %c0_6] : memref<32x32xbf16, #tpu.memory_space<vmem>>, vector<32x32xbf16>
    %c0_7 = arith.constant 0 : index
    %c0_8 = arith.constant 0 : index
    %4 = vector.load %arg6[%c0_7, %c0_8] : memref<32x32xbf16, #tpu.memory_space<vmem>>, vector<32x32xbf16>
    %c0_9 = arith.constant 0 : index
    %c0_10 = arith.constant 0 : index
    %5 = vector.load %arg7[%c0_9, %c0_10] : memref<1x64xf32, #tpu.memory_space<vmem>>, vector<1x64xf32>
    %c0_11 = arith.constant 0 : index
    %c0_12 = arith.constant 0 : index
    %6 = vector.load %arg8[%c0_11, %c0_12] : memref<1x64xf32, #tpu.memory_space<vmem>>, vector<1x64xf32>
    %c0_13 = arith.constant 0 : index
    %c0_14 = arith.constant 0 : index
    %7 = vector.load %arg9[%c0_13, %c0_14] : memref<64x32xf32, #tpu.memory_space<vmem>>, vector<64x32xf32>
    %c0_15 = arith.constant 0 : index
    %c0_16 = arith.constant 0 : index
    %8 = vector.load %arg10[%c0_15, %c0_16] : memref<32x64xf32, #tpu.memory_space<vmem>>, vector<32x64xf32>
    %cst = arith.constant dense<0.000000e+00> : vector<2x64xf32>
    %9 = tpu.matmul %1, %0, %cst {dimension_numbers = #tpu.dot_dimension_numbers<[1], [0], [0], [1], [0, 0, 1, 1], [], []>} : vector<2x32xf32>, vector<32x64xf32>, vector<2x64xf32> -> vector<2x64xf32>
    %10 = arith.mulf %0, %0 : vector<32x64xf32>
    %cst_17 = arith.constant dense<0.000000e+00> : vector<2x64xf32>
    %11 = tpu.matmul %1, %10, %cst_17 {dimension_numbers = #tpu.dot_dimension_numbers<[1], [0], [0], [1], [0, 0, 1, 1], [], []>} : vector<2x32xf32>, vector<32x64xf32>, vector<2x64xf32> -> vector<2x64xf32>
    %cst_18 = arith.constant dense<0.000000e+00> : vector<2x32xf32>
    %12 = tpu.matmul %9, %7, %cst_18 {dimension_numbers = #tpu.dot_dimension_numbers<[1], [0], [0], [1], [0, 0, 1, 1], [], []>} : vector<2x64xf32>, vector<64x32xf32>, vector<2x32xf32> -> vector<2x32xf32>
    %cst_19 = arith.constant 3.200000e+01 : f32
    %13 = vector.broadcast %cst_19 : f32 to vector<2x32xf32>
    %14 = arith.divf %12, %13 : vector<2x32xf32>
    %cst_20 = arith.constant dense<0.000000e+00> : vector<2x32xf32>
    %15 = tpu.matmul %11, %7, %cst_20 {dimension_numbers = #tpu.dot_dimension_numbers<[1], [0], [0], [1], [0, 0, 1, 1], [], []>} : vector<2x64xf32>, vector<64x32xf32>, vector<2x32xf32> -> vector<2x32xf32>
    %cst_21 = arith.constant 3.200000e+01 : f32
    %16 = vector.broadcast %cst_21 : f32 to vector<2x32xf32>
    %17 = arith.divf %15, %16 : vector<2x32xf32>
    %18 = arith.mulf %14, %14 : vector<2x32xf32>
    %19 = arith.subf %17, %18 : vector<2x32xf32>
    %cst_22 = arith.constant 0.000000e+00 : f32
    %20 = vector.broadcast %cst_22 : f32 to vector<2x32xf32>
    %21 = arith.maximumf %19, %20 : vector<2x32xf32>
    %cst_23 = arith.constant 9.99999997E-7 : f32
    %22 = vector.broadcast %cst_23 : f32 to vector<2x32xf32>
    %23 = arith.addf %21, %22 : vector<2x32xf32>
    %24 = math.rsqrt %23 : vector<2x32xf32>
    %cst_24 = arith.constant dense<0.000000e+00> : vector<2x64xf32>
    %25 = tpu.matmul %14, %8, %cst_24 {dimension_numbers = #tpu.dot_dimension_numbers<[1], [0], [0], [1], [0, 0, 1, 1], [], []>} : vector<2x32xf32>, vector<32x64xf32>, vector<2x64xf32> -> vector<2x64xf32>
    %cst_25 = arith.constant dense<0.000000e+00> : vector<2x64xf32>
    %26 = tpu.matmul %24, %8, %cst_25 {dimension_numbers = #tpu.dot_dimension_numbers<[1], [0], [0], [1], [0, 0, 1, 1], [], []>} : vector<2x32xf32>, vector<32x64xf32>, vector<2x64xf32> -> vector<2x64xf32>
    %27 = vector.broadcast %5 : vector<1x64xf32> to vector<2x64xf32>
    %28 = arith.mulf %26, %27 : vector<2x64xf32>
    %29 = arith.mulf %25, %28 : vector<2x64xf32>
    %30 = vector.broadcast %6 : vector<1x64xf32> to vector<2x64xf32>
    %31 = arith.subf %30, %29 : vector<2x64xf32>
    %cst_26 = arith.constant dense<0.000000e+00> : vector<32x64xf32>
    %32 = tpu.matmul %2, %28, %cst_26 {dimension_numbers = #tpu.dot_dimension_numbers<[1], [0], [0], [1], [0, 0, 1, 1], [], []>} : vector<32x2xf32>, vector<2x64xf32>, vector<32x64xf32> -> vector<32x64xf32>
    %cst_27 = arith.constant dense<0.000000e+00> : vector<32x64xf32>
    %33 = tpu.matmul %2, %31, %cst_27 {dimension_numbers = #tpu.dot_dimension_numbers<[1], [0], [0], [1], [0, 0, 1, 1], [], []>} : vector<32x2xf32>, vector<2x64xf32>, vector<32x64xf32> -> vector<32x64xf32>
    %34 = arith.mulf %0, %32 : vector<32x64xf32>
    %35 = arith.addf %34, %33 : vector<32x64xf32>
    %36 = arith.negf %35 : vector<32x64xf32>
    %37 = math.exp %36 : vector<32x64xf32>
    %cst_28 = arith.constant 1.000000e+00 : f32
    %38 = vector.broadcast %cst_28 : f32 to vector<32x64xf32>
    %39 = arith.addf %38, %37 : vector<32x64xf32>
    %40 = arith.divf %38, %39 : vector<32x64xf32>
    %41 = arith.mulf %35, %40 : vector<32x64xf32>
    %c0_29 = arith.constant 0 : index
    %c0_30 = arith.constant 0 : index
    %42 = vector.load %arg12[%c0_29, %c0_30] : memref<1x128xf32, #tpu.memory_space<vmem>>, vector<1x128xf32>
    %43 = arith.truncf %41 : vector<32x64xf32> to vector<32x64xbf16>
    %cst_31 = arith.constant dense<0.000000e+00> : vector<32x64xf32>
    %44 = tpu.matmul %3, %43, %cst_31 {dimension_numbers = #tpu.dot_dimension_numbers<[1], [0], [0], [1], [0, 0, 1, 1], [], []>} : vector<32x32xbf16>, vector<32x64xbf16>, vector<32x64xf32> -> vector<32x64xf32>
    %45 = arith.truncf %44 : vector<32x64xf32> to vector<32x64xbf16>
    %cst_32 = arith.constant dense<0.000000e+00> : vector<32x64xf32>
    %46 = tpu.matmul %4, %43, %cst_32 {dimension_numbers = #tpu.dot_dimension_numbers<[1], [0], [0], [1], [0, 0, 1, 1], [], []>} : vector<32x32xbf16>, vector<32x64xbf16>, vector<32x64xf32> -> vector<32x64xf32>
    %47 = arith.truncf %46 : vector<32x64xf32> to vector<32x64xbf16>
    %c0_33 = arith.constant 0 : index
    %c0_34 = arith.constant 0 : index
    %c0_35 = arith.constant 0 : index
    %48 = vector.load %arg11[%c0_33, %c0_34, %c0_35] : memref<3x64x128xbf16, #tpu.memory_space<vmem>>, vector<1x64x128xbf16>
    %49 = vector.shape_cast %48 : vector<1x64x128xbf16> to vector<64x128xbf16>
    %cst_36 = arith.constant dense<0.000000e+00> : vector<32x128xf32>
    %50 = tpu.matmul %45, %49, %cst_36 {dimension_numbers = #tpu.dot_dimension_numbers<[1], [0], [0], [1], [0, 0, 1, 1], [], []>} : vector<32x64xbf16>, vector<64x128xbf16>, vector<32x128xf32> -> vector<32x128xf32>
    %c1 = arith.constant 1 : index
    %c0_37 = arith.constant 0 : index
    %c0_38 = arith.constant 0 : index
    %51 = vector.load %arg11[%c1, %c0_37, %c0_38] : memref<3x64x128xbf16, #tpu.memory_space<vmem>>, vector<1x64x128xbf16>
    %52 = vector.shape_cast %51 : vector<1x64x128xbf16> to vector<64x128xbf16>
    %cst_39 = arith.constant dense<0.000000e+00> : vector<32x128xf32>
    %53 = tpu.matmul %43, %52, %cst_39 {dimension_numbers = #tpu.dot_dimension_numbers<[1], [0], [0], [1], [0, 0, 1, 1], [], []>} : vector<32x64xbf16>, vector<64x128xbf16>, vector<32x128xf32> -> vector<32x128xf32>
    %54 = arith.addf %50, %53 : vector<32x128xf32>
    %c2 = arith.constant 2 : index
    %c0_40 = arith.constant 0 : index
    %c0_41 = arith.constant 0 : index
    %55 = vector.load %arg11[%c2, %c0_40, %c0_41] : memref<3x64x128xbf16, #tpu.memory_space<vmem>>, vector<1x64x128xbf16>
    %56 = vector.shape_cast %55 : vector<1x64x128xbf16> to vector<64x128xbf16>
    %cst_42 = arith.constant dense<0.000000e+00> : vector<32x128xf32>
    %57 = tpu.matmul %47, %56, %cst_42 {dimension_numbers = #tpu.dot_dimension_numbers<[1], [0], [0], [1], [0, 0, 1, 1], [], []>} : vector<32x64xbf16>, vector<64x128xbf16>, vector<32x128xf32> -> vector<32x128xf32>
    %58 = arith.addf %54, %57 : vector<32x128xf32>
    %59 = vector.broadcast %42 : vector<1x128xf32> to vector<32x128xf32>
    %60 = arith.addf %58, %59 : vector<32x128xf32>
    %c0_43 = arith.constant 0 : index
    %c0_44 = arith.constant 0 : index
    %61 = vector.load %arg2[%c0_43, %c0_44] : memref<2x128xf32, #tpu.memory_space<vmem>>, vector<2x128xf32>
    %62 = arith.negf %61 : vector<2x128xf32>
    %63 = math.exp %62 : vector<2x128xf32>
    %cst_45 = arith.constant 1.000000e+00 : f32
    %64 = vector.broadcast %cst_45 : f32 to vector<2x128xf32>
    %65 = arith.addf %64, %63 : vector<2x128xf32>
    %66 = arith.divf %64, %65 : vector<2x128xf32>
    %67 = arith.mulf %61, %66 : vector<2x128xf32>
    %68 = arith.truncf %67 : vector<2x128xf32> to vector<2x128xbf16>
    %c0_46 = arith.constant 0 : index
    %c0_47 = arith.constant 0 : index
    %69 = vector.load %arg13[%c0_46, %c0_47] : memref<128x128xbf16, #tpu.memory_space<vmem>>, vector<128x128xbf16>
    %cst_48 = arith.constant dense<0.000000e+00> : vector<2x128xf32>
    %70 = tpu.matmul %68, %69, %cst_48 {dimension_numbers = #tpu.dot_dimension_numbers<[1], [0], [0], [1], [0, 0, 1, 1], [], []>} : vector<2x128xbf16>, vector<128x128xbf16>, vector<2x128xf32> -> vector<2x128xf32>
    %c0_49 = arith.constant 0 : index
    %c0_50 = arith.constant 0 : index
    %71 = vector.load %arg14[%c0_49, %c0_50] : memref<1x128xf32, #tpu.memory_space<vmem>>, vector<1x128xf32>
    %72 = vector.broadcast %71 : vector<1x128xf32> to vector<2x128xf32>
    %73 = arith.addf %70, %72 : vector<2x128xf32>
    %cst_51 = arith.constant dense<0.000000e+00> : vector<32x128xf32>
    %74 = tpu.matmul %2, %73, %cst_51 {dimension_numbers = #tpu.dot_dimension_numbers<[1], [0], [0], [1], [0, 0, 1, 1], [], []>} : vector<32x2xf32>, vector<2x128xf32>, vector<32x128xf32> -> vector<32x128xf32>
    %75 = arith.addf %60, %74 : vector<32x128xf32>
    %c0_52 = arith.constant 0 : index
    %c0_53 = arith.constant 0 : index
    %76 = vector.load %arg15[%c0_52, %c0_53] : memref<1x128xf32, #tpu.memory_space<vmem>>, vector<1x128xf32>
    %c0_54 = arith.constant 0 : index
    %c0_55 = arith.constant 0 : index
    %77 = vector.load %arg16[%c0_54, %c0_55] : memref<1x128xf32, #tpu.memory_space<vmem>>, vector<1x128xf32>
    %c0_56 = arith.constant 0 : index
    %c0_57 = arith.constant 0 : index
    %78 = vector.load %arg17[%c0_56, %c0_57] : memref<128x32xf32, #tpu.memory_space<vmem>>, vector<128x32xf32>
    %c0_58 = arith.constant 0 : index
    %c0_59 = arith.constant 0 : index
    %79 = vector.load %arg18[%c0_58, %c0_59] : memref<32x128xf32, #tpu.memory_space<vmem>>, vector<32x128xf32>
    %cst_60 = arith.constant dense<0.000000e+00> : vector<2x128xf32>
    %80 = tpu.matmul %1, %75, %cst_60 {dimension_numbers = #tpu.dot_dimension_numbers<[1], [0], [0], [1], [0, 0, 1, 1], [], []>} : vector<2x32xf32>, vector<32x128xf32>, vector<2x128xf32> -> vector<2x128xf32>
    %81 = arith.mulf %75, %75 : vector<32x128xf32>
    %cst_61 = arith.constant dense<0.000000e+00> : vector<2x128xf32>
    %82 = tpu.matmul %1, %81, %cst_61 {dimension_numbers = #tpu.dot_dimension_numbers<[1], [0], [0], [1], [0, 0, 1, 1], [], []>} : vector<2x32xf32>, vector<32x128xf32>, vector<2x128xf32> -> vector<2x128xf32>
    %cst_62 = arith.constant dense<0.000000e+00> : vector<2x32xf32>
    %83 = tpu.matmul %80, %78, %cst_62 {dimension_numbers = #tpu.dot_dimension_numbers<[1], [0], [0], [1], [0, 0, 1, 1], [], []>} : vector<2x128xf32>, vector<128x32xf32>, vector<2x32xf32> -> vector<2x32xf32>
    %cst_63 = arith.constant 6.400000e+01 : f32
    %84 = vector.broadcast %cst_63 : f32 to vector<2x32xf32>
    %85 = arith.divf %83, %84 : vector<2x32xf32>
    %cst_64 = arith.constant dense<0.000000e+00> : vector<2x32xf32>
    %86 = tpu.matmul %82, %78, %cst_64 {dimension_numbers = #tpu.dot_dimension_numbers<[1], [0], [0], [1], [0, 0, 1, 1], [], []>} : vector<2x128xf32>, vector<128x32xf32>, vector<2x32xf32> -> vector<2x32xf32>
    %cst_65 = arith.constant 6.400000e+01 : f32
    %87 = vector.broadcast %cst_65 : f32 to vector<2x32xf32>
    %88 = arith.divf %86, %87 : vector<2x32xf32>
    %89 = arith.mulf %85, %85 : vector<2x32xf32>
    %90 = arith.subf %88, %89 : vector<2x32xf32>
    %cst_66 = arith.constant 0.000000e+00 : f32
    %91 = vector.broadcast %cst_66 : f32 to vector<2x32xf32>
    %92 = arith.maximumf %90, %91 : vector<2x32xf32>
    %cst_67 = arith.constant 9.99999997E-7 : f32
    %93 = vector.broadcast %cst_67 : f32 to vector<2x32xf32>
    %94 = arith.addf %92, %93 : vector<2x32xf32>
    %95 = math.rsqrt %94 : vector<2x32xf32>
    %cst_68 = arith.constant dense<0.000000e+00> : vector<2x128xf32>
    %96 = tpu.matmul %85, %79, %cst_68 {dimension_numbers = #tpu.dot_dimension_numbers<[1], [0], [0], [1], [0, 0, 1, 1], [], []>} : vector<2x32xf32>, vector<32x128xf32>, vector<2x128xf32> -> vector<2x128xf32>
    %cst_69 = arith.constant dense<0.000000e+00> : vector<2x128xf32>
    %97 = tpu.matmul %95, %79, %cst_69 {dimension_numbers = #tpu.dot_dimension_numbers<[1], [0], [0], [1], [0, 0, 1, 1], [], []>} : vector<2x32xf32>, vector<32x128xf32>, vector<2x128xf32> -> vector<2x128xf32>
    %98 = vector.broadcast %76 : vector<1x128xf32> to vector<2x128xf32>
    %99 = arith.mulf %97, %98 : vector<2x128xf32>
    %100 = arith.mulf %96, %99 : vector<2x128xf32>
    %101 = vector.broadcast %77 : vector<1x128xf32> to vector<2x128xf32>
    %102 = arith.subf %101, %100 : vector<2x128xf32>
    %cst_70 = arith.constant dense<0.000000e+00> : vector<32x128xf32>
    %103 = tpu.matmul %2, %99, %cst_70 {dimension_numbers = #tpu.dot_dimension_numbers<[1], [0], [0], [1], [0, 0, 1, 1], [], []>} : vector<32x2xf32>, vector<2x128xf32>, vector<32x128xf32> -> vector<32x128xf32>
    %cst_71 = arith.constant dense<0.000000e+00> : vector<32x128xf32>
    %104 = tpu.matmul %2, %102, %cst_71 {dimension_numbers = #tpu.dot_dimension_numbers<[1], [0], [0], [1], [0, 0, 1, 1], [], []>} : vector<32x2xf32>, vector<2x128xf32>, vector<32x128xf32> -> vector<32x128xf32>
    %105 = arith.mulf %75, %103 : vector<32x128xf32>
    %106 = arith.addf %105, %104 : vector<32x128xf32>
    %107 = arith.negf %106 : vector<32x128xf32>
    %108 = math.exp %107 : vector<32x128xf32>
    %cst_72 = arith.constant 1.000000e+00 : f32
    %109 = vector.broadcast %cst_72 : f32 to vector<32x128xf32>
    %110 = arith.addf %109, %108 : vector<32x128xf32>
    %111 = arith.divf %109, %110 : vector<32x128xf32>
    %112 = arith.mulf %106, %111 : vector<32x128xf32>
    %c0_73 = arith.constant 0 : index
    %c0_74 = arith.constant 0 : index
    %113 = vector.load %arg20[%c0_73, %c0_74] : memref<1x128xf32, #tpu.memory_space<vmem>>, vector<1x128xf32>
    %114 = arith.truncf %112 : vector<32x128xf32> to vector<32x128xbf16>
    %cst_75 = arith.constant dense<0.000000e+00> : vector<32x128xf32>
    %115 = tpu.matmul %3, %114, %cst_75 {dimension_numbers = #tpu.dot_dimension_numbers<[1], [0], [0], [1], [0, 0, 1, 1], [], []>} : vector<32x32xbf16>, vector<32x128xbf16>, vector<32x128xf32> -> vector<32x128xf32>
    %116 = arith.truncf %115 : vector<32x128xf32> to vector<32x128xbf16>
    %cst_76 = arith.constant dense<0.000000e+00> : vector<32x128xf32>
    %117 = tpu.matmul %4, %114, %cst_76 {dimension_numbers = #tpu.dot_dimension_numbers<[1], [0], [0], [1], [0, 0, 1, 1], [], []>} : vector<32x32xbf16>, vector<32x128xbf16>, vector<32x128xf32> -> vector<32x128xf32>
    %118 = arith.truncf %117 : vector<32x128xf32> to vector<32x128xbf16>
    %c0_77 = arith.constant 0 : index
    %c0_78 = arith.constant 0 : index
    %c0_79 = arith.constant 0 : index
    %119 = vector.load %arg19[%c0_77, %c0_78, %c0_79] : memref<3x128x128xbf16, #tpu.memory_space<vmem>>, vector<1x128x128xbf16>
    %120 = vector.shape_cast %119 : vector<1x128x128xbf16> to vector<128x128xbf16>
    %cst_80 = arith.constant dense<0.000000e+00> : vector<32x128xf32>
    %121 = tpu.matmul %116, %120, %cst_80 {dimension_numbers = #tpu.dot_dimension_numbers<[1], [0], [0], [1], [0, 0, 1, 1], [], []>} : vector<32x128xbf16>, vector<128x128xbf16>, vector<32x128xf32> -> vector<32x128xf32>
    %c1_81 = arith.constant 1 : index
    %c0_82 = arith.constant 0 : index
    %c0_83 = arith.constant 0 : index
    %122 = vector.load %arg19[%c1_81, %c0_82, %c0_83] : memref<3x128x128xbf16, #tpu.memory_space<vmem>>, vector<1x128x128xbf16>
    %123 = vector.shape_cast %122 : vector<1x128x128xbf16> to vector<128x128xbf16>
    %cst_84 = arith.constant dense<0.000000e+00> : vector<32x128xf32>
    %124 = tpu.matmul %114, %123, %cst_84 {dimension_numbers = #tpu.dot_dimension_numbers<[1], [0], [0], [1], [0, 0, 1, 1], [], []>} : vector<32x128xbf16>, vector<128x128xbf16>, vector<32x128xf32> -> vector<32x128xf32>
    %125 = arith.addf %121, %124 : vector<32x128xf32>
    %c2_85 = arith.constant 2 : index
    %c0_86 = arith.constant 0 : index
    %c0_87 = arith.constant 0 : index
    %126 = vector.load %arg19[%c2_85, %c0_86, %c0_87] : memref<3x128x128xbf16, #tpu.memory_space<vmem>>, vector<1x128x128xbf16>
    %127 = vector.shape_cast %126 : vector<1x128x128xbf16> to vector<128x128xbf16>
    %cst_88 = arith.constant dense<0.000000e+00> : vector<32x128xf32>
    %128 = tpu.matmul %118, %127, %cst_88 {dimension_numbers = #tpu.dot_dimension_numbers<[1], [0], [0], [1], [0, 0, 1, 1], [], []>} : vector<32x128xbf16>, vector<128x128xbf16>, vector<32x128xf32> -> vector<32x128xf32>
    %129 = arith.addf %125, %128 : vector<32x128xf32>
    %130 = vector.broadcast %113 : vector<1x128xf32> to vector<32x128xf32>
    %131 = arith.addf %129, %130 : vector<32x128xf32>
    %132 = arith.truncf %0 : vector<32x64xf32> to vector<32x64xbf16>
    %c0_89 = arith.constant 0 : index
    %c0_90 = arith.constant 0 : index
    %133 = vector.load %arg21[%c0_89, %c0_90] : memref<64x128xbf16, #tpu.memory_space<vmem>>, vector<64x128xbf16>
    %cst_91 = arith.constant dense<0.000000e+00> : vector<32x128xf32>
    %134 = tpu.matmul %132, %133, %cst_91 {dimension_numbers = #tpu.dot_dimension_numbers<[1], [0], [0], [1], [0, 0, 1, 1], [], []>} : vector<32x64xbf16>, vector<64x128xbf16>, vector<32x128xf32> -> vector<32x128xf32>
    %c0_92 = arith.constant 0 : index
    %c0_93 = arith.constant 0 : index
    %135 = vector.load %arg22[%c0_92, %c0_93] : memref<1x128xf32, #tpu.memory_space<vmem>>, vector<1x128xf32>
    %136 = vector.broadcast %135 : vector<1x128xf32> to vector<32x128xf32>
    %137 = arith.addf %134, %136 : vector<32x128xf32>
    %138 = arith.addf %137, %131 : vector<32x128xf32>
    %c0_94 = arith.constant 0 : index
    %c0_95 = arith.constant 0 : index
    %139 = vector.load %arg23[%c0_94, %c0_95] : memref<32x128xf32, #tpu.memory_space<vmem>>, vector<32x128xf32>
    tpu.vector_store %arg23[%c0_94, %c0_95], %138 {strides = array<i32>} : memref<32x128xf32, #tpu.memory_space<vmem>>, vector<32x128xf32>,
    return
  }
  func.func @transform_0(%arg0: i32) -> (i32, i32) {
    %c0_i32 = arith.constant 0 : i32
    %c0_i32_0 = arith.constant 0 : i32
    %c0_i32_1 = arith.constant 0 : i32
    return %c0_i32, %c0_i32_0 : i32, i32
  }
  func.func @transform_1(%arg0: i32) -> (i32, i32) {
    %c0_i32 = arith.constant 0 : i32
    %c0_i32_0 = arith.constant 0 : i32
    %c0_i32_1 = arith.constant 0 : i32
    return %c0_i32, %c0_i32_0 : i32, i32
  }
  func.func @transform_2(%arg0: i32) -> (i32, i32) {
    %c0_i32 = arith.constant 0 : i32
    %c0_i32_0 = arith.constant 0 : i32
    %c0_i32_1 = arith.constant 0 : i32
    return %c0_i32, %c0_i32_0 : i32, i32
  }
  func.func @transform_3(%arg0: i32) -> (i32, i32) {
    %c0_i32 = arith.constant 0 : i32
    %c0_i32_0 = arith.constant 0 : i32
    %c0_i32_1 = arith.constant 0 : i32
    return %c0_i32, %c0_i32_0 : i32, i32
  }
  func.func @transform_4(%arg0: i32) -> (i32, i32) {
    %c0_i32 = arith.constant 0 : i32
    %c0_i32_0 = arith.constant 0 : i32
    %c0_i32_1 = arith.constant 0 : i32
    return %c0_i32, %c0_i32_0 : i32, i32
  }
  func.func @transform_5(%arg0: i32) -> (i32, i32) {
    %c0_i32 = arith.constant 0 : i32
    %c0_i32_0 = arith.constant 0 : i32
    %c0_i32_1 = arith.constant 0 : i32
    return %c0_i32, %c0_i32_0 : i32, i32
  }
  func.func @transform_6(%arg0: i32) -> (i32, i32) {
    %c0_i32 = arith.constant 0 : i32
    %c0_i32_0 = arith.constant 0 : i32
    %c0_i32_1 = arith.constant 0 : i32
    return %c0_i32, %c0_i32_0 : i32, i32
  }
  func.func @transform_7(%arg0: i32) -> (i32, i32) {
    %c0_i32 = arith.constant 0 : i32
    %c0_i32_0 = arith.constant 0 : i32
    %c0_i32_1 = arith.constant 0 : i32
    return %c0_i32, %c0_i32_0 : i32, i32
  }
  func.func @transform_8(%arg0: i32) -> (i32, i32) {
    %c0_i32 = arith.constant 0 : i32
    %c0_i32_0 = arith.constant 0 : i32
    %c0_i32_1 = arith.constant 0 : i32
    return %c0_i32, %c0_i32_0 : i32, i32
  }
  func.func @transform_9(%arg0: i32) -> (i32, i32) {
    %c0_i32 = arith.constant 0 : i32
    %c0_i32_0 = arith.constant 0 : i32
    %c0_i32_1 = arith.constant 0 : i32
    return %c0_i32, %c0_i32_0 : i32, i32
  }
  func.func @transform_10(%arg0: i32) -> (i32, i32, i32) {
    %c0_i32 = arith.constant 0 : i32
    %c0_i32_0 = arith.constant 0 : i32
    %c0_i32_1 = arith.constant 0 : i32
    %c0_i32_2 = arith.constant 0 : i32
    return %c0_i32, %c0_i32_0, %c0_i32_1 : i32, i32, i32
  }
  func.func @transform_11(%arg0: i32) -> (i32, i32) {
    %c0_i32 = arith.constant 0 : i32
    %c0_i32_0 = arith.constant 0 : i32
    %c0_i32_1 = arith.constant 0 : i32
    return %c0_i32, %c0_i32_0 : i32, i32
  }
  func.func @transform_12(%arg0: i32) -> (i32, i32) {
    %c0_i32 = arith.constant 0 : i32
    %c0_i32_0 = arith.constant 0 : i32
    %c0_i32_1 = arith.constant 0 : i32
    return %c0_i32, %c0_i32_0 : i32, i32
  }
  func.func @transform_13(%arg0: i32) -> (i32, i32) {
    %c0_i32 = arith.constant 0 : i32
    %c0_i32_0 = arith.constant 0 : i32
    %c0_i32_1 = arith.constant 0 : i32
    return %c0_i32, %c0_i32_0 : i32, i32
  }
  func.func @transform_14(%arg0: i32) -> (i32, i32) {
    %c0_i32 = arith.constant 0 : i32
    %c0_i32_0 = arith.constant 0 : i32
    %c0_i32_1 = arith.constant 0 : i32
    return %c0_i32, %c0_i32_0 : i32, i32
  }
  func.func @transform_15(%arg0: i32) -> (i32, i32) {
    %c0_i32 = arith.constant 0 : i32
    %c0_i32_0 = arith.constant 0 : i32
    %c0_i32_1 = arith.constant 0 : i32
    return %c0_i32, %c0_i32_0 : i32, i32
  }
  func.func @transform_16(%arg0: i32) -> (i32, i32) {
    %c0_i32 = arith.constant 0 : i32
    %c0_i32_0 = arith.constant 0 : i32
    %c0_i32_1 = arith.constant 0 : i32
    return %c0_i32, %c0_i32_0 : i32, i32
  }
  func.func @transform_17(%arg0: i32) -> (i32, i32) {
    %c0_i32 = arith.constant 0 : i32
    %c0_i32_0 = arith.constant 0 : i32
    %c0_i32_1 = arith.constant 0 : i32
    return %c0_i32, %c0_i32_0 : i32, i32
  }
  func.func @transform_18(%arg0: i32) -> (i32, i32, i32) {
    %c0_i32 = arith.constant 0 : i32
    %c0_i32_0 = arith.constant 0 : i32
    %c0_i32_1 = arith.constant 0 : i32
    %c0_i32_2 = arith.constant 0 : i32
    return %c0_i32, %c0_i32_0, %c0_i32_1 : i32, i32, i32
  }
  func.func @transform_19(%arg0: i32) -> (i32, i32) {
    %c0_i32 = arith.constant 0 : i32
    %c0_i32_0 = arith.constant 0 : i32
    %c0_i32_1 = arith.constant 0 : i32
    return %c0_i32, %c0_i32_0 : i32, i32
  }
  func.func @transform_20(%arg0: i32) -> (i32, i32) {
    %c0_i32 = arith.constant 0 : i32
    %c0_i32_0 = arith.constant 0 : i32
    %c0_i32_1 = arith.constant 0 : i32
    return %c0_i32, %c0_i32_0 : i32, i32
  }
  func.func @transform_21(%arg0: i32) -> (i32, i32) {
    %c0_i32 = arith.constant 0 : i32
    %c0_i32_0 = arith.constant 0 : i32
    %c0_i32_1 = arith.constant 0 : i32
    return %c0_i32, %c0_i32_0 : i32, i32
  }
  func.func @transform_22(%arg0: i32) -> (i32, i32) {
    %c0_i32 = arith.constant 0 : i32
    %c0_i32_0 = arith.constant 0 : i32
    %c0_i32_1 = arith.constant 0 : i32
    return %c0_i32, %c0_i32_0 : i32, i32
  }
}

</mosaic_0001>

<llo_original>
// kernel: resnet_block.1
$region0: #{resnet_block.1}
  #allocation0 [shape = 'u32[]', space=smem, size = 0x4, offset = 0x4, fixed_abs, tag = 'smem constant byte address 0x4 - core index']
  #allocation1 [shape = 'u32[144,128]{1,0:T(1,128)}', space=vmem, size = 0x12000, scoped, tag = 'internal scratch']
  %s0 = inlined_call_operand.vmem [shape: f32[32,64], index: 0, kind: input, shape index: {}]
  %s1 = inlined_call_operand.vmem [shape: f32[2,128], index: 1, kind: input, shape index: {}]
  %s2 = inlined_call_operand.vmem [shape: f32[2,32], index: 2, kind: input, shape index: {}]
  %s3 = inlined_call_operand.vmem [shape: f32[32,2], index: 3, kind: input, shape index: {}]
  %s4 = inlined_call_operand.vmem [shape: bf16[32,32], index: 4, kind: input, shape index: {}]
  %s5 = inlined_call_operand.vmem [shape: bf16[32,32], index: 5, kind: input, shape index: {}]
  %s6 = inlined_call_operand.vmem [shape: f32[1,64], index: 6, kind: input, shape index: {}]
  %s7 = inlined_call_operand.vmem [shape: f32[1,64], index: 7, kind: input, shape index: {}]
  %s8 = inlined_call_operand.vmem [shape: f32[64,32], index: 8, kind: input, shape index: {}]
  %s9 = inlined_call_operand.vmem [shape: f32[32,64], index: 9, kind: input, shape index: {}]
  %s10 = inlined_call_operand.vmem [shape: bf16[3,64,128], index: 10, kind: input, shape index: {}]
  %s11 = inlined_call_operand.vmem [shape: f32[1,128], index: 11, kind: input, shape index: {}]
  %s12 = inlined_call_operand.vmem [shape: bf16[128,128], index: 12, kind: input, shape index: {}]
  %s13 = inlined_call_operand.vmem [shape: f32[1,128], index: 13, kind: input, shape index: {}]
  %s14 = inlined_call_operand.vmem [shape: f32[1,128], index: 14, kind: input, shape index: {}]
  %s15 = inlined_call_operand.vmem [shape: f32[1,128], index: 15, kind: input, shape index: {}]
  %s16 = inlined_call_operand.vmem [shape: f32[128,32], index: 16, kind: input, shape index: {}]
  %s17 = inlined_call_operand.vmem [shape: f32[32,128], index: 17, kind: input, shape index: {}]
  %s18 = inlined_call_operand.vmem [shape: bf16[3,128,128], index: 18, kind: input, shape index: {}]
  %s19 = inlined_call_operand.vmem [shape: f32[1,128], index: 19, kind: input, shape index: {}]
  %s20 = inlined_call_operand.vmem [shape: bf16[64,128], index: 20, kind: input, shape index: {}]
  %s21 = inlined_call_operand.vmem [shape: f32[1,128], index: 21, kind: input, shape index: {}]
  %s22 = inlined_call_operand.hbm [shape: f32[32,128], index: 22, kind: output, shape index: {}]
  %s23 = sld [smem:[#allocation0]]
  $region98: #{resnet_block.1} parent=0
    _
  %s25 = ssub.s32 1, %s23
  %s26 = scalar_select 0, %s25, %s23
  $region1: #{resnet_block.1} parent=0
    #allocation2 [shape = 'u8[16384]{0}', space=vmem, size = 0x4000, scoped, tag = 'output window, operand 0, single buffered']
    #allocation3 [shape = 's32[1]{0}', space=sflag, size = 0x4, scoped, tag = 'scoped memory for resnet_block.1']
    %27 = vsyncpa [#allocation3], 0
    // Predicated region
    $region2: #{resnet_block.1} parent=1 // pred_check
      _
    $region3: #{resnet_block.1} parent=1 // pred_check_branch
      %29 = sbr.rel (0) target = $region5
    $region4: #{resnet_block.1} parent=1 // pred_region
      _
    $region5: #{resnet_block.1} parent=1 // pred_fallthru
      _
    // Predicated region
    $region6: #{resnet_block.1} parent=1 // pred_check
      _
    $region7: #{resnet_block.1} parent=1 // pred_check_branch
      %31 = sbr.rel (0) target = $region9
    $region8: #{resnet_block.1} parent=1 // pred_region
      _
    $region9: #{resnet_block.1} parent=1 // pred_fallthru
      _
    // Predicated region
    $region10: #{resnet_block.1} parent=1 // pred_check
      _
    $region11: #{resnet_block.1} parent=1 // pred_check_branch
      %33 = sbr.rel (0) target = $region13
    $region12: #{resnet_block.1} parent=1 // pred_region
      _
    $region13: #{resnet_block.1} parent=1 // pred_fallthru
      _
    // Predicated region
    $region14: #{resnet_block.1} parent=1 // pred_check
      _
    $region15: #{resnet_block.1} parent=1 // pred_check_branch
      %35 = sbr.rel (0) target = $region17
    $region16: #{resnet_block.1} parent=1 // pred_region
      _
    $region17: #{resnet_block.1} parent=1 // pred_fallthru
      _
    // Predicated region
    $region18: #{resnet_block.1} parent=1 // pred_check
      _
    $region19: #{resnet_block.1} parent=1 // pred_check_branch
      %37 = sbr.rel (0) target = $region21
    $region20: #{resnet_block.1} parent=1 // pred_region
      _
    $region21: #{resnet_block.1} parent=1 // pred_fallthru
      _
    // Predicated region
    $region22: #{resnet_block.1} parent=1 // pred_check
      _
    $region23: #{resnet_block.1} parent=1 // pred_check_branch
      %39 = sbr.rel (0) target = $region25
    $region24: #{resnet_block.1} parent=1 // pred_region
      _
    $region25: #{resnet_block.1} parent=1 // pred_fallthru
      _
    // Predicated region
    $region26: #{resnet_block.1} parent=1 // pred_check
      _
    $region27: #{resnet_block.1} parent=1 // pred_check_branch
      %41 = sbr.rel (0) target = $region29
    $region28: #{resnet_block.1} parent=1 // pred_region
      _
    $region29: #{resnet_block.1} parent=1 // pred_fallthru
      _
    // Predicated region
    $region30: #{resnet_block.1} parent=1 // pred_check
      _
    $region31: #{resnet_block.1} parent=1 // pred_check_branch
      %43 = sbr.rel (0) target = $region33
    $region32: #{resnet_block.1} parent=1 // pred_region
      _
    $region33: #{resnet_block.1} parent=1 // pred_fallthru
      _
    // Predicated region
    $region34: #{resnet_block.1} parent=1 // pred_check
      _
    $region35: #{resnet_block.1} parent=1 // pred_check_branch
      %45 = sbr.rel (0) target = $region37
    $region36: #{resnet_block.1} parent=1 // pred_region
      _
    $region37: #{resnet_block.1} parent=1 // pred_fallthru
      _
    // Predicated region
    $region38: #{resnet_block.1} parent=1 // pred_check
      _
    $region39: #{resnet_block.1} parent=1 // pred_check_branch
      %47 = sbr.rel (0) target = $region41
    $region40: #{resnet_block.1} parent=1 // pred_region
      _
    $region41: #{resnet_block.1} parent=1 // pred_fallthru
      _
    // Predicated region
    $region42: #{resnet_block.1} parent=1 // pred_check
      _
    $region43: #{resnet_block.1} parent=1 // pred_check_branch
      %49 = sbr.rel (0) target = $region45
    $region44: #{resnet_block.1} parent=1 // pred_region
      _
    $region45: #{resnet_block.1} parent=1 // pred_fallthru
      _
    // Predicated region
    $region46: #{resnet_block.1} parent=1 // pred_check
      _
    $region47: #{resnet_block.1} parent=1 // pred_check_branch
      %51 = sbr.rel (0) target = $region49
    $region48: #{resnet_block.1} parent=1 // pred_region
      _
    $region49: #{resnet_block.1} parent=1 // pred_fallthru
      _
    // Predicated region
    $region50: #{resnet_block.1} parent=1 // pred_check
      _
    $region51: #{resnet_block.1} parent=1 // pred_check_branch
      %53 = sbr.rel (0) target = $region53
    $region52: #{resnet_block.1} parent=1 // pred_region
      _
    $region53: #{resnet_block.1} parent=1 // pred_fallthru
      _
    // Predicated region
    $region54: #{resnet_block.1} parent=1 // pred_check
      _
    $region55: #{resnet_block.1} parent=1 // pred_check_branch
      %55 = sbr.rel (0) target = $region57
    $region56: #{resnet_block.1} parent=1 // pred_region
      _
    $region57: #{resnet_block.1} parent=1 // pred_fallthru
      _
    // Predicated region
    $region58: #{resnet_block.1} parent=1 // pred_check
      _
    $region59: #{resnet_block.1} parent=1 // pred_check_branch
      %57 = sbr.rel (0) target = $region61
    $region60: #{resnet_block.1} parent=1 // pred_region
      _
    $region61: #{resnet_block.1} parent=1 // pred_fallthru
      _
    // Predicated region
    $region62: #{resnet_block.1} parent=1 // pred_check
      _
    $region63: #{resnet_block.1} parent=1 // pred_check_branch
      %59 = sbr.rel (0) target = $region65
    $region64: #{resnet_block.1} parent=1 // pred_region
      _
    $region65: #{resnet_block.1} parent=1 // pred_fallthru
      _
    // Predicated region
    $region66: #{resnet_block.1} parent=1 // pred_check
      _
    $region67: #{resnet_block.1} parent=1 // pred_check_branch
      %61 = sbr.rel (0) target = $region69
    $region68: #{resnet_block.1} parent=1 // pred_region
      _
    $region69: #{resnet_block.1} parent=1 // pred_fallthru
      _
    // Predicated region
    $region70: #{resnet_block.1} parent=1 // pred_check
      _
    $region71: #{resnet_block.1} parent=1 // pred_check_branch
      %63 = sbr.rel (0) target = $region73
    $region72: #{resnet_block.1} parent=1 // pred_region
      _
    $region73: #{resnet_block.1} parent=1 // pred_fallthru
      _
    // Predicated region
    $region74: #{resnet_block.1} parent=1 // pred_check
      _
    $region75: #{resnet_block.1} parent=1 // pred_check_branch
      %65 = sbr.rel (0) target = $region77
    $region76: #{resnet_block.1} parent=1 // pred_region
      _
    $region77: #{resnet_block.1} parent=1 // pred_fallthru
      _
    // Predicated region
    $region78: #{resnet_block.1} parent=1 // pred_check
      _
    $region79: #{resnet_block.1} parent=1 // pred_check_branch
      %67 = sbr.rel (0) target = $region81
    $region80: #{resnet_block.1} parent=1 // pred_region
      _
    $region81: #{resnet_block.1} parent=1 // pred_fallthru
      _
    // Predicated region
    $region82: #{resnet_block.1} parent=1 // pred_check
      _
    $region83: #{resnet_block.1} parent=1 // pred_check_branch
      %69 = sbr.rel (0) target = $region85
    $region84: #{resnet_block.1} parent=1 // pred_region
      _
    $region85: #{resnet_block.1} parent=1 // pred_fallthru
      _
    // Predicated region
    $region86: #{resnet_block.1} parent=1 // pred_check
      _
    $region87: #{resnet_block.1} parent=1 // pred_check_branch
      %71 = sbr.rel (0) target = $region89
    $region88: #{resnet_block.1} parent=1 // pred_region
      _
    $region89: #{resnet_block.1} parent=1 // pred_fallthru
      _
    %v73 = vld [vmem:[%s0] sm:$0xff]
    %v74 = vld [vmem:[%s0 + $0x8] sm:$0xff]
    %v75 = vld [vmem:[%s0 + $0x10] sm:$0xff]
    %v76 = vld [vmem:[%s0 + $0x18] sm:$0xff]
    %v77 = vld [vmem:[%s2] sm:$0x3]
    %v78 = vld [vmem:[%s3] sm:$0xff]
    %v79 = vld [vmem:[%s3 + $0x8] sm:$0xff]
    %v80 = vld [vmem:[%s3 + $0x10] sm:$0xff]
    %v81 = vld [vmem:[%s3 + $0x18] sm:$0xff]
    %v82 = vld [vmem:[%s4] sm:$0xf]
    %v83 = vld [vmem:[%s4 + $0x4] sm:$0xf]
    %v84 = vld [vmem:[%s4 + $0x8] sm:$0xf]
    %v85 = vld [vmem:[%s4 + $0xc] sm:$0xf]
    %v86 = vld [vmem:[%s5] sm:$0xf]
    %v87 = vld [vmem:[%s5 + $0x4] sm:$0xf]
    %v88 = vld [vmem:[%s5 + $0x8] sm:$0xf]
    %v89 = vld [vmem:[%s5 + $0xc] sm:$0xf]
    %v90 = vld [vmem:[%s6] sm:$0x1]
    %v91 = vld [vmem:[%s7] sm:$0x1]
    %v92 = vld [vmem:[%s8] sm:$0xff]
    %v93 = vld [vmem:[%s8 + $0x8] sm:$0xff]
    %v94 = vld [vmem:[%s8 + $0x10] sm:$0xff]
    %v95 = vld [vmem:[%s8 + $0x18] sm:$0xff]
    %v96 = vld [vmem:[%s8 + $0x20] sm:$0xff]
    %v97 = vld [vmem:[%s8 + $0x28] sm:$0xff]
    %v98 = vld [vmem:[%s8 + $0x30] sm:$0xff]
    %v99 = vld [vmem:[%s8 + $0x38] sm:$0xff]
    %v100 = vld [vmem:[%s9] sm:$0xff]
    %v101 = vld [vmem:[%s9 + $0x8] sm:$0xff]
    %v102 = vld [vmem:[%s9 + $0x10] sm:$0xff]
    %v103 = vld [vmem:[%s9 + $0x18] sm:$0xff]
    %vm104 = vcmask 261120
    %v106 = vsel %vm104, %v77, 0
    %108 = vmatprep.subr.mxu0 0.0
    %109 = vmatpush1.msra.mxu0 %v73
    %110 = vmatprep.subr.mxu0 0.0
    %111 = vmatpush1.msra.mxu0 %v74
    %112 = vmatprep.subr.mxu0 0.0
    %113 = vmatpush1.msra.mxu0 %v75
    %114 = vmatprep.subr.mxu0 0.0
    %115 = vmatpush1.msra.mxu0 %v76
    %116 = vmatprep.subr.mxu0 0.0
    %117 = vmatpush1.msra.mxu0 0.0
    %118 = vmatprep.subr.mxu0 0.0
    %119 = vmatpush1.msra.mxu0 0.0
    %120 = vmatprep.subr.mxu0 0.0
    %121 = vmatpush1.msra.mxu0 0.0
    %122 = vmatprep.subr.mxu0 0.0
    %123 = vmatpush1.msra.mxu0 0.0
    %124 = vmatprep.subr.mxu0 0.0
    %125 = vmatpush1.msra.mxu0 0.0
    %126 = vmatprep.subr.mxu0 0.0
    %127 = vmatpush1.msra.mxu0 0.0
    %128 = vmatprep.subr.mxu0 0.0
    %129 = vmatpush1.msra.mxu0 0.0
    %130 = vmatprep.subr.mxu0 0.0
    %131 = vmatpush1.msra.mxu0 0.0
    %132 = vmatprep.subr.mxu0 0.0
    %133 = vmatpush1.msra.mxu0 0.0
    %134 = vmatprep.subr.mxu0 0.0
    %135 = vmatpush1.msra.mxu0 0.0
    %136 = vmatprep.subr.mxu0 0.0
    %137 = vmatpush1.msra.mxu0 0.0
    %138 = vmatprep.subr.mxu0 0.0
    %139 = vmatpush1.msra.mxu0 0.0
    %140 = vmatprep.subr.mxu0 0.0
    %141 = vmatpush1.msra.mxu0 0.0
    %142 = vmatprep.subr.mxu0 0.0
    %143 = vmatpush1.msra.mxu0 0.0
    %144 = vmatprep.subr.mxu0 0.0
    %145 = vmatpush1.msra.mxu0 0.0
    %146 = vmatprep.subr.mxu0 0.0
    %147 = vmatpush1.msra.mxu0 0.0
    %148 = vmatprep.subr.mxu0 0.0
    %149 = vmatpush1.msra.mxu0 0.0
    %150 = vmatprep.subr.mxu0 0.0
    %151 = vmatpush1.msra.mxu0 0.0
    %152 = vmatprep.subr.mxu0 0.0
    %153 = vmatpush1.msra.mxu0 0.0
    %154 = vmatprep.subr.mxu0 0.0
    %155 = vmatpush1.msra.mxu0 0.0
    %156 = vmatprep.subr.mxu0 0.0
    %157 = vmatpush1.msra.mxu0 0.0
    %158 = vmatprep.subr.mxu0 0.0
    %159 = vmatpush1.msra.mxu0 0.0
    %160 = vmatprep.subr.mxu0 0.0
    %161 = vmatpush1.msra.mxu0 0.0
    %162 = vmatprep.subr.mxu0 0.0
    %163 = vmatpush1.msra.mxu0 0.0
    %164 = vmatprep.subr.mxu0 0.0
    %165 = vmatpush1.msra.mxu0 0.0
    %166 = vmatprep.subr.mxu0 0.0
    %167 = vmatpush1.msra.mxu0 0.0
    %168 = vmatprep.subr.mxu0 0.0
    %169 = vmatpush1.msra.mxu0 0.0
    %170 = vmatprep.subr.mxu0 0.0
    %171 = vmatpush1.msra.mxu0 0.0
    %172 = vmatprep.mubr.f32.mxu0 0.0
    %173 = vmatmul.mubr.f32.gmra.mrb[0].mxu0 %v106
    %v174 = vpop.f32.mrb[0].mxu0
    %v175 = vadd.f32 0.0, %v174
    %v176 = vpop.f32.mrb[0].mxu0
    %177 = vdwg.mxu0
    %v178 = vmul.f32 %v73, %v73
    %v179 = vmul.f32 %v74, %v74
    %v180 = vmul.f32 %v75, %v75
    %v181 = vmul.f32 %v76, %v76
    %182 = vmatprep.subr.mxu0 0.0
    %183 = vmatpush1.msra.mxu0 %v178
    %184 = vmatprep.subr.mxu0 0.0
    %185 = vmatpush1.msra.mxu0 %v179
    %186 = vmatprep.subr.mxu0 0.0
    %187 = vmatpush1.msra.mxu0 %v180
    %188 = vmatprep.subr.mxu0 0.0
    %189 = vmatpush1.msra.mxu0 %v181
    %190 = vmatprep.subr.mxu0 0.0
    %191 = vmatpush1.msra.mxu0 0.0
    %192 = vmatprep.subr.mxu0 0.0
    %193 = vmatpush1.msra.mxu0 0.0
    %194 = vmatprep.subr.mxu0 0.0
    %195 = vmatpush1.msra.mxu0 0.0
    %196 = vmatprep.subr.mxu0 0.0
    %197 = vmatpush1.msra.mxu0 0.0
    %198 = vmatprep.subr.mxu0 0.0
    %199 = vmatpush1.msra.mxu0 0.0
    %200 = vmatprep.subr.mxu0 0.0
    %201 = vmatpush1.msra.mxu0 0.0
    %202 = vmatprep.subr.mxu0 0.0
    %203 = vmatpush1.msra.mxu0 0.0
    %204 = vmatprep.subr.mxu0 0.0
    %205 = vmatpush1.msra.mxu0 0.0
    %206 = vmatprep.subr.mxu0 0.0
    %207 = vmatpush1.msra.mxu0 0.0
    %208 = vmatprep.subr.mxu0 0.0
    %209 = vmatpush1.msra.mxu0 0.0
    %210 = vmatprep.subr.mxu0 0.0
    %211 = vmatpush1.msra.mxu0 0.0
    %212 = vmatprep.subr.mxu0 0.0
    %213 = vmatpush1.msra.mxu0 0.0
    %214 = vmatprep.subr.mxu0 0.0
    %215 = vmatpush1.msra.mxu0 0.0
    %216 = vmatprep.subr.mxu0 0.0
    %217 = vmatpush1.msra.mxu0 0.0
    %218 = vmatprep.subr.mxu0 0.0
    %219 = vmatpush1.msra.mxu0 0.0
    %220 = vmatprep.subr.mxu0 0.0
    %221 = vmatpush1.msra.mxu0 0.0
    %222 = vmatprep.subr.mxu0 0.0
    %223 = vmatpush1.msra.mxu0 0.0
    %224 = vmatprep.subr.mxu0 0.0
    %225 = vmatpush1.msra.mxu0 0.0
    %226 = vmatprep.subr.mxu0 0.0
    %227 = vmatpush1.msra.mxu0 0.0
    %228 = vmatprep.subr.mxu0 0.0
    %229 = vmatpush1.msra.mxu0 0.0
    %230 = vmatprep.subr.mxu0 0.0
    %231 = vmatpush1.msra.mxu0 0.0
    %232 = vmatprep.subr.mxu0 0.0
    %233 = vmatpush1.msra.mxu0 0.0
    %234 = vmatprep.subr.mxu0 0.0
    %235 = vmatpush1.msra.mxu0 0.0
    %236 = vmatprep.subr.mxu0 0.0
    %237 = vmatpush1.msra.mxu0 0.0
    %238 = vmatprep.subr.mxu0 0.0
    %239 = vmatpush1.msra.mxu0 0.0
    %240 = vmatprep.subr.mxu0 0.0
    %241 = vmatpush1.msra.mxu0 0.0
    %242 = vmatprep.subr.mxu0 0.0
    %243 = vmatpush1.msra.mxu0 0.0
    %244 = vmatprep.subr.mxu0 0.0
    %245 = vmatpush1.msra.mxu0 0.0
    %246 = vmatprep.mubr.f32.mxu0 0.0
    %247 = vmatmul.mubr.f32.gmra.mrb[0].mxu0 %v106
    %v248 = vpop.f32.mrb[0].mxu0
    %v249 = vadd.f32 0.0, %v248
    %v250 = vpop.f32.mrb[0].mxu0
    %251 = vdwg.mxu0
    %vm252 = vcmask 523264
    %v254 = vsel %vm252, %v175, 0
    %256 = vmatprep.subr.mxu0 0.0
    %257 = vmatpush1.msra.mxu0 %v92
    %258 = vmatprep.subr.mxu0 0.0
    %259 = vmatpush1.msra.mxu0 %v93
    %260 = vmatprep.subr.mxu0 0.0
    %261 = vmatpush1.msra.mxu0 %v94
    %262 = vmatprep.subr.mxu0 0.0
    %263 = vmatpush1.msra.mxu0 %v95
    %264 = vmatprep.subr.mxu0 0.0
    %265 = vmatpush1.msra.mxu0 %v96
    %266 = vmatprep.subr.mxu0 0.0
    %267 = vmatpush1.msra.mxu0 %v97
    %268 = vmatprep.subr.mxu0 0.0
    %269 = vmatpush1.msra.mxu0 %v98
    %270 = vmatprep.subr.mxu0 0.0
    %271 = vmatpush1.msra.mxu0 %v99
    %272 = vmatprep.subr.mxu0 0.0
    %273 = vmatpush1.msra.mxu0 0.0
    %274 = vmatprep.subr.mxu0 0.0
    %275 = vmatpush1.msra.mxu0 0.0
    %276 = vmatprep.subr.mxu0 0.0
    %277 = vmatpush1.msra.mxu0 0.0
    %278 = vmatprep.subr.mxu0 0.0
    %279 = vmatpush1.msra.mxu0 0.0
    %280 = vmatprep.subr.mxu0 0.0
    %281 = vmatpush1.msra.mxu0 0.0
    %282 = vmatprep.subr.mxu0 0.0
    %283 = vmatpush1.msra.mxu0 0.0
    %284 = vmatprep.subr.mxu0 0.0
    %285 = vmatpush1.msra.mxu0 0.0
    %286 = vmatprep.subr.mxu0 0.0
    %287 = vmatpush1.msra.mxu0 0.0
    %288 = vmatprep.subr.mxu0 0.0
    %289 = vmatpush1.msra.mxu0 0.0
    %290 = vmatprep.subr.mxu0 0.0
    %291 = vmatpush1.msra.mxu0 0.0
    %292 = vmatprep.subr.mxu0 0.0
    %293 = vmatpush1.msra.mxu0 0.0
    %294 = vmatprep.subr.mxu0 0.0
    %295 = vmatpush1.msra.mxu0 0.0
    %296 = vmatprep.subr.mxu0 0.0
    %297 = vmatpush1.msra.mxu0 0.0
    %298 = vmatprep.subr.mxu0 0.0
    %299 = vmatpush1.msra.mxu0 0.0
    %300 = vmatprep.subr.mxu0 0.0
    %301 = vmatpush1.msra.mxu0 0.0
    %302 = vmatprep.subr.mxu0 0.0
    %303 = vmatpush1.msra.mxu0 0.0
    %304 = vmatprep.subr.mxu0 0.0
    %305 = vmatpush1.msra.mxu0 0.0
    %306 = vmatprep.subr.mxu0 0.0
    %307 = vmatpush1.msra.mxu0 0.0
    %308 = vmatprep.subr.mxu0 0.0
    %309 = vmatpush1.msra.mxu0 0.0
    %310 = vmatprep.subr.mxu0 0.0
    %311 = vmatpush1.msra.mxu0 0.0
    %312 = vmatprep.subr.mxu0 0.0
    %313 = vmatpush1.msra.mxu0 0.0
    %314 = vmatprep.subr.mxu0 0.0
    %315 = vmatpush1.msra.mxu0 0.0
    %316 = vmatprep.subr.mxu0 0.0
    %317 = vmatpush1.msra.mxu0 0.0
    %318 = vmatprep.subr.mxu0 0.0
    %319 = vmatpush1.msra.mxu0 0.0
    %320 = vmatprep.mubr.f32.mxu0 0.0
    %321 = vmatmul.mubr.f32.gmra.mrb[0].mxu0 %v254
    %v322 = vpop.f32.mrb[0].mxu0
    %v323 = vadd.f32 0.0, %v322
    %v324 = vpop.f32.mrb[0].mxu0
    %325 = vdwg.mxu0
    %v326 = vrcp.pop 32.0
    %v327 = vmul.f32 %v323, %v326
    %v329 = vsel %vm252, %v249, 0
    %331 = vmatprep.subr.mxu0 0.0
    %332 = vmatpush1.msra.mxu0 %v92
    %333 = vmatprep.subr.mxu0 0.0
    %334 = vmatpush1.msra.mxu0 %v93
    %335 = vmatprep.subr.mxu0 0.0
    %336 = vmatpush1.msra.mxu0 %v94
    %337 = vmatprep.subr.mxu0 0.0
    %338 = vmatpush1.msra.mxu0 %v95
    %339 = vmatprep.subr.mxu0 0.0
    %340 = vmatpush1.msra.mxu0 %v96
    %341 = vmatprep.subr.mxu0 0.0
    %342 = vmatpush1.msra.mxu0 %v97
    %343 = vmatprep.subr.mxu0 0.0
    %344 = vmatpush1.msra.mxu0 %v98
    %345 = vmatprep.subr.mxu0 0.0
    %346 = vmatpush1.msra.mxu0 %v99
    %347 = vmatprep.subr.mxu0 0.0
    %348 = vmatpush1.msra.mxu0 0.0
    %349 = vmatprep.subr.mxu0 0.0
    %350 = vmatpush1.msra.mxu0 0.0
    %351 = vmatprep.subr.mxu0 0.0
    %352 = vmatpush1.msra.mxu0 0.0
    %353 = vmatprep.subr.mxu0 0.0
    %354 = vmatpush1.msra.mxu0 0.0
    %355 = vmatprep.subr.mxu0 0.0
    %356 = vmatpush1.msra.mxu0 0.0
    %357 = vmatprep.subr.mxu0 0.0
    %358 = vmatpush1.msra.mxu0 0.0
    %359 = vmatprep.subr.mxu0 0.0
    %360 = vmatpush1.msra.mxu0 0.0
    %361 = vmatprep.subr.mxu0 0.0
    %362 = vmatpush1.msra.mxu0 0.0
    %363 = vmatprep.subr.mxu0 0.0
    %364 = vmatpush1.msra.mxu0 0.0
    %365 = vmatprep.subr.mxu0 0.0
    %366 = vmatpush1.msra.mxu0 0.0
    %367 = vmatprep.subr.mxu0 0.0
    %368 = vmatpush1.msra.mxu0 0.0
    %369 = vmatprep.subr.mxu0 0.0
    %370 = vmatpush1.msra.mxu0 0.0
    %371 = vmatprep.subr.mxu0 0.0
    %372 = vmatpush1.msra.mxu0 0.0
    %373 = vmatprep.subr.mxu0 0.0
    %374 = vmatpush1.msra.mxu0 0.0
    %375 = vmatprep.subr.mxu0 0.0
    %376 = vmatpush1.msra.mxu0 0.0
    %377 = vmatprep.subr.mxu0 0.0
    %378 = vmatpush1.msra.mxu0 0.0
    %379 = vmatprep.subr.mxu0 0.0
    %380 = vmatpush1.msra.mxu0 0.0
    %381 = vmatprep.subr.mxu0 0.0
    %382 = vmatpush1.msra.mxu0 0.0
    %383 = vmatprep.subr.mxu0 0.0
    %384 = vmatpush1.msra.mxu0 0.0
    %385 = vmatprep.subr.mxu0 0.0
    %386 = vmatpush1.msra.mxu0 0.0
    %387 = vmatprep.subr.mxu0 0.0
    %388 = vmatpush1.msra.mxu0 0.0
    %389 = vmatprep.subr.mxu0 0.0
    %390 = vmatpush1.msra.mxu0 0.0
    %391 = vmatprep.subr.mxu0 0.0
    %392 = vmatpush1.msra.mxu0 0.0
    %393 = vmatprep.subr.mxu0 0.0
    %394 = vmatpush1.msra.mxu0 0.0
    %395 = vmatprep.mubr.f32.mxu0 0.0
    %396 = vmatmul.mubr.f32.gmra.mrb[0].mxu0 %v329
    %v397 = vpop.f32.mrb[0].mxu0
    %v398 = vadd.f32 0.0, %v397
    %v399 = vpop.f32.mrb[0].mxu0
    %400 = vdwg.mxu0
    %v401 = vmul.f32 %v398, %v326
    %v402 = vmul.f32 %v327, %v327
    %v403 = vsub.f32 %v401, %v402
    %v404 = vmax.f32 %v403, 0.0
    %v405 = vadd.f32 %v404, 1e-06
    %v406 = vrsqrt.pop %v405
    %v408 = vsel %vm104, %v327, 0
    %410 = vmatprep.subr.mxu0 0.0
    %411 = vmatpush1.msra.mxu0 %v100
    %412 = vmatprep.subr.mxu0 0.0
    %413 = vmatpush1.msra.mxu0 %v101
    %414 = vmatprep.subr.mxu0 0.0
    %415 = vmatpush1.msra.mxu0 %v102
    %416 = vmatprep.subr.mxu0 0.0
    %417 = vmatpush1.msra.mxu0 %v103
    %418 = vmatprep.subr.mxu0 0.0
    %419 = vmatpush1.msra.mxu0 0.0
    %420 = vmatprep.subr.mxu0 0.0
    %421 = vmatpush1.msra.mxu0 0.0
    %422 = vmatprep.subr.mxu0 0.0
    %423 = vmatpush1.msra.mxu0 0.0
    %424 = vmatprep.subr.mxu0 0.0
    %425 = vmatpush1.msra.mxu0 0.0
    %426 = vmatprep.subr.mxu0 0.0
    %427 = vmatpush1.msra.mxu0 0.0
    %428 = vmatprep.subr.mxu0 0.0
    %429 = vmatpush1.msra.mxu0 0.0
    %430 = vmatprep.subr.mxu0 0.0
    %431 = vmatpush1.msra.mxu0 0.0
    %432 = vmatprep.subr.mxu0 0.0
    %433 = vmatpush1.msra.mxu0 0.0
    %434 = vmatprep.subr.mxu0 0.0
    %435 = vmatpush1.msra.mxu0 0.0
    %436 = vmatprep.subr.mxu0 0.0
    %437 = vmatpush1.msra.mxu0 0.0
    %438 = vmatprep.subr.mxu0 0.0
    %439 = vmatpush1.msra.mxu0 0.0
    %440 = vmatprep.subr.mxu0 0.0
    %441 = vmatpush1.msra.mxu0 0.0
    %442 = vmatprep.subr.mxu0 0.0
    %443 = vmatpush1.msra.mxu0 0.0
    %444 = vmatprep.subr.mxu0 0.0
    %445 = vmatpush1.msra.mxu0 0.0
    %446 = vmatprep.subr.mxu0 0.0
    %447 = vmatpush1.msra.mxu0 0.0
    %448 = vmatprep.subr.mxu0 0.0
    %449 = vmatpush1.msra.mxu0 0.0
    %450 = vmatprep.subr.mxu0 0.0
    %451 = vmatpush1.msra.mxu0 0.0
    %452 = vmatprep.subr.mxu0 0.0
    %453 = vmatpush1.msra.mxu0 0.0
    %454 = vmatprep.subr.mxu0 0.0
    %455 = vmatpush1.msra.mxu0 0.0
    %456 = vmatprep.subr.mxu0 0.0
    %457 = vmatpush1.msra.mxu0 0.0
    %458 = vmatprep.subr.mxu0 0.0
    %459 = vmatpush1.msra.mxu0 0.0
    %460 = vmatprep.subr.mxu0 0.0
    %461 = vmatpush1.msra.mxu0 0.0
    %462 = vmatprep.subr.mxu0 0.0
    %463 = vmatpush1.msra.mxu0 0.0
    %464 = vmatprep.subr.mxu0 0.0
    %465 = vmatpush1.msra.mxu0 0.0
    %466 = vmatprep.subr.mxu0 0.0
    %467 = vmatpush1.msra.mxu0 0.0
    %468 = vmatprep.subr.mxu0 0.0
    %469 = vmatpush1.msra.mxu0 0.0
    %470 = vmatprep.subr.mxu0 0.0
    %471 = vmatpush1.msra.mxu0 0.0
    %472 = vmatprep.subr.mxu0 0.0
    %473 = vmatpush1.msra.mxu0 0.0
    %474 = vmatprep.mubr.f32.mxu0 0.0
    %475 = vmatmul.mubr.f32.gmra.mrb[0].mxu0 %v408
    %v476 = vpop.f32.mrb[0].mxu0
    %v477 = vadd.f32 0.0, %v476
    %v478 = vpop.f32.mrb[0].mxu0
    %479 = vdwg.mxu0
    %v481 = vsel %vm104, %v406, 0
    %483 = vmatprep.subr.mxu0 0.0
    %484 = vmatpush1.msra.mxu0 %v100
    %485 = vmatprep.subr.mxu0 0.0
    %486 = vmatpush1.msra.mxu0 %v101
    %487 = vmatprep.subr.mxu0 0.0
    %488 = vmatpush1.msra.mxu0 %v102
    %489 = vmatprep.subr.mxu0 0.0
    %490 = vmatpush1.msra.mxu0 %v103
    %491 = vmatprep.subr.mxu0 0.0
    %492 = vmatpush1.msra.mxu0 0.0
    %493 = vmatprep.subr.mxu0 0.0
    %494 = vmatpush1.msra.mxu0 0.0
    %495 = vmatprep.subr.mxu0 0.0
    %496 = vmatpush1.msra.mxu0 0.0
    %497 = vmatprep.subr.mxu0 0.0
    %498 = vmatpush1.msra.mxu0 0.0
    %499 = vmatprep.subr.mxu0 0.0
    %500 = vmatpush1.msra.mxu0 0.0
    %501 = vmatprep.subr.mxu0 0.0
    %502 = vmatpush1.msra.mxu0 0.0
    %503 = vmatprep.subr.mxu0 0.0
    %504 = vmatpush1.msra.mxu0 0.0
    %505 = vmatprep.subr.mxu0 0.0
    %506 = vmatpush1.msra.mxu0 0.0
    %507 = vmatprep.subr.mxu0 0.0
    %508 = vmatpush1.msra.mxu0 0.0
    %509 = vmatprep.subr.mxu0 0.0
    %510 = vmatpush1.msra.mxu0 0.0
    %511 = vmatprep.subr.mxu0 0.0
    %512 = vmatpush1.msra.mxu0 0.0
    %513 = vmatprep.subr.mxu0 0.0
    %514 = vmatpush1.msra.mxu0 0.0
    %515 = vmatprep.subr.mxu0 0.0
    %516 = vmatpush1.msra.mxu0 0.0
    %517 = vmatprep.subr.mxu0 0.0
    %518 = vmatpush1.msra.mxu0 0.0
    %519 = vmatprep.subr.mxu0 0.0
    %520 = vmatpush1.msra.mxu0 0.0
    %521 = vmatprep.subr.mxu0 0.0
    %522 = vmatpush1.msra.mxu0 0.0
    %523 = vmatprep.subr.mxu0 0.0
    %524 = vmatpush1.msra.mxu0 0.0
    %525 = vmatprep.subr.mxu0 0.0
    %526 = vmatpush1.msra.mxu0 0.0
    %527 = vmatprep.subr.mxu0 0.0
    %528 = vmatpush1.msra.mxu0 0.0
    %529 = vmatprep.subr.mxu0 0.0
    %530 = vmatpush1.msra.mxu0 0.0
    %531 = vmatprep.subr.mxu0 0.0
    %532 = vmatpush1.msra.mxu0 0.0
    %533 = vmatprep.subr.mxu0 0.0
    %534 = vmatpush1.msra.mxu0 0.0
    %535 = vmatprep.subr.mxu0 0.0
    %536 = vmatpush1.msra.mxu0 0.0
    %537 = vmatprep.subr.mxu0 0.0
    %538 = vmatpush1.msra.mxu0 0.0
    %539 = vmatprep.subr.mxu0 0.0
    %540 = vmatpush1.msra.mxu0 0.0
    %541 = vmatprep.subr.mxu0 0.0
    %542 = vmatpush1.msra.mxu0 0.0
    %543 = vmatprep.subr.mxu0 0.0
    %544 = vmatpush1.msra.mxu0 0.0
    %545 = vmatprep.subr.mxu0 0.0
    %546 = vmatpush1.msra.mxu0 0.0
    %547 = vmatprep.mubr.f32.mxu0 0.0
    %548 = vmatmul.mubr.f32.gmra.mrb[0].mxu0 %v481
    %v549 = vpop.f32.mrb[0].mxu0
    %v550 = vadd.f32 0.0, %v549
    %v551 = vpop.f32.mrb[0].mxu0
    %552 = vdwg.mxu0
    %v554 = vlaneseq
    %v555 = vshrl.u32 %v554, 7
    %v556 = vsub.s32 0, %v555
    %v557 = vrot.slane %v90, %v556
    %v559 = vmul.f32 %v550, %v557
    %v560 = vmul.f32 %v477, %v559
    %v562 = vlaneseq
    %v563 = vshrl.u32 %v562, 7
    %v564 = vsub.s32 0, %v563
    %v565 = vrot.slane %v91, %v564
    %v567 = vsub.f32 %v565, %v560
    %vm568 = vcmask 15360
    %v570 = vsel %vm568, %v78, 0
    %v573 = vsel %vm568, %v79, 0
    %v576 = vsel %vm568, %v80, 0
    %v579 = vsel %vm568, %v81, 0
    %vm581 = vcmask 1041408
    %v583 = vsel %vm581, %v559, 0
    %585 = vmatprep.subr.mxu0 0.0
    %586 = vmatpush1.msra.mxu0 %v583
    %587 = vmatprep.subr.mxu0 0.0
    %588 = vmatpush1.msra.mxu0 0.0
    %589 = vmatprep.subr.mxu0 0.0
    %590 = vmatpush1.msra.mxu0 0.0
    %591 = vmatprep.subr.mxu0 0.0
    %592 = vmatpush1.msra.mxu0 0.0
    %593 = vmatprep.subr.mxu0 0.0
    %594 = vmatpush1.msra.mxu0 0.0
    %595 = vmatprep.subr.mxu0 0.0
    %596 = vmatpush1.msra.mxu0 0.0
    %597 = vmatprep.subr.mxu0 0.0
    %598 = vmatpush1.msra.mxu0 0.0
    %599 = vmatprep.subr.mxu0 0.0
    %600 = vmatpush1.msra.mxu0 0.0
    %601 = vmatprep.subr.mxu0 0.0
    %602 = vmatpush1.msra.mxu0 0.0
    %603 = vmatprep.subr.mxu0 0.0
    %604 = vmatpush1.msra.mxu0 0.0
    %605 = vmatprep.subr.mxu0 0.0
    %606 = vmatpush1.msra.mxu0 0.0
    %607 = vmatprep.subr.mxu0 0.0
    %608 = vmatpush1.msra.mxu0 0.0
    %609 = vmatprep.subr.mxu0 0.0
    %610 = vmatpush1.msra.mxu0 0.0
    %611 = vmatprep.subr.mxu0 0.0
    %612 = vmatpush1.msra.mxu0 0.0
    %613 = vmatprep.subr.mxu0 0.0
    %614 = vmatpush1.msra.mxu0 0.0
    %615 = vmatprep.subr.mxu0 0.0
    %616 = vmatpush1.msra.mxu0 0.0
    %617 = vmatprep.subr.mxu0 0.0
    %618 = vmatpush1.msra.mxu0 0.0
    %619 = vmatprep.subr.mxu0 0.0
    %620 = vmatpush1.msra.mxu0 0.0
    %621 = vmatprep.subr.mxu0 0.0
    %622 = vmatpush1.msra.mxu0 0.0
    %623 = vmatprep.subr.mxu0 0.0
    %624 = vmatpush1.msra.mxu0 0.0
    %625 = vmatprep.subr.mxu0 0.0
    %626 = vmatpush1.msra.mxu0 0.0
    %627 = vmatprep.subr.mxu0 0.0
    %628 = vmatpush1.msra.mxu0 0.0
    %629 = vmatprep.subr.mxu0 0.0
    %630 = vmatpush1.msra.mxu0 0.0
    %631 = vmatprep.subr.mxu0 0.0
    %632 = vmatpush1.msra.mxu0 0.0
    %633 = vmatprep.subr.mxu0 0.0
    %634 = vmatpush1.msra.mxu0 0.0
    %635 = vmatprep.subr.mxu0 0.0
    %636 = vmatpush1.msra.mxu0 0.0
    %637 = vmatprep.subr.mxu0 0.0
    %638 = vmatpush1.msra.mxu0 0.0
    %639 = vmatprep.subr.mxu0 0.0
    %640 = vmatpush1.msra.mxu0 0.0
    %641 = vmatprep.subr.mxu0 0.0
    %642 = vmatpush1.msra.mxu0 0.0
    %643 = vmatprep.subr.mxu0 0.0
    %644 = vmatpush1.msra.mxu0 0.0
    %645 = vmatprep.subr.mxu0 0.0
    %646 = vmatpush1.msra.mxu0 0.0
    %647 = vmatprep.subr.mxu0 0.0
    %648 = vmatpush1.msra.mxu0 0.0
    %649 = vmatprep.mubr.f32.mxu0 0.0
    %650 = vmatmul.mubr.f32.gmra.mrb[0].mxu0 %v570
    %v651 = vpop.f32.mrb[0].mxu0
    %v652 = vadd.f32 0.0, %v651
    %v653 = vpop.f32.mrb[0].mxu0
    %654 = vmatprep.mubr.f32.mxu0 0.0
    %655 = vmatmul.mubr.f32.gmra.mrb[0].mxu0 %v573
    %v656 = vpop.f32.mrb[0].mxu0
    %v657 = vadd.f32 0.0, %v656
    %v658 = vpop.f32.mrb[0].mxu0
    %659 = vmatprep.mubr.f32.mxu0 0.0
    %660 = vmatmul.mubr.f32.gmra.mrb[0].mxu0 %v576
    %v661 = vpop.f32.mrb[0].mxu0
    %v662 = vadd.f32 0.0, %v661
    %v663 = vpop.f32.mrb[0].mxu0
    %664 = vmatprep.mubr.f32.mxu0 0.0
    %665 = vmatmul.mubr.f32.gmra.mrb[0].mxu0 %v579
    %v666 = vpop.f32.mrb[0].mxu0
    %v667 = vadd.f32 0.0, %v666
    %v668 = vpop.f32.mrb[0].mxu0
    %669 = vdwg.mxu0
    %v671 = vsel %vm581, %v567, 0
    %673 = vmatprep.subr.mxu0 0.0
    %674 = vmatpush1.msra.mxu0 %v671
    %675 = vmatprep.subr.mxu0 0.0
    %676 = vmatpush1.msra.mxu0 0.0
    %677 = vmatprep.subr.mxu0 0.0
    %678 = vmatpush1.msra.mxu0 0.0
    %679 = vmatprep.subr.mxu0 0.0
    %680 = vmatpush1.msra.mxu0 0.0
    %681 = vmatprep.subr.mxu0 0.0
    %682 = vmatpush1.msra.mxu0 0.0
    %683 = vmatprep.subr.mxu0 0.0
    %684 = vmatpush1.msra.mxu0 0.0
    %685 = vmatprep.subr.mxu0 0.0
    %686 = vmatpush1.msra.mxu0 0.0
    %687 = vmatprep.subr.mxu0 0.0
    %688 = vmatpush1.msra.mxu0 0.0
    %689 = vmatprep.subr.mxu0 0.0
    %690 = vmatpush1.msra.mxu0 0.0
    %691 = vmatprep.subr.mxu0 0.0
    %692 = vmatpush1.msra.mxu0 0.0
    %693 = vmatprep.subr.mxu0 0.0
    %694 = vmatpush1.msra.mxu0 0.0
    %695 = vmatprep.subr.mxu0 0.0
    %696 = vmatpush1.msra.mxu0 0.0
    %697 = vmatprep.subr.mxu0 0.0
    %698 = vmatpush1.msra.mxu0 0.0
    %699 = vmatprep.subr.mxu0 0.0
    %700 = vmatpush1.msra.mxu0 0.0
    %701 = vmatprep.subr.mxu0 0.0
    %702 = vmatpush1.msra.mxu0 0.0
    %703 = vmatprep.subr.mxu0 0.0
    %704 = vmatpush1.msra.mxu0 0.0
    %705 = vmatprep.subr.mxu0 0.0
    %706 = vmatpush1.msra.mxu0 0.0
    %707 = vmatprep.subr.mxu0 0.0
    %708 = vmatpush1.msra.mxu0 0.0
    %709 = vmatprep.subr.mxu0 0.0
    %710 = vmatpush1.msra.mxu0 0.0
    %711 = vmatprep.subr.mxu0 0.0
    %712 = vmatpush1.msra.mxu0 0.0
    %713 = vmatprep.subr.mxu0 0.0
    %714 = vmatpush1.msra.mxu0 0.0
    %715 = vmatprep.subr.mxu0 0.0
    %716 = vmatpush1.msra.mxu0 0.0
    %717 = vmatprep.subr.mxu0 0.0
    %718 = vmatpush1.msra.mxu0 0.0
    %719 = vmatprep.subr.mxu0 0.0
    %720 = vmatpush1.msra.mxu0 0.0
    %721 = vmatprep.subr.mxu0 0.0
    %722 = vmatpush1.msra.mxu0 0.0
    %723 = vmatprep.subr.mxu0 0.0
    %724 = vmatpush1.msra.mxu0 0.0
    %725 = vmatprep.subr.mxu0 0.0
    %726 = vmatpush1.msra.mxu0 0.0
    %727 = vmatprep.subr.mxu0 0.0
    %728 = vmatpush1.msra.mxu0 0.0
    %729 = vmatprep.subr.mxu0 0.0
    %730 = vmatpush1.msra.mxu0 0.0
    %731 = vmatprep.subr.mxu0 0.0
    %732 = vmatpush1.msra.mxu0 0.0
    %733 = vmatprep.subr.mxu0 0.0
    %734 = vmatpush1.msra.mxu0 0.0
    %735 = vmatprep.subr.mxu0 0.0
    %736 = vmatpush1.msra.mxu0 0.0
    %737 = vmatprep.mubr.f32.mxu0 0.0
    %738 = vmatmul.mubr.f32.gmra.mrb[0].mxu0 %v570
    %v739 = vpop.f32.mrb[0].mxu0
    %v740 = vadd.f32 0.0, %v739
    %v741 = vpop.f32.mrb[0].mxu0
    %742 = vmatprep.mubr.f32.mxu0 0.0
    %743 = vmatmul.mubr.f32.gmra.mrb[0].mxu0 %v573
    %v744 = vpop.f32.mrb[0].mxu0
    %v745 = vadd.f32 0.0, %v744
    %v746 = vpop.f32.mrb[0].mxu0
    %747 = vmatprep.mubr.f32.mxu0 0.0
    %748 = vmatmul.mubr.f32.gmra.mrb[0].mxu0 %v576
    %v749 = vpop.f32.mrb[0].mxu0
    %v750 = vadd.f32 0.0, %v749
    %v751 = vpop.f32.mrb[0].mxu0
    %752 = vmatprep.mubr.f32.mxu0 0.0
    %753 = vmatmul.mubr.f32.gmra.mrb[0].mxu0 %v579
    %v754 = vpop.f32.mrb[0].mxu0
    %v755 = vadd.f32 0.0, %v754
    %v756 = vpop.f32.mrb[0].mxu0
    %757 = vdwg.mxu0
    %v758 = vmul.f32 %v73, %v652
    %v759 = vmul.f32 %v74, %v657
    %v760 = vmul.f32 %v75, %v662
    %v761 = vmul.f32 %v76, %v667
    %v762 = vadd.f32 %v758, %v740
    %v763 = vadd.f32 %v759, %v745
    %v764 = vadd.f32 %v760, %v750
    %v765 = vadd.f32 %v761, %v755
    %v766 = vxor.u32 %v762, 2147483648
    %v767 = vxor.u32 %v763, 2147483648
    %v768 = vxor.u32 %v764, 2147483648
    %v769 = vxor.u32 %v765, 2147483648
    %v770 = vmul.f32 %v766, 1.442695
    %v771 = vpow.pop %v770
    %v772 = vmul.f32 %v767, 1.442695
    %v773 = vpow.pop %v772
    %v774 = vmul.f32 %v768, 1.442695
    %v775 = vpow.pop %v774
    %v776 = vmul.f32 %v769, 1.442695
    %v777 = vpow.pop %v776
    %v778 = vadd.f32 %v771, 1.0
    %v779 = vadd.f32 %v773, 1.0
    %v780 = vadd.f32 %v775, 1.0
    %v781 = vadd.f32 %v777, 1.0
    %v782 = vrcp.pop %v778
    %v783 = vmul.f32 1.0, %v782
    %v784 = vrcp.pop %v779
    %v785 = vmul.f32 1.0, %v784
    %v786 = vrcp.pop %v780
    %v787 = vmul.f32 1.0, %v786
    %v788 = vrcp.pop %v781
    %v789 = vmul.f32 1.0, %v788
    %v790 = vmul.f32 %v762, %v783
    %v791 = vmul.f32 %v763, %v785
    %v792 = vmul.f32 %v764, %v787
    %v793 = vmul.f32 %v765, %v789
    %v794 = vld [vmem:[%s11] sm:$0x1]
    %v795 = vpack.c.bf16 %v791, %v790
    %v796 = vpack.c.bf16 %v793, %v792
    %v801 = vunpack.c.l.b16 %v82
    %v802 = vunpack.c.l.b16 %v83
    %v803 = vunpack.c.l.b16 %v84
    %v804 = vunpack.c.l.b16 %v85
    %v805 = vpack.c.b16 %v802, %v801
    %v806 = vpack.c.b16 %v804, %v803
    %v808 = vsel %vm104, %v805, 0
    %v811 = vsel %vm104, %v806, 0
    %813 = vmatprep.subr.bf16.mxu0 0
    %814 = vmatpush1.bf16.msra.mxu0 %v795
    %815 = vmatprep.subr.bf16.mxu0 0
    %816 = vmatpush1.bf16.msra.mxu0 %v796
    %817 = vmatprep.subr.bf16.mxu0 0
    %818 = vmatpush1.bf16.msra.mxu0 0
    %819 = vmatprep.subr.bf16.mxu0 0
    %820 = vmatpush1.bf16.msra.mxu0 0
    %821 = vmatprep.subr.bf16.mxu0 0
    %822 = vmatpush1.bf16.msra.mxu0 0
    %823 = vmatprep.subr.bf16.mxu0 0
    %824 = vmatpush1.bf16.msra.mxu0 0
    %825 = vmatprep.subr.bf16.mxu0 0
    %826 = vmatpush1.bf16.msra.mxu0 0
    %827 = vmatprep.subr.bf16.mxu0 0
    %828 = vmatpush1.bf16.msra.mxu0 0
    %829 = vmatprep.subr.bf16.mxu0 0
    %830 = vmatpush1.bf16.msra.mxu0 0
    %831 = vmatprep.subr.bf16.mxu0 0
    %832 = vmatpush1.bf16.msra.mxu0 0
    %833 = vmatprep.subr.bf16.mxu0 0
    %834 = vmatpush1.bf16.msra.mxu0 0
    %835 = vmatprep.subr.bf16.mxu0 0
    %836 = vmatpush1.bf16.msra.mxu0 0
    %837 = vmatprep.subr.bf16.mxu0 0
    %838 = vmatpush1.bf16.msra.mxu0 0
    %839 = vmatprep.subr.bf16.mxu0 0
    %840 = vmatpush1.bf16.msra.mxu0 0
    %841 = vmatprep.subr.bf16.mxu0 0
    %842 = vmatpush1.bf16.msra.mxu0 0
    %843 = vmatprep.subr.bf16.mxu0 0
    %844 = vmatpush1.bf16.msra.mxu0 0
    %845 = vmatprep.mubr.bf16.mxu0 0
    %846 = vmatmul.mubr.bf16.gmra.mrb[0].mxu0 %v808
    %v847 = vpop.f32.mrb[0].mxu0
    %v848 = vadd.f32 0.0, %v847
    %v849 = vpop.f32.mrb[0].mxu0
    %v850 = vpop.f32.mrb[0].mxu0
    %v851 = vadd.f32 0.0, %v850
    %v852 = vpop.f32.mrb[0].mxu0
    %853 = vmatprep.mubr.bf16.mxu0 0
    %854 = vmatmul.mubr.bf16.gmra.mrb[0].mxu0 %v811
    %v855 = vpop.f32.mrb[0].mxu0
    %v856 = vadd.f32 0.0, %v855
    %v857 = vpop.f32.mrb[0].mxu0
    %v858 = vpop.f32.mrb[0].mxu0
    %v859 = vadd.f32 0.0, %v858
    %v860 = vpop.f32.mrb[0].mxu0
    %861 = vdwg.mxu0
    %v862 = vpack.c.bf16 %v851, %v848
    %v863 = vpack.c.bf16 %v859, %v856
    %v868 = vunpack.c.l.b16 %v86
    %v869 = vunpack.c.l.b16 %v87
    %v870 = vunpack.c.l.b16 %v88
    %v871 = vunpack.c.l.b16 %v89
    %v872 = vpack.c.b16 %v869, %v868
    %v873 = vpack.c.b16 %v871, %v870
    %v875 = vsel %vm104, %v872, 0
    %v878 = vsel %vm104, %v873, 0
    %880 = vmatprep.subr.bf16.mxu0 0
    %881 = vmatpush1.bf16.msra.mxu0 %v795
    %882 = vmatprep.subr.bf16.mxu0 0
    %883 = vmatpush1.bf16.msra.mxu0 %v796
    %884 = vmatprep.subr.bf16.mxu0 0
    %885 = vmatpush1.bf16.msra.mxu0 0
    %886 = vmatprep.subr.bf16.mxu0 0
    %887 = vmatpush1.bf16.msra.mxu0 0
    %888 = vmatprep.subr.bf16.mxu0 0
    %889 = vmatpush1.bf16.msra.mxu0 0
    %890 = vmatprep.subr.bf16.mxu0 0
    %891 = vmatpush1.bf16.msra.mxu0 0
    %892 = vmatprep.subr.bf16.mxu0 0
    %893 = vmatpush1.bf16.msra.mxu0 0
    %894 = vmatprep.subr.bf16.mxu0 0
    %895 = vmatpush1.bf16.msra.mxu0 0
    %896 = vmatprep.subr.bf16.mxu0 0
    %897 = vmatpush1.bf16.msra.mxu0 0
    %898 = vmatprep.subr.bf16.mxu0 0
    %899 = vmatpush1.bf16.msra.mxu0 0
    %900 = vmatprep.subr.bf16.mxu0 0
    %901 = vmatpush1.bf16.msra.mxu0 0
    %902 = vmatprep.subr.bf16.mxu0 0
    %903 = vmatpush1.bf16.msra.mxu0 0
    %904 = vmatprep.subr.bf16.mxu0 0
    %905 = vmatpush1.bf16.msra.mxu0 0
    %906 = vmatprep.subr.bf16.mxu0 0
    %907 = vmatpush1.bf16.msra.mxu0 0
    %908 = vmatprep.subr.bf16.mxu0 0
    %909 = vmatpush1.bf16.msra.mxu0 0
    %910 = vmatprep.subr.bf16.mxu0 0
    %911 = vmatpush1.bf16.msra.mxu0 0
    %912 = vmatprep.mubr.bf16.mxu0 0
    %913 = vmatmul.mubr.bf16.gmra.mrb[0].mxu0 %v875
    %v914 = vpop.f32.mrb[0].mxu0
    %v915 = vadd.f32 0.0, %v914
    %v916 = vpop.f32.mrb[0].mxu0
    %v917 = vpop.f32.mrb[0].mxu0
    %v918 = vadd.f32 0.0, %v917
    %v919 = vpop.f32.mrb[0].mxu0
    %920 = vmatprep.mubr.bf16.mxu0 0
    %921 = vmatmul.mubr.bf16.gmra.mrb[0].mxu0 %v878
    %v922 = vpop.f32.mrb[0].mxu0
    %v923 = vadd.f32 0.0, %v922
    %v924 = vpop.f32.mrb[0].mxu0
    %v925 = vpop.f32.mrb[0].mxu0
    %v926 = vadd.f32 0.0, %v925
    %v927 = vpop.f32.mrb[0].mxu0
    %928 = vdwg.mxu0
    %v929 = vpack.c.bf16 %v918, %v915
    %v930 = vpack.c.bf16 %v926, %v923
    %v931 = vld [vmem:[%s10] sm:$0xf]
    %v932 = vld [vmem:[%s10 + $0x4] sm:$0xf]
    %v933 = vld [vmem:[%s10 + $0x8] sm:$0xf]
    %v934 = vld [vmem:[%s10 + $0xc] sm:$0xf]
    %v935 = vld [vmem:[%s10 + $0x10] sm:$0xf]
    %v936 = vld [vmem:[%s10 + $0x14] sm:$0xf]
    %v937 = vld [vmem:[%s10 + $0x18] sm:$0xf]
    %v938 = vld [vmem:[%s10 + $0x1c] sm:$0xf]
    %s939 = scalar_lea.vmem %s10, 32
    %v940 = vld [vmem:[%s939] sm:$0xf]
    %v941 = vld [vmem:[%s939 + $0x4] sm:$0xf]
    %v942 = vld [vmem:[%s939 + $0x8] sm:$0xf]
    %v943 = vld [vmem:[%s939 + $0xc] sm:$0xf]
    %v944 = vld [vmem:[%s939 + $0x10] sm:$0xf]
    %v945 = vld [vmem:[%s939 + $0x14] sm:$0xf]
    %v946 = vld [vmem:[%s939 + $0x18] sm:$0xf]
    %v947 = vld [vmem:[%s939 + $0x1c] sm:$0xf]
    %v956 = vunpack.c.l.b16 %v940
    %v957 = vunpack.c.l.b16 %v941
    %v958 = vunpack.c.l.b16 %v942
    %v959 = vunpack.c.l.b16 %v943
    %v960 = vunpack.c.l.b16 %v944
    %v961 = vunpack.c.l.b16 %v945
    %v962 = vunpack.c.l.b16 %v946
    %v963 = vunpack.c.l.b16 %v947
    %v964 = vpack.c.b16 %v957, %v956
    %v965 = vpack.c.b16 %v959, %v958
    %v966 = vpack.c.b16 %v961, %v960
    %v967 = vpack.c.b16 %v963, %v962
    %v973 = vsel %vm252, %v795, 0
    %v976 = vsel %vm252, %v796, 0
    %978 = vmatprep.subr.bf16.mxu0 0
    %979 = vmatpush1.bf16.msra.mxu0 %v964
    %980 = vmatprep.subr.bf16.mxu0 0
    %981 = vmatpush1.bf16.msra.mxu0 %v965
    %982 = vmatprep.subr.bf16.mxu0 0
    %983 = vmatpush1.bf16.msra.mxu0 %v966
    %984 = vmatprep.subr.bf16.mxu0 0
    %985 = vmatpush1.bf16.msra.mxu0 %v967
    %986 = vmatprep.subr.bf16.mxu0 0
    %987 = vmatpush1.bf16.msra.mxu0 0
    %988 = vmatprep.subr.bf16.mxu0 0
    %989 = vmatpush1.bf16.msra.mxu0 0
    %990 = vmatprep.subr.bf16.mxu0 0
    %991 = vmatpush1.bf16.msra.mxu0 0
    %992 = vmatprep.subr.bf16.mxu0 0
    %993 = vmatpush1.bf16.msra.mxu0 0
    %994 = vmatprep.subr.bf16.mxu0 0
    %995 = vmatpush1.bf16.msra.mxu0 0
    %996 = vmatprep.subr.bf16.mxu0 0
    %997 = vmatpush1.bf16.msra.mxu0 0
    %998 = vmatprep.subr.bf16.mxu0 0
    %999 = vmatpush1.bf16.msra.mxu0 0
    %1000 = vmatprep.subr.bf16.mxu0 0
    %1001 = vmatpush1.bf16.msra.mxu0 0
    %1002 = vmatprep.subr.bf16.mxu0 0
    %1003 = vmatpush1.bf16.msra.mxu0 0
    %1004 = vmatprep.subr.bf16.mxu0 0
    %1005 = vmatpush1.bf16.msra.mxu0 0
    %1006 = vmatprep.subr.bf16.mxu0 0
    %1007 = vmatpush1.bf16.msra.mxu0 0
    %1008 = vmatprep.subr.bf16.mxu0 0
    %1009 = vmatpush1.bf16.msra.mxu0 0
    %1010 = vmatprep.mubr.bf16.mxu0 0
    %1011 = vmatmul.mubr.bf16.gmra.mrb[0].mxu0 %v973
    %v1012 = vpop.f32.mrb[0].mxu0
    %v1013 = vadd.f32 0.0, %v1012
    %v1014 = vpop.f32.mrb[0].mxu0
    %v1015 = vpop.f32.mrb[0].mxu0
    %v1016 = vadd.f32 0.0, %v1015
    %v1017 = vpop.f32.mrb[0].mxu0
    %1018 = vmatprep.mubr.bf16.mxu0 0
    %1019 = vmatmul.mubr.bf16.gmra.mrb[0].mxu0 %v976
    %v1020 = vpop.f32.mrb[0].mxu0
    %v1021 = vadd.f32 0.0, %v1020
    %v1022 = vpop.f32.mrb[0].mxu0
    %v1023 = vpop.f32.mrb[0].mxu0
    %v1024 = vadd.f32 0.0, %v1023
    %v1025 = vpop.f32.mrb[0].mxu0
    %1026 = vdwg.mxu0
    %v1035 = vunpack.c.l.b16 %v931
    %v1036 = vunpack.c.l.b16 %v932
    %v1037 = vunpack.c.l.b16 %v933
    %v1038 = vunpack.c.l.b16 %v934
    %v1039 = vunpack.c.l.b16 %v935
    %v1040 = vunpack.c.l.b16 %v936
    %v1041 = vunpack.c.l.b16 %v937
    %v1042 = vunpack.c.l.b16 %v938
    %v1043 = vpack.c.b16 %v1036, %v1035
    %v1044 = vpack.c.b16 %v1038, %v1037
    %v1045 = vpack.c.b16 %v1040, %v1039
    %v1046 = vpack.c.b16 %v1042, %v1041
    %v1052 = vsel %vm252, %v862, 0
    %v1055 = vsel %vm252, %v863, 0
    %1057 = vmatprep.subr.bf16.mxu0 0
    %1058 = vmatpush1.bf16.msra.mxu0 %v1043
    %1059 = vmatprep.subr.bf16.mxu0 0
    %1060 = vmatpush1.bf16.msra.mxu0 %v1044
    %1061 = vmatprep.subr.bf16.mxu0 0
    %1062 = vmatpush1.bf16.msra.mxu0 %v1045
    %1063 = vmatprep.subr.bf16.mxu0 0
    %1064 = vmatpush1.bf16.msra.mxu0 %v1046
    %1065 = vmatprep.subr.bf16.mxu0 0
    %1066 = vmatpush1.bf16.msra.mxu0 0
    %1067 = vmatprep.subr.bf16.mxu0 0
    %1068 = vmatpush1.bf16.msra.mxu0 0
    %1069 = vmatprep.subr.bf16.mxu0 0
    %1070 = vmatpush1.bf16.msra.mxu0 0
    %1071 = vmatprep.subr.bf16.mxu0 0
    %1072 = vmatpush1.bf16.msra.mxu0 0
    %1073 = vmatprep.subr.bf16.mxu0 0
    %1074 = vmatpush1.bf16.msra.mxu0 0
    %1075 = vmatprep.subr.bf16.mxu0 0
    %1076 = vmatpush1.bf16.msra.mxu0 0
    %1077 = vmatprep.subr.bf16.mxu0 0
    %1078 = vmatpush1.bf16.msra.mxu0 0
    %1079 = vmatprep.subr.bf16.mxu0 0
    %1080 = vmatpush1.bf16.msra.mxu0 0
    %1081 = vmatprep.subr.bf16.mxu0 0
    %1082 = vmatpush1.bf16.msra.mxu0 0
    %1083 = vmatprep.subr.bf16.mxu0 0
    %1084 = vmatpush1.bf16.msra.mxu0 0
    %1085 = vmatprep.subr.bf16.mxu0 0
    %1086 = vmatpush1.bf16.msra.mxu0 0
    %1087 = vmatprep.subr.bf16.mxu0 0
    %1088 = vmatpush1.bf16.msra.mxu0 0
    %1089 = vmatprep.mubr.bf16.mxu0 0
    %1090 = vmatmul.mubr.bf16.gmra.mrb[0].mxu0 %v1052
    %v1091 = vpop.f32.mrb[0].mxu0
    %v1092 = vadd.f32 %v1013, %v1091
    %v1093 = vpop.f32.mrb[0].mxu0
    %v1094 = vpop.f32.mrb[0].mxu0
    %v1095 = vadd.f32 %v1016, %v1094
    %v1096 = vpop.f32.mrb[0].mxu0
    %1097 = vmatprep.mubr.bf16.mxu0 0
    %1098 = vmatmul.mubr.bf16.gmra.mrb[0].mxu0 %v1055
    %v1099 = vpop.f32.mrb[0].mxu0
    %v1100 = vadd.f32 %v1021, %v1099
    %v1101 = vpop.f32.mrb[0].mxu0
    %v1102 = vpop.f32.mrb[0].mxu0
    %v1103 = vadd.f32 %v1024, %v1102
    %v1104 = vpop.f32.mrb[0].mxu0
    %1105 = vdwg.mxu0
    %s1106 = scalar_lea.vmem %s10, 64
    %v1107 = vld [vmem:[%s1106] sm:$0xf]
    %v1108 = vld [vmem:[%s1106 + $0x4] sm:$0xf]
    %v1109 = vld [vmem:[%s1106 + $0x8] sm:$0xf]
    %v1110 = vld [vmem:[%s1106 + $0xc] sm:$0xf]
    %v1111 = vld [vmem:[%s1106 + $0x10] sm:$0xf]
    %v1112 = vld [vmem:[%s1106 + $0x14] sm:$0xf]
    %v1113 = vld [vmem:[%s1106 + $0x18] sm:$0xf]
    %v1114 = vld [vmem:[%s1106 + $0x1c] sm:$0xf]
    %v1123 = vunpack.c.l.b16 %v1107
    %v1124 = vunpack.c.l.b16 %v1108
    %v1125 = vunpack.c.l.b16 %v1109
    %v1126 = vunpack.c.l.b16 %v1110
    %v1127 = vunpack.c.l.b16 %v1111
    %v1128 = vunpack.c.l.b16 %v1112
    %v1129 = vunpack.c.l.b16 %v1113
    %v1130 = vunpack.c.l.b16 %v1114
    %v1131 = vpack.c.b16 %v1124, %v1123
    %v1132 = vpack.c.b16 %v1126, %v1125
    %v1133 = vpack.c.b16 %v1128, %v1127
    %v1134 = vpack.c.b16 %v1130, %v1129
    %v1140 = vsel %vm252, %v929, 0
    %v1143 = vsel %vm252, %v930, 0
    %1145 = vmatprep.subr.bf16.mxu0 0
    %1146 = vmatpush1.bf16.msra.mxu0 %v1131
    %1147 = vmatprep.subr.bf16.mxu0 0
    %1148 = vmatpush1.bf16.msra.mxu0 %v1132
    %1149 = vmatprep.subr.bf16.mxu0 0
    %1150 = vmatpush1.bf16.msra.mxu0 %v1133
    %1151 = vmatprep.subr.bf16.mxu0 0
    %1152 = vmatpush1.bf16.msra.mxu0 %v1134
    %1153 = vmatprep.subr.bf16.mxu0 0
    %1154 = vmatpush1.bf16.msra.mxu0 0
    %1155 = vmatprep.subr.bf16.mxu0 0
    %1156 = vmatpush1.bf16.msra.mxu0 0
    %1157 = vmatprep.subr.bf16.mxu0 0
    %1158 = vmatpush1.bf16.msra.mxu0 0
    %1159 = vmatprep.subr.bf16.mxu0 0
    %1160 = vmatpush1.bf16.msra.mxu0 0
    %1161 = vmatprep.subr.bf16.mxu0 0
    %1162 = vmatpush1.bf16.msra.mxu0 0
    %1163 = vmatprep.subr.bf16.mxu0 0
    %1164 = vmatpush1.bf16.msra.mxu0 0
    %1165 = vmatprep.subr.bf16.mxu0 0
    %1166 = vmatpush1.bf16.msra.mxu0 0
    %1167 = vmatprep.subr.bf16.mxu0 0
    %1168 = vmatpush1.bf16.msra.mxu0 0
    %1169 = vmatprep.subr.bf16.mxu0 0
    %1170 = vmatpush1.bf16.msra.mxu0 0
    %1171 = vmatprep.subr.bf16.mxu0 0
    %1172 = vmatpush1.bf16.msra.mxu0 0
    %1173 = vmatprep.subr.bf16.mxu0 0
    %1174 = vmatpush1.bf16.msra.mxu0 0
    %1175 = vmatprep.subr.bf16.mxu0 0
    %1176 = vmatpush1.bf16.msra.mxu0 0
    %1177 = vmatprep.mubr.bf16.mxu0 0
    %1178 = vmatmul.mubr.bf16.gmra.mrb[0].mxu0 %v1140
    %v1179 = vpop.f32.mrb[0].mxu0
    %v1180 = vadd.f32 0.0, %v1179
    %v1181 = vpop.f32.mrb[0].mxu0
    %v1182 = vpop.f32.mrb[0].mxu0
    %v1183 = vadd.f32 0.0, %v1182
    %v1184 = vpop.f32.mrb[0].mxu0
    %1185 = vmatprep.mubr.bf16.mxu0 0
    %1186 = vmatmul.mubr.bf16.gmra.mrb[0].mxu0 %v1143
    %v1187 = vpop.f32.mrb[0].mxu0
    %v1188 = vadd.f32 0.0, %v1187
    %v1189 = vpop.f32.mrb[0].mxu0
    %v1190 = vpop.f32.mrb[0].mxu0
    %v1191 = vadd.f32 0.0, %v1190
    %v1192 = vpop.f32.mrb[0].mxu0
    %1193 = vdwg.mxu0
    %v1194 = vadd.f32 %v1092, %v1180
    %v1195 = vadd.f32 %v1095, %v1183
    %v1196 = vadd.f32 %v1100, %v1188
    %v1197 = vadd.f32 %v1103, %v1191
    %v1199 = vlaneseq
    %v1200 = vshrl.u32 %v1199, 7
    %v1201 = vsub.s32 0, %v1200
    %v1202 = vrot.slane %v794, %v1201
    %v1204 = vadd.f32 %v1194, %v1202
    %v1205 = vadd.f32 %v1195, %v1202
    %v1206 = vadd.f32 %v1196, %v1202
    %v1207 = vadd.f32 %v1197, %v1202
    %v1208 = vld [vmem:[%s1] sm:$0x3]
    %v1209 = vxor.u32 %v1208, 2147483648
    %v1210 = vmul.f32 %v1209, 1.442695
    %v1211 = vpow.pop %v1210
    %v1212 = vadd.f32 %v1211, 1.0
    %v1213 = vrcp.pop %v1212
    %v1214 = vmul.f32 1.0, %v1213
    %v1215 = vmul.f32 %v1208, %v1214
    %v1216 = vpack.c.bf16 %v1215, %v1215
    %v1217 = vld [vmem:[%s12] sm:$0xf]
    %v1218 = vld [vmem:[%s12 + $0x4] sm:$0xf]
    %v1219 = vld [vmem:[%s12 + $0x8] sm:$0xf]
    %v1220 = vld [vmem:[%s12 + $0xc] sm:$0xf]
    %v1221 = vld [vmem:[%s12 + $0x10] sm:$0xf]
    %v1222 = vld [vmem:[%s12 + $0x14] sm:$0xf]
    %v1223 = vld [vmem:[%s12 + $0x18] sm:$0xf]
    %v1224 = vld [vmem:[%s12 + $0x1c] sm:$0xf]
    %v1225 = vld [vmem:[%s12 + $0x20] sm:$0xf]
    %v1226 = vld [vmem:[%s12 + $0x24] sm:$0xf]
    %v1227 = vld [vmem:[%s12 + $0x28] sm:$0xf]
    %v1228 = vld [vmem:[%s12 + $0x2c] sm:$0xf]
    %v1229 = vld [vmem:[%s12 + $0x30] sm:$0xf]
    %v1230 = vld [vmem:[%s12 + $0x34] sm:$0xf]
    %v1231 = vld [vmem:[%s12 + $0x38] sm:$0xf]
    %v1232 = vld [vmem:[%s12 + $0x3c] sm:$0xf]
    %v1233 = vld [vmem:[%s13] sm:$0x1]
    %v1235 = vlaneseq
    %v1236 = vshrl.u32 %v1235, 7
    %v1237 = vsub.s32 0, %v1236
    %v1238 = vrot.slane %v1233, %v1237
    %v1256 = vunpack.c.l.b16 %v1217
    %v1257 = vunpack.c.l.b16 %v1218
    %v1258 = vunpack.c.l.b16 %v1219
    %v1259 = vunpack.c.l.b16 %v1220
    %v1260 = vunpack.c.l.b16 %v1221
    %v1261 = vunpack.c.l.b16 %v1222
    %v1262 = vunpack.c.l.b16 %v1223
    %v1263 = vunpack.c.l.b16 %v1224
    %v1264 = vunpack.c.l.b16 %v1225
    %v1265 = vunpack.c.l.b16 %v1226
    %v1266 = vunpack.c.l.b16 %v1227
    %v1267 = vunpack.c.l.b16 %v1228
    %v1268 = vunpack.c.l.b16 %v1229
    %v1269 = vunpack.c.l.b16 %v1230
    %v1270 = vunpack.c.l.b16 %v1231
    %v1271 = vunpack.c.l.b16 %v1232
    %v1272 = vpack.c.b16 %v1257, %v1256
    %v1273 = vpack.c.b16 %v1259, %v1258
    %v1274 = vpack.c.b16 %v1261, %v1260
    %v1275 = vpack.c.b16 %v1263, %v1262
    %v1276 = vpack.c.b16 %v1265, %v1264
    %v1277 = vpack.c.b16 %v1267, %v1266
    %v1278 = vpack.c.b16 %v1269, %v1268
    %v1279 = vpack.c.b16 %v1271, %v1270
    %1288 = vmatprep.subr.bf16.mxu0 0
    %1289 = vmatpush1.bf16.msra.mxu0 %v1272
    %1290 = vmatprep.subr.bf16.mxu0 0
    %1291 = vmatpush1.bf16.msra.mxu0 %v1273
    %1292 = vmatprep.subr.bf16.mxu0 0
    %1293 = vmatpush1.bf16.msra.mxu0 %v1274
    %1294 = vmatprep.subr.bf16.mxu0 0
    %1295 = vmatpush1.bf16.msra.mxu0 %v1275
    %1296 = vmatprep.subr.bf16.mxu0 0
    %1297 = vmatpush1.bf16.msra.mxu0 %v1276
    %1298 = vmatprep.subr.bf16.mxu0 0
    %1299 = vmatpush1.bf16.msra.mxu0 %v1277
    %1300 = vmatprep.subr.bf16.mxu0 0
    %1301 = vmatpush1.bf16.msra.mxu0 %v1278
    %1302 = vmatprep.subr.bf16.mxu0 0
    %1303 = vmatpush1.bf16.msra.mxu0 %v1279
    %1304 = vmatprep.subr.bf16.mxu0 0
    %1305 = vmatpush1.bf16.msra.mxu0 0
    %1306 = vmatprep.subr.bf16.mxu0 0
    %1307 = vmatpush1.bf16.msra.mxu0 0
    %1308 = vmatprep.subr.bf16.mxu0 0
    %1309 = vmatpush1.bf16.msra.mxu0 0
    %1310 = vmatprep.subr.bf16.mxu0 0
    %1311 = vmatpush1.bf16.msra.mxu0 0
    %1312 = vmatprep.subr.bf16.mxu0 0
    %1313 = vmatpush1.bf16.msra.mxu0 0
    %1314 = vmatprep.subr.bf16.mxu0 0
    %1315 = vmatpush1.bf16.msra.mxu0 0
    %1316 = vmatprep.subr.bf16.mxu0 0
    %1317 = vmatpush1.bf16.msra.mxu0 0
    %1318 = vmatprep.subr.bf16.mxu0 0
    %1319 = vmatpush1.bf16.msra.mxu0 0
    %1320 = vmatprep.mubr.bf16.mxu0 0
    %1321 = vmatmul.mubr.bf16.gmra.mrb[0].mxu0 %v1216
    %v1322 = vpop.f32.mrb[0].mxu0
    %v1323 = vadd.f32 %v1238, %v1322
    %v1324 = vpop.f32.mrb[0].mxu0
    %v1325 = vpop.f32.mrb[0].mxu0
    %v1326 = vpop.f32.mrb[0].mxu0
    %1327 = vdwg.mxu0
    %v1329 = vsel %vm581, %v1323, 0
    %1331 = vmatprep.subr.mxu0 0.0
    %1332 = vmatpush1.msra.mxu0 %v1329
    %1333 = vmatprep.subr.mxu0 0.0
    %1334 = vmatpush1.msra.mxu0 0.0
    %1335 = vmatprep.subr.mxu0 0.0
    %1336 = vmatpush1.msra.mxu0 0.0
    %1337 = vmatprep.subr.mxu0 0.0
    %1338 = vmatpush1.msra.mxu0 0.0
    %1339 = vmatprep.subr.mxu0 0.0
    %1340 = vmatpush1.msra.mxu0 0.0
    %1341 = vmatprep.subr.mxu0 0.0
    %1342 = vmatpush1.msra.mxu0 0.0
    %1343 = vmatprep.subr.mxu0 0.0
    %1344 = vmatpush1.msra.mxu0 0.0
    %1345 = vmatprep.subr.mxu0 0.0
    %1346 = vmatpush1.msra.mxu0 0.0
    %1347 = vmatprep.subr.mxu0 0.0
    %1348 = vmatpush1.msra.mxu0 0.0
    %1349 = vmatprep.subr.mxu0 0.0
    %1350 = vmatpush1.msra.mxu0 0.0
    %1351 = vmatprep.subr.mxu0 0.0
    %1352 = vmatpush1.msra.mxu0 0.0
    %1353 = vmatprep.subr.mxu0 0.0
    %1354 = vmatpush1.msra.mxu0 0.0
    %1355 = vmatprep.subr.mxu0 0.0
    %1356 = vmatpush1.msra.mxu0 0.0
    %1357 = vmatprep.subr.mxu0 0.0
    %1358 = vmatpush1.msra.mxu0 0.0
    %1359 = vmatprep.subr.mxu0 0.0
    %1360 = vmatpush1.msra.mxu0 0.0
    %1361 = vmatprep.subr.mxu0 0.0
    %1362 = vmatpush1.msra.mxu0 0.0
    %1363 = vmatprep.subr.mxu0 0.0
    %1364 = vmatpush1.msra.mxu0 0.0
    %1365 = vmatprep.subr.mxu0 0.0
    %1366 = vmatpush1.msra.mxu0 0.0
    %1367 = vmatprep.subr.mxu0 0.0
    %1368 = vmatpush1.msra.mxu0 0.0
    %1369 = vmatprep.subr.mxu0 0.0
    %1370 = vmatpush1.msra.mxu0 0.0
    %1371 = vmatprep.subr.mxu0 0.0
    %1372 = vmatpush1.msra.mxu0 0.0
    %1373 = vmatprep.subr.mxu0 0.0
    %1374 = vmatpush1.msra.mxu0 0.0
    %1375 = vmatprep.subr.mxu0 0.0
    %1376 = vmatpush1.msra.mxu0 0.0
    %1377 = vmatprep.subr.mxu0 0.0
    %1378 = vmatpush1.msra.mxu0 0.0
    %1379 = vmatprep.subr.mxu0 0.0
    %1380 = vmatpush1.msra.mxu0 0.0
    %1381 = vmatprep.subr.mxu0 0.0
    %1382 = vmatpush1.msra.mxu0 0.0
    %1383 = vmatprep.subr.mxu0 0.0
    %1384 = vmatpush1.msra.mxu0 0.0
    %1385 = vmatprep.subr.mxu0 0.0
    %1386 = vmatpush1.msra.mxu0 0.0
    %1387 = vmatprep.subr.mxu0 0.0
    %1388 = vmatpush1.msra.mxu0 0.0
    %1389 = vmatprep.subr.mxu0 0.0
    %1390 = vmatpush1.msra.mxu0 0.0
    %1391 = vmatprep.subr.mxu0 0.0
    %1392 = vmatpush1.msra.mxu0 0.0
    %1393 = vmatprep.subr.mxu0 0.0
    %1394 = vmatpush1.msra.mxu0 0.0
    %1395 = vmatprep.mubr.f32.mxu0 0.0
    %1396 = vmatmul.mubr.f32.gmra.mrb[0].mxu0 %v570
    %v1397 = vpop.f32.mrb[0].mxu0
    %v1398 = vadd.f32 0.0, %v1397
    %v1399 = vpop.f32.mrb[0].mxu0
    %1400 = vmatprep.mubr.f32.mxu0 0.0
    %1401 = vmatmul.mubr.f32.gmra.mrb[0].mxu0 %v573
    %v1402 = vpop.f32.mrb[0].mxu0
    %v1403 = vadd.f32 0.0, %v1402
    %v1404 = vpop.f32.mrb[0].mxu0
    %1405 = vmatprep.mubr.f32.mxu0 0.0
    %1406 = vmatmul.mubr.f32.gmra.mrb[0].mxu0 %v576
    %v1407 = vpop.f32.mrb[0].mxu0
    %v1408 = vadd.f32 0.0, %v1407
    %v1409 = vpop.f32.mrb[0].mxu0
    %1410 = vmatprep.mubr.f32.mxu0 0.0
    %1411 = vmatmul.mubr.f32.gmra.mrb[0].mxu0 %v579
    %v1412 = vpop.f32.mrb[0].mxu0
    %v1413 = vadd.f32 0.0, %v1412
    %v1414 = vpop.f32.mrb[0].mxu0
    %1415 = vdwg.mxu0
    %v1416 = vadd.f32 %v1204, %v1398
    %v1417 = vadd.f32 %v1205, %v1403
    %v1418 = vadd.f32 %v1206, %v1408
    %v1419 = vadd.f32 %v1207, %v1413
    %v1420 = vld [vmem:[%s14] sm:$0x1]
    %v1421 = vld [vmem:[%s15] sm:$0x1]
    %v1422 = vld [vmem:[%s16] sm:$0xff]
    %v1423 = vld [vmem:[%s16 + $0x8] sm:$0xff]
    %v1424 = vld [vmem:[%s16 + $0x10] sm:$0xff]
    %v1425 = vld [vmem:[%s16 + $0x18] sm:$0xff]
    %v1426 = vld [vmem:[%s16 + $0x20] sm:$0xff]
    %v1427 = vld [vmem:[%s16 + $0x28] sm:$0xff]
    %v1428 = vld [vmem:[%s16 + $0x30] sm:$0xff]
    %v1429 = vld [vmem:[%s16 + $0x38] sm:$0xff]
    %v1430 = vld [vmem:[%s16 + $0x40] sm:$0xff]
    %v1431 = vld [vmem:[%s16 + $0x48] sm:$0xff]
    %v1432 = vld [vmem:[%s16 + $0x50] sm:$0xff]
    %v1433 = vld [vmem:[%s16 + $0x58] sm:$0xff]
    %v1434 = vld [vmem:[%s16 + $0x60] sm:$0xff]
    %v1435 = vld [vmem:[%s16 + $0x68] sm:$0xff]
    %v1436 = vld [vmem:[%s16 + $0x70] sm:$0xff]
    %v1437 = vld [vmem:[%s16 + $0x78] sm:$0xff]
    %v1438 = vld [vmem:[%s17] sm:$0xff]
    %v1439 = vld [vmem:[%s17 + $0x8] sm:$0xff]
    %v1440 = vld [vmem:[%s17 + $0x10] sm:$0xff]
    %v1441 = vld [vmem:[%s17 + $0x18] sm:$0xff]
    %1442 = vmatprep.subr.mxu0 0.0
    %1443 = vmatpush1.msra.mxu0 %v1416
    %1444 = vmatprep.subr.mxu0 0.0
    %1445 = vmatpush1.msra.mxu0 %v1417
    %1446 = vmatprep.subr.mxu0 0.0
    %1447 = vmatpush1.msra.mxu0 %v1418
    %1448 = vmatprep.subr.mxu0 0.0
    %1449 = vmatpush1.msra.mxu0 %v1419
    %1450 = vmatprep.subr.mxu0 0.0
    %1451 = vmatpush1.msra.mxu0 0.0
    %1452 = vmatprep.subr.mxu0 0.0
    %1453 = vmatpush1.msra.mxu0 0.0
    %1454 = vmatprep.subr.mxu0 0.0
    %1455 = vmatpush1.msra.mxu0 0.0
    %1456 = vmatprep.subr.mxu0 0.0
    %1457 = vmatpush1.msra.mxu0 0.0
    %1458 = vmatprep.subr.mxu0 0.0
    %1459 = vmatpush1.msra.mxu0 0.0
    %1460 = vmatprep.subr.mxu0 0.0
    %1461 = vmatpush1.msra.mxu0 0.0
    %1462 = vmatprep.subr.mxu0 0.0
    %1463 = vmatpush1.msra.mxu0 0.0
    %1464 = vmatprep.subr.mxu0 0.0
    %1465 = vmatpush1.msra.mxu0 0.0
    %1466 = vmatprep.subr.mxu0 0.0
    %1467 = vmatpush1.msra.mxu0 0.0
    %1468 = vmatprep.subr.mxu0 0.0
    %1469 = vmatpush1.msra.mxu0 0.0
    %1470 = vmatprep.subr.mxu0 0.0
    %1471 = vmatpush1.msra.mxu0 0.0
    %1472 = vmatprep.subr.mxu0 0.0
    %1473 = vmatpush1.msra.mxu0 0.0
    %1474 = vmatprep.subr.mxu0 0.0
    %1475 = vmatpush1.msra.mxu0 0.0
    %1476 = vmatprep.subr.mxu0 0.0
    %1477 = vmatpush1.msra.mxu0 0.0
    %1478 = vmatprep.subr.mxu0 0.0
    %1479 = vmatpush1.msra.mxu0 0.0
    %1480 = vmatprep.subr.mxu0 0.0
    %1481 = vmatpush1.msra.mxu0 0.0
    %1482 = vmatprep.subr.mxu0 0.0
    %1483 = vmatpush1.msra.mxu0 0.0
    %1484 = vmatprep.subr.mxu0 0.0
    %1485 = vmatpush1.msra.mxu0 0.0
    %1486 = vmatprep.subr.mxu0 0.0
    %1487 = vmatpush1.msra.mxu0 0.0
    %1488 = vmatprep.subr.mxu0 0.0
    %1489 = vmatpush1.msra.mxu0 0.0
    %1490 = vmatprep.subr.mxu0 0.0
    %1491 = vmatpush1.msra.mxu0 0.0
    %1492 = vmatprep.subr.mxu0 0.0
    %1493 = vmatpush1.msra.mxu0 0.0
    %1494 = vmatprep.subr.mxu0 0.0
    %1495 = vmatpush1.msra.mxu0 0.0
    %1496 = vmatprep.subr.mxu0 0.0
    %1497 = vmatpush1.msra.mxu0 0.0
    %1498 = vmatprep.subr.mxu0 0.0
    %1499 = vmatpush1.msra.mxu0 0.0
    %1500 = vmatprep.subr.mxu0 0.0
    %1501 = vmatpush1.msra.mxu0 0.0
    %1502 = vmatprep.subr.mxu0 0.0
    %1503 = vmatpush1.msra.mxu0 0.0
    %1504 = vmatprep.subr.mxu0 0.0
    %1505 = vmatpush1.msra.mxu0 0.0
    %1506 = vmatprep.mubr.f32.mxu0 0.0
    %1507 = vmatmul.mubr.f32.gmra.mrb[0].mxu0 %v106
    %v1508 = vpop.f32.mrb[0].mxu0
    %v1509 = vadd.f32 0.0, %v1508
    %v1510 = vpop.f32.mrb[0].mxu0
    %1511 = vdwg.mxu0
    %v1512 = vmul.f32 %v1416, %v1416
    %v1513 = vmul.f32 %v1417, %v1417
    %v1514 = vmul.f32 %v1418, %v1418
    %v1515 = vmul.f32 %v1419, %v1419
    %1516 = vmatprep.subr.mxu0 0.0
    %1517 = vmatpush1.msra.mxu0 %v1512
    %1518 = vmatprep.subr.mxu0 0.0
    %1519 = vmatpush1.msra.mxu0 %v1513
    %1520 = vmatprep.subr.mxu0 0.0
    %1521 = vmatpush1.msra.mxu0 %v1514
    %1522 = vmatprep.subr.mxu0 0.0
    %1523 = vmatpush1.msra.mxu0 %v1515
    %1524 = vmatprep.subr.mxu0 0.0
    %1525 = vmatpush1.msra.mxu0 0.0
    %1526 = vmatprep.subr.mxu0 0.0
    %1527 = vmatpush1.msra.mxu0 0.0
    %1528 = vmatprep.subr.mxu0 0.0
    %1529 = vmatpush1.msra.mxu0 0.0
    %1530 = vmatprep.subr.mxu0 0.0
    %1531 = vmatpush1.msra.mxu0 0.0
    %1532 = vmatprep.subr.mxu0 0.0
    %1533 = vmatpush1.msra.mxu0 0.0
    %1534 = vmatprep.subr.mxu0 0.0
    %1535 = vmatpush1.msra.mxu0 0.0
    %1536 = vmatprep.subr.mxu0 0.0
    %1537 = vmatpush1.msra.mxu0 0.0
    %1538 = vmatprep.subr.mxu0 0.0
    %1539 = vmatpush1.msra.mxu0 0.0
    %1540 = vmatprep.subr.mxu0 0.0
    %1541 = vmatpush1.msra.mxu0 0.0
    %1542 = vmatprep.subr.mxu0 0.0
    %1543 = vmatpush1.msra.mxu0 0.0
    %1544 = vmatprep.subr.mxu0 0.0
    %1545 = vmatpush1.msra.mxu0 0.0
    %1546 = vmatprep.subr.mxu0 0.0
    %1547 = vmatpush1.msra.mxu0 0.0
    %1548 = vmatprep.subr.mxu0 0.0
    %1549 = vmatpush1.msra.mxu0 0.0
    %1550 = vmatprep.subr.mxu0 0.0
    %1551 = vmatpush1.msra.mxu0 0.0
    %1552 = vmatprep.subr.mxu0 0.0
    %1553 = vmatpush1.msra.mxu0 0.0
    %1554 = vmatprep.subr.mxu0 0.0
    %1555 = vmatpush1.msra.mxu0 0.0
    %1556 = vmatprep.subr.mxu0 0.0
    %1557 = vmatpush1.msra.mxu0 0.0
    %1558 = vmatprep.subr.mxu0 0.0
    %1559 = vmatpush1.msra.mxu0 0.0
    %1560 = vmatprep.subr.mxu0 0.0
    %1561 = vmatpush1.msra.mxu0 0.0
    %1562 = vmatprep.subr.mxu0 0.0
    %1563 = vmatpush1.msra.mxu0 0.0
    %1564 = vmatprep.subr.mxu0 0.0
    %1565 = vmatpush1.msra.mxu0 0.0
    %1566 = vmatprep.subr.mxu0 0.0
    %1567 = vmatpush1.msra.mxu0 0.0
    %1568 = vmatprep.subr.mxu0 0.0
    %1569 = vmatpush1.msra.mxu0 0.0
    %1570 = vmatprep.subr.mxu0 0.0
    %1571 = vmatpush1.msra.mxu0 0.0
    %1572 = vmatprep.subr.mxu0 0.0
    %1573 = vmatpush1.msra.mxu0 0.0
    %1574 = vmatprep.subr.mxu0 0.0
    %1575 = vmatpush1.msra.mxu0 0.0
    %1576 = vmatprep.subr.mxu0 0.0
    %1577 = vmatpush1.msra.mxu0 0.0
    %1578 = vmatprep.subr.mxu0 0.0
    %1579 = vmatpush1.msra.mxu0 0.0
    %1580 = vmatprep.mubr.f32.mxu0 0.0
    %1581 = vmatmul.mubr.f32.gmra.mrb[0].mxu0 %v106
    %v1582 = vpop.f32.mrb[0].mxu0
    %v1583 = vadd.f32 0.0, %v1582
    %v1584 = vpop.f32.mrb[0].mxu0
    %1585 = vdwg.mxu0
    %1586 = vmatprep.subr.mxu0 0.0
    %1587 = vmatpush1.msra.mxu0 %v1422
    %1588 = vmatprep.subr.mxu0 0.0
    %1589 = vmatpush1.msra.mxu0 %v1423
    %1590 = vmatprep.subr.mxu0 0.0
    %1591 = vmatpush1.msra.mxu0 %v1424
    %1592 = vmatprep.subr.mxu0 0.0
    %1593 = vmatpush1.msra.mxu0 %v1425
    %1594 = vmatprep.subr.mxu0 0.0
    %1595 = vmatpush1.msra.mxu0 %v1426
    %1596 = vmatprep.subr.mxu0 0.0
    %1597 = vmatpush1.msra.mxu0 %v1427
    %1598 = vmatprep.subr.mxu0 0.0
    %1599 = vmatpush1.msra.mxu0 %v1428
    %1600 = vmatprep.subr.mxu0 0.0
    %1601 = vmatpush1.msra.mxu0 %v1429
    %1602 = vmatprep.subr.mxu0 0.0
    %1603 = vmatpush1.msra.mxu0 %v1430
    %1604 = vmatprep.subr.mxu0 0.0
    %1605 = vmatpush1.msra.mxu0 %v1431
    %1606 = vmatprep.subr.mxu0 0.0
    %1607 = vmatpush1.msra.mxu0 %v1432
    %1608 = vmatprep.subr.mxu0 0.0
    %1609 = vmatpush1.msra.mxu0 %v1433
    %1610 = vmatprep.subr.mxu0 0.0
    %1611 = vmatpush1.msra.mxu0 %v1434
    %1612 = vmatprep.subr.mxu0 0.0
    %1613 = vmatpush1.msra.mxu0 %v1435
    %1614 = vmatprep.subr.mxu0 0.0
    %1615 = vmatpush1.msra.mxu0 %v1436
    %1616 = vmatprep.subr.mxu0 0.0
    %1617 = vmatpush1.msra.mxu0 %v1437
    %1618 = vmatprep.subr.mxu0 0.0
    %1619 = vmatpush1.msra.mxu0 0.0
    %1620 = vmatprep.subr.mxu0 0.0
    %1621 = vmatpush1.msra.mxu0 0.0
    %1622 = vmatprep.subr.mxu0 0.0
    %1623 = vmatpush1.msra.mxu0 0.0
    %1624 = vmatprep.subr.mxu0 0.0
    %1625 = vmatpush1.msra.mxu0 0.0
    %1626 = vmatprep.subr.mxu0 0.0
    %1627 = vmatpush1.msra.mxu0 0.0
    %1628 = vmatprep.subr.mxu0 0.0
    %1629 = vmatpush1.msra.mxu0 0.0
    %1630 = vmatprep.subr.mxu0 0.0
    %1631 = vmatpush1.msra.mxu0 0.0
    %1632 = vmatprep.subr.mxu0 0.0
    %1633 = vmatpush1.msra.mxu0 0.0
    %1634 = vmatprep.subr.mxu0 0.0
    %1635 = vmatpush1.msra.mxu0 0.0
    %1636 = vmatprep.subr.mxu0 0.0
    %1637 = vmatpush1.msra.mxu0 0.0
    %1638 = vmatprep.subr.mxu0 0.0
    %1639 = vmatpush1.msra.mxu0 0.0
    %1640 = vmatprep.subr.mxu0 0.0
    %1641 = vmatpush1.msra.mxu0 0.0
    %1642 = vmatprep.subr.mxu0 0.0
    %1643 = vmatpush1.msra.mxu0 0.0
    %1644 = vmatprep.subr.mxu0 0.0
    %1645 = vmatpush1.msra.mxu0 0.0
    %1646 = vmatprep.subr.mxu0 0.0
    %1647 = vmatpush1.msra.mxu0 0.0
    %1648 = vmatprep.subr.mxu0 0.0
    %1649 = vmatpush1.msra.mxu0 0.0
    %1650 = vmatprep.mubr.f32.mxu0 0.0
    %1651 = vmatmul.mubr.f32.gmra.mrb[0].mxu0 %v1509
    %v1652 = vpop.f32.mrb[0].mxu0
    %v1653 = vadd.f32 0.0, %v1652
    %v1654 = vpop.f32.mrb[0].mxu0
    %1655 = vdwg.mxu0
    %v1656 = vrcp.pop 64.0
    %v1657 = vmul.f32 %v1653, %v1656
    %1658 = vmatprep.subr.mxu0 0.0
    %1659 = vmatpush1.msra.mxu0 %v1422
    %1660 = vmatprep.subr.mxu0 0.0
    %1661 = vmatpush1.msra.mxu0 %v1423
    %1662 = vmatprep.subr.mxu0 0.0
    %1663 = vmatpush1.msra.mxu0 %v1424
    %1664 = vmatprep.subr.mxu0 0.0
    %1665 = vmatpush1.msra.mxu0 %v1425
    %1666 = vmatprep.subr.mxu0 0.0
    %1667 = vmatpush1.msra.mxu0 %v1426
    %1668 = vmatprep.subr.mxu0 0.0
    %1669 = vmatpush1.msra.mxu0 %v1427
    %1670 = vmatprep.subr.mxu0 0.0
    %1671 = vmatpush1.msra.mxu0 %v1428
    %1672 = vmatprep.subr.mxu0 0.0
    %1673 = vmatpush1.msra.mxu0 %v1429
    %1674 = vmatprep.subr.mxu0 0.0
    %1675 = vmatpush1.msra.mxu0 %v1430
    %1676 = vmatprep.subr.mxu0 0.0
    %1677 = vmatpush1.msra.mxu0 %v1431
    %1678 = vmatprep.subr.mxu0 0.0
    %1679 = vmatpush1.msra.mxu0 %v1432
    %1680 = vmatprep.subr.mxu0 0.0
    %1681 = vmatpush1.msra.mxu0 %v1433
    %1682 = vmatprep.subr.mxu0 0.0
    %1683 = vmatpush1.msra.mxu0 %v1434
    %1684 = vmatprep.subr.mxu0 0.0
    %1685 = vmatpush1.msra.mxu0 %v1435
    %1686 = vmatprep.subr.mxu0 0.0
    %1687 = vmatpush1.msra.mxu0 %v1436
    %1688 = vmatprep.subr.mxu0 0.0
    %1689 = vmatpush1.msra.mxu0 %v1437
    %1690 = vmatprep.subr.mxu0 0.0
    %1691 = vmatpush1.msra.mxu0 0.0
    %1692 = vmatprep.subr.mxu0 0.0
    %1693 = vmatpush1.msra.mxu0 0.0
    %1694 = vmatprep.subr.mxu0 0.0
    %1695 = vmatpush1.msra.mxu0 0.0
    %1696 = vmatprep.subr.mxu0 0.0
    %1697 = vmatpush1.msra.mxu0 0.0
    %1698 = vmatprep.subr.mxu0 0.0
    %1699 = vmatpush1.msra.mxu0 0.0
    %1700 = vmatprep.subr.mxu0 0.0
    %1701 = vmatpush1.msra.mxu0 0.0
    %1702 = vmatprep.subr.mxu0 0.0
    %1703 = vmatpush1.msra.mxu0 0.0
    %1704 = vmatprep.subr.mxu0 0.0
    %1705 = vmatpush1.msra.mxu0 0.0
    %1706 = vmatprep.subr.mxu0 0.0
    %1707 = vmatpush1.msra.mxu0 0.0
    %1708 = vmatprep.subr.mxu0 0.0
    %1709 = vmatpush1.msra.mxu0 0.0
    %1710 = vmatprep.subr.mxu0 0.0
    %1711 = vmatpush1.msra.mxu0 0.0
    %1712 = vmatprep.subr.mxu0 0.0
    %1713 = vmatpush1.msra.mxu0 0.0
    %1714 = vmatprep.subr.mxu0 0.0
    %1715 = vmatpush1.msra.mxu0 0.0
    %1716 = vmatprep.subr.mxu0 0.0
    %1717 = vmatpush1.msra.mxu0 0.0
    %1718 = vmatprep.subr.mxu0 0.0
    %1719 = vmatpush1.msra.mxu0 0.0
    %1720 = vmatprep.subr.mxu0 0.0
    %1721 = vmatpush1.msra.mxu0 0.0
    %1722 = vmatprep.mubr.f32.mxu0 0.0
    %1723 = vmatmul.mubr.f32.gmra.mrb[0].mxu0 %v1583
    %v1724 = vpop.f32.mrb[0].mxu0
    %v1725 = vadd.f32 0.0, %v1724
    %v1726 = vpop.f32.mrb[0].mxu0
    %1727 = vdwg.mxu0
    %v1728 = vmul.f32 %v1725, %v1656
    %v1729 = vmul.f32 %v1657, %v1657
    %v1730 = vsub.f32 %v1728, %v1729
    %v1731 = vmax.f32 %v1730, 0.0
    %v1732 = vadd.f32 %v1731, 1e-06
    %v1733 = vrsqrt.pop %v1732
    %v1735 = vsel %vm104, %v1657, 0
    %1737 = vmatprep.subr.mxu0 0.0
    %1738 = vmatpush1.msra.mxu0 %v1438
    %1739 = vmatprep.subr.mxu0 0.0
    %1740 = vmatpush1.msra.mxu0 %v1439
    %1741 = vmatprep.subr.mxu0 0.0
    %1742 = vmatpush1.msra.mxu0 %v1440
    %1743 = vmatprep.subr.mxu0 0.0
    %1744 = vmatpush1.msra.mxu0 %v1441
    %1745 = vmatprep.subr.mxu0 0.0
    %1746 = vmatpush1.msra.mxu0 0.0
    %1747 = vmatprep.subr.mxu0 0.0
    %1748 = vmatpush1.msra.mxu0 0.0
    %1749 = vmatprep.subr.mxu0 0.0
    %1750 = vmatpush1.msra.mxu0 0.0
    %1751 = vmatprep.subr.mxu0 0.0
    %1752 = vmatpush1.msra.mxu0 0.0
    %1753 = vmatprep.subr.mxu0 0.0
    %1754 = vmatpush1.msra.mxu0 0.0
    %1755 = vmatprep.subr.mxu0 0.0
    %1756 = vmatpush1.msra.mxu0 0.0
    %1757 = vmatprep.subr.mxu0 0.0
    %1758 = vmatpush1.msra.mxu0 0.0
    %1759 = vmatprep.subr.mxu0 0.0
    %1760 = vmatpush1.msra.mxu0 0.0
    %1761 = vmatprep.subr.mxu0 0.0
    %1762 = vmatpush1.msra.mxu0 0.0
    %1763 = vmatprep.subr.mxu0 0.0
    %1764 = vmatpush1.msra.mxu0 0.0
    %1765 = vmatprep.subr.mxu0 0.0
    %1766 = vmatpush1.msra.mxu0 0.0
    %1767 = vmatprep.subr.mxu0 0.0
    %1768 = vmatpush1.msra.mxu0 0.0
    %1769 = vmatprep.subr.mxu0 0.0
    %1770 = vmatpush1.msra.mxu0 0.0
    %1771 = vmatprep.subr.mxu0 0.0
    %1772 = vmatpush1.msra.mxu0 0.0
    %1773 = vmatprep.subr.mxu0 0.0
    %1774 = vmatpush1.msra.mxu0 0.0
    %1775 = vmatprep.subr.mxu0 0.0
    %1776 = vmatpush1.msra.mxu0 0.0
    %1777 = vmatprep.subr.mxu0 0.0
    %1778 = vmatpush1.msra.mxu0 0.0
    %1779 = vmatprep.subr.mxu0 0.0
    %1780 = vmatpush1.msra.mxu0 0.0
    %1781 = vmatprep.subr.mxu0 0.0
    %1782 = vmatpush1.msra.mxu0 0.0
    %1783 = vmatprep.subr.mxu0 0.0
    %1784 = vmatpush1.msra.mxu0 0.0
    %1785 = vmatprep.subr.mxu0 0.0
    %1786 = vmatpush1.msra.mxu0 0.0
    %1787 = vmatprep.subr.mxu0 0.0
    %1788 = vmatpush1.msra.mxu0 0.0
    %1789 = vmatprep.subr.mxu0 0.0
    %1790 = vmatpush1.msra.mxu0 0.0
    %1791 = vmatprep.subr.mxu0 0.0
    %1792 = vmatpush1.msra.mxu0 0.0
    %1793 = vmatprep.subr.mxu0 0.0
    %1794 = vmatpush1.msra.mxu0 0.0
    %1795 = vmatprep.subr.mxu0 0.0
    %1796 = vmatpush1.msra.mxu0 0.0
    %1797 = vmatprep.subr.mxu0 0.0
    %1798 = vmatpush1.msra.mxu0 0.0
    %1799 = vmatprep.subr.mxu0 0.0
    %1800 = vmatpush1.msra.mxu0 0.0
    %1801 = vmatprep.mubr.f32.mxu0 0.0
    %1802 = vmatmul.mubr.f32.gmra.mrb[0].mxu0 %v1735
    %v1803 = vpop.f32.mrb[0].mxu0
    %v1804 = vadd.f32 0.0, %v1803
    %v1805 = vpop.f32.mrb[0].mxu0
    %1806 = vdwg.mxu0
    %v1808 = vsel %vm104, %v1733, 0
    %1810 = vmatprep.subr.mxu0 0.0
    %1811 = vmatpush1.msra.mxu0 %v1438
    %1812 = vmatprep.subr.mxu0 0.0
    %1813 = vmatpush1.msra.mxu0 %v1439
    %1814 = vmatprep.subr.mxu0 0.0
    %1815 = vmatpush1.msra.mxu0 %v1440
    %1816 = vmatprep.subr.mxu0 0.0
    %1817 = vmatpush1.msra.mxu0 %v1441
    %1818 = vmatprep.subr.mxu0 0.0
    %1819 = vmatpush1.msra.mxu0 0.0
    %1820 = vmatprep.subr.mxu0 0.0
    %1821 = vmatpush1.msra.mxu0 0.0
    %1822 = vmatprep.subr.mxu0 0.0
    %1823 = vmatpush1.msra.mxu0 0.0
    %1824 = vmatprep.subr.mxu0 0.0
    %1825 = vmatpush1.msra.mxu0 0.0
    %1826 = vmatprep.subr.mxu0 0.0
    %1827 = vmatpush1.msra.mxu0 0.0
    %1828 = vmatprep.subr.mxu0 0.0
    %1829 = vmatpush1.msra.mxu0 0.0
    %1830 = vmatprep.subr.mxu0 0.0
    %1831 = vmatpush1.msra.mxu0 0.0
    %1832 = vmatprep.subr.mxu0 0.0
    %1833 = vmatpush1.msra.mxu0 0.0
    %1834 = vmatprep.subr.mxu0 0.0
    %1835 = vmatpush1.msra.mxu0 0.0
    %1836 = vmatprep.subr.mxu0 0.0
    %1837 = vmatpush1.msra.mxu0 0.0
    %1838 = vmatprep.subr.mxu0 0.0
    %1839 = vmatpush1.msra.mxu0 0.0
    %1840 = vmatprep.subr.mxu0 0.0
    %1841 = vmatpush1.msra.mxu0 0.0
    %1842 = vmatprep.subr.mxu0 0.0
    %1843 = vmatpush1.msra.mxu0 0.0
    %1844 = vmatprep.subr.mxu0 0.0
    %1845 = vmatpush1.msra.mxu0 0.0
    %1846 = vmatprep.subr.mxu0 0.0
    %1847 = vmatpush1.msra.mxu0 0.0
    %1848 = vmatprep.subr.mxu0 0.0
    %1849 = vmatpush1.msra.mxu0 0.0
    %1850 = vmatprep.subr.mxu0 0.0
    %1851 = vmatpush1.msra.mxu0 0.0
    %1852 = vmatprep.subr.mxu0 0.0
    %1853 = vmatpush1.msra.mxu0 0.0
    %1854 = vmatprep.subr.mxu0 0.0
    %1855 = vmatpush1.msra.mxu0 0.0
    %1856 = vmatprep.subr.mxu0 0.0
    %1857 = vmatpush1.msra.mxu0 0.0
    %1858 = vmatprep.subr.mxu0 0.0
    %1859 = vmatpush1.msra.mxu0 0.0
    %1860 = vmatprep.subr.mxu0 0.0
    %1861 = vmatpush1.msra.mxu0 0.0
    %1862 = vmatprep.subr.mxu0 0.0
    %1863 = vmatpush1.msra.mxu0 0.0
    %1864 = vmatprep.subr.mxu0 0.0
    %1865 = vmatpush1.msra.mxu0 0.0
    %1866 = vmatprep.subr.mxu0 0.0
    %1867 = vmatpush1.msra.mxu0 0.0
    %1868 = vmatprep.subr.mxu0 0.0
    %1869 = vmatpush1.msra.mxu0 0.0
    %1870 = vmatprep.subr.mxu0 0.0
    %1871 = vmatpush1.msra.mxu0 0.0
    %1872 = vmatprep.subr.mxu0 0.0
    %1873 = vmatpush1.msra.mxu0 0.0
    %1874 = vmatprep.mubr.f32.mxu0 0.0
    %1875 = vmatmul.mubr.f32.gmra.mrb[0].mxu0 %v1808
    %v1876 = vpop.f32.mrb[0].mxu0
    %v1877 = vadd.f32 0.0, %v1876
    %v1878 = vpop.f32.mrb[0].mxu0
    %1879 = vdwg.mxu0
    %v1881 = vlaneseq
    %v1882 = vshrl.u32 %v1881, 7
    %v1883 = vsub.s32 0, %v1882
    %v1884 = vrot.slane %v1420, %v1883
    %v1886 = vmul.f32 %v1877, %v1884
    %v1887 = vmul.f32 %v1804, %v1886
    %v1889 = vlaneseq
    %v1890 = vshrl.u32 %v1889, 7
    %v1891 = vsub.s32 0, %v1890
    %v1892 = vrot.slane %v1421, %v1891
    %v1894 = vsub.f32 %v1892, %v1887
    %v1896 = vsel %vm581, %v1886, 0
    %1898 = vmatprep.subr.mxu0 0.0
    %1899 = vmatpush1.msra.mxu0 %v1896
    %1900 = vmatprep.subr.mxu0 0.0
    %1901 = vmatpush1.msra.mxu0 0.0
    %1902 = vmatprep.subr.mxu0 0.0
    %1903 = vmatpush1.msra.mxu0 0.0
    %1904 = vmatprep.subr.mxu0 0.0
    %1905 = vmatpush1.msra.mxu0 0.0
    %1906 = vmatprep.subr.mxu0 0.0
    %1907 = vmatpush1.msra.mxu0 0.0
    %1908 = vmatprep.subr.mxu0 0.0
    %1909 = vmatpush1.msra.mxu0 0.0
    %1910 = vmatprep.subr.mxu0 0.0
    %1911 = vmatpush1.msra.mxu0 0.0
    %1912 = vmatprep.subr.mxu0 0.0
    %1913 = vmatpush1.msra.mxu0 0.0
    %1914 = vmatprep.subr.mxu0 0.0
    %1915 = vmatpush1.msra.mxu0 0.0
    %1916 = vmatprep.subr.mxu0 0.0
    %1917 = vmatpush1.msra.mxu0 0.0
    %1918 = vmatprep.subr.mxu0 0.0
    %1919 = vmatpush1.msra.mxu0 0.0
    %1920 = vmatprep.subr.mxu0 0.0
    %1921 = vmatpush1.msra.mxu0 0.0
    %1922 = vmatprep.subr.mxu0 0.0
    %1923 = vmatpush1.msra.mxu0 0.0
    %1924 = vmatprep.subr.mxu0 0.0
    %1925 = vmatpush1.msra.mxu0 0.0
    %1926 = vmatprep.subr.mxu0 0.0
    %1927 = vmatpush1.msra.mxu0 0.0
    %1928 = vmatprep.subr.mxu0 0.0
    %1929 = vmatpush1.msra.mxu0 0.0
    %1930 = vmatprep.subr.mxu0 0.0
    %1931 = vmatpush1.msra.mxu0 0.0
    %1932 = vmatprep.subr.mxu0 0.0
    %1933 = vmatpush1.msra.mxu0 0.0
    %1934 = vmatprep.subr.mxu0 0.0
    %1935 = vmatpush1.msra.mxu0 0.0
    %1936 = vmatprep.subr.mxu0 0.0
    %1937 = vmatpush1.msra.mxu0 0.0
    %1938 = vmatprep.subr.mxu0 0.0
    %1939 = vmatpush1.msra.mxu0 0.0
    %1940 = vmatprep.subr.mxu0 0.0
    %1941 = vmatpush1.msra.mxu0 0.0
    %1942 = vmatprep.subr.mxu0 0.0
    %1943 = vmatpush1.msra.mxu0 0.0
    %1944 = vmatprep.subr.mxu0 0.0
    %1945 = vmatpush1.msra.mxu0 0.0
    %1946 = vmatprep.subr.mxu0 0.0
    %1947 = vmatpush1.msra.mxu0 0.0
    %1948 = vmatprep.subr.mxu0 0.0
    %1949 = vmatpush1.msra.mxu0 0.0
    %1950 = vmatprep.subr.mxu0 0.0
    %1951 = vmatpush1.msra.mxu0 0.0
    %1952 = vmatprep.subr.mxu0 0.0
    %1953 = vmatpush1.msra.mxu0 0.0
    %1954 = vmatprep.subr.mxu0 0.0
    %1955 = vmatpush1.msra.mxu0 0.0
    %1956 = vmatprep.subr.mxu0 0.0
    %1957 = vmatpush1.msra.mxu0 0.0
    %1958 = vmatprep.subr.mxu0 0.0
    %1959 = vmatpush1.msra.mxu0 0.0
    %1960 = vmatprep.subr.mxu0 0.0
    %1961 = vmatpush1.msra.mxu0 0.0
    %1962 = vmatprep.mubr.f32.mxu0 0.0
    %1963 = vmatmul.mubr.f32.gmra.mrb[0].mxu0 %v570
    %v1964 = vpop.f32.mrb[0].mxu0
    %v1965 = vadd.f32 0.0, %v1964
    %v1966 = vpop.f32.mrb[0].mxu0
    %1967 = vmatprep.mubr.f32.mxu0 0.0
    %1968 = vmatmul.mubr.f32.gmra.mrb[0].mxu0 %v573
    %v1969 = vpop.f32.mrb[0].mxu0
    %v1970 = vadd.f32 0.0, %v1969
    %v1971 = vpop.f32.mrb[0].mxu0
    %1972 = vmatprep.mubr.f32.mxu0 0.0
    %1973 = vmatmul.mubr.f32.gmra.mrb[0].mxu0 %v576
    %v1974 = vpop.f32.mrb[0].mxu0
    %v1975 = vadd.f32 0.0, %v1974
    %v1976 = vpop.f32.mrb[0].mxu0
    %1977 = vmatprep.mubr.f32.mxu0 0.0
    %1978 = vmatmul.mubr.f32.gmra.mrb[0].mxu0 %v579
    %v1979 = vpop.f32.mrb[0].mxu0
    %v1980 = vadd.f32 0.0, %v1979
    %v1981 = vpop.f32.mrb[0].mxu0
    %1982 = vdwg.mxu0
    %v1984 = vsel %vm581, %v1894, 0
    %1986 = vmatprep.subr.mxu0 0.0
    %1987 = vmatpush1.msra.mxu0 %v1984
    %1988 = vmatprep.subr.mxu0 0.0
    %1989 = vmatpush1.msra.mxu0 0.0
    %1990 = vmatprep.subr.mxu0 0.0
    %1991 = vmatpush1.msra.mxu0 0.0
    %1992 = vmatprep.subr.mxu0 0.0
    %1993 = vmatpush1.msra.mxu0 0.0
    %1994 = vmatprep.subr.mxu0 0.0
    %1995 = vmatpush1.msra.mxu0 0.0
    %1996 = vmatprep.subr.mxu0 0.0
    %1997 = vmatpush1.msra.mxu0 0.0
    %1998 = vmatprep.subr.mxu0 0.0
    %1999 = vmatpush1.msra.mxu0 0.0
    %2000 = vmatprep.subr.mxu0 0.0
    %2001 = vmatpush1.msra.mxu0 0.0
    %2002 = vmatprep.subr.mxu0 0.0
    %2003 = vmatpush1.msra.mxu0 0.0
    %2004 = vmatprep.subr.mxu0 0.0
    %2005 = vmatpush1.msra.mxu0 0.0
    %2006 = vmatprep.subr.mxu0 0.0
    %2007 = vmatpush1.msra.mxu0 0.0
    %2008 = vmatprep.subr.mxu0 0.0
    %2009 = vmatpush1.msra.mxu0 0.0
    %2010 = vmatprep.subr.mxu0 0.0
    %2011 = vmatpush1.msra.mxu0 0.0
    %2012 = vmatprep.subr.mxu0 0.0
    %2013 = vmatpush1.msra.mxu0 0.0
    %2014 = vmatprep.subr.mxu0 0.0
    %2015 = vmatpush1.msra.mxu0 0.0
    %2016 = vmatprep.subr.mxu0 0.0
    %2017 = vmatpush1.msra.mxu0 0.0
    %2018 = vmatprep.subr.mxu0 0.0
    %2019 = vmatpush1.msra.mxu0 0.0
    %2020 = vmatprep.subr.mxu0 0.0
    %2021 = vmatpush1.msra.mxu0 0.0
    %2022 = vmatprep.subr.mxu0 0.0
    %2023 = vmatpush1.msra.mxu0 0.0
    %2024 = vmatprep.subr.mxu0 0.0
    %2025 = vmatpush1.msra.mxu0 0.0
    %2026 = vmatprep.subr.mxu0 0.0
    %2027 = vmatpush1.msra.mxu0 0.0
    %2028 = vmatprep.subr.mxu0 0.0
    %2029 = vmatpush1.msra.mxu0 0.0
    %2030 = vmatprep.subr.mxu0 0.0
    %2031 = vmatpush1.msra.mxu0 0.0
    %2032 = vmatprep.subr.mxu0 0.0
    %2033 = vmatpush1.msra.mxu0 0.0
    %2034 = vmatprep.subr.mxu0 0.0
    %2035 = vmatpush1.msra.mxu0 0.0
    %2036 = vmatprep.subr.mxu0 0.0
    %2037 = vmatpush1.msra.mxu0 0.0
    %2038 = vmatprep.subr.mxu0 0.0
    %2039 = vmatpush1.msra.mxu0 0.0
    %2040 = vmatprep.subr.mxu0 0.0
    %2041 = vmatpush1.msra.mxu0 0.0
    %2042 = vmatprep.subr.mxu0 0.0
    %2043 = vmatpush1.msra.mxu0 0.0
    %2044 = vmatprep.subr.mxu0 0.0
    %2045 = vmatpush1.msra.mxu0 0.0
    %2046 = vmatprep.subr.mxu0 0.0
    %2047 = vmatpush1.msra.mxu0 0.0
    %2048 = vmatprep.subr.mxu0 0.0
    %2049 = vmatpush1.msra.mxu0 0.0
    %2050 = vmatprep.mubr.f32.mxu0 0.0
    %2051 = vmatmul.mubr.f32.gmra.mrb[0].mxu0 %v570
    %v2052 = vpop.f32.mrb[0].mxu0
    %v2053 = vadd.f32 0.0, %v2052
    %v2054 = vpop.f32.mrb[0].mxu0
    %2055 = vmatprep.mubr.f32.mxu0 0.0
    %2056 = vmatmul.mubr.f32.gmra.mrb[0].mxu0 %v573
    %v2057 = vpop.f32.mrb[0].mxu0
    %v2058 = vadd.f32 0.0, %v2057
    %v2059 = vpop.f32.mrb[0].mxu0
    %2060 = vmatprep.mubr.f32.mxu0 0.0
    %2061 = vmatmul.mubr.f32.gmra.mrb[0].mxu0 %v576
    %v2062 = vpop.f32.mrb[0].mxu0
    %v2063 = vadd.f32 0.0, %v2062
    %v2064 = vpop.f32.mrb[0].mxu0
    %2065 = vmatprep.mubr.f32.mxu0 0.0
    %2066 = vmatmul.mubr.f32.gmra.mrb[0].mxu0 %v579
    %v2067 = vpop.f32.mrb[0].mxu0
    %v2068 = vadd.f32 0.0, %v2067
    %v2069 = vpop.f32.mrb[0].mxu0
    %2070 = vdwg.mxu0
    %v2071 = vmul.f32 %v1416, %v1965
    %v2072 = vmul.f32 %v1417, %v1970
    %v2073 = vmul.f32 %v1418, %v1975
    %v2074 = vmul.f32 %v1419, %v1980
    %v2075 = vadd.f32 %v2071, %v2053
    %v2076 = vadd.f32 %v2072, %v2058
    %v2077 = vadd.f32 %v2073, %v2063
    %v2078 = vadd.f32 %v2074, %v2068
    %v2079 = vxor.u32 %v2075, 2147483648
    %v2080 = vxor.u32 %v2076, 2147483648
    %v2081 = vxor.u32 %v2077, 2147483648
    %v2082 = vxor.u32 %v2078, 2147483648
    %v2083 = vmul.f32 %v2079, 1.442695
    %v2084 = vpow.pop %v2083
    %v2085 = vmul.f32 %v2080, 1.442695
    %v2086 = vpow.pop %v2085
    %v2087 = vmul.f32 %v2081, 1.442695
    %v2088 = vpow.pop %v2087
    %v2089 = vmul.f32 %v2082, 1.442695
    %v2090 = vpow.pop %v2089
    %v2091 = vadd.f32 %v2084, 1.0
    %v2092 = vadd.f32 %v2086, 1.0
    %v2093 = vadd.f32 %v2088, 1.0
    %v2094 = vadd.f32 %v2090, 1.0
    %v2095 = vrcp.pop %v2091
    %v2096 = vmul.f32 1.0, %v2095
    %v2097 = vrcp.pop %v2092
    %v2098 = vmul.f32 1.0, %v2097
    %v2099 = vrcp.pop %v2093
    %v2100 = vmul.f32 1.0, %v2099
    %v2101 = vrcp.pop %v2094
    %v2102 = vmul.f32 1.0, %v2101
    %v2103 = vmul.f32 %v2075, %v2096
    %v2104 = vmul.f32 %v2076, %v2098
    %v2105 = vmul.f32 %v2077, %v2100
    %v2106 = vmul.f32 %v2078, %v2102
    %v2107 = vld [vmem:[%s19] sm:$0x1]
    %v2108 = vpack.c.bf16 %v2104, %v2103
    %v2109 = vpack.c.bf16 %v2106, %v2105
    %2110 = vmatprep.subr.bf16.mxu0 0
    %2111 = vmatpush1.bf16.msra.mxu0 %v2108
    %2112 = vmatprep.subr.bf16.mxu0 0
    %2113 = vmatpush1.bf16.msra.mxu0 %v2109
    %2114 = vmatprep.subr.bf16.mxu0 0
    %2115 = vmatpush1.bf16.msra.mxu0 0
    %2116 = vmatprep.subr.bf16.mxu0 0
    %2117 = vmatpush1.bf16.msra.mxu0 0
    %2118 = vmatprep.subr.bf16.mxu0 0
    %2119 = vmatpush1.bf16.msra.mxu0 0
    %2120 = vmatprep.subr.bf16.mxu0 0
    %2121 = vmatpush1.bf16.msra.mxu0 0
    %2122 = vmatprep.subr.bf16.mxu0 0
    %2123 = vmatpush1.bf16.msra.mxu0 0
    %2124 = vmatprep.subr.bf16.mxu0 0
    %2125 = vmatpush1.bf16.msra.mxu0 0
    %2126 = vmatprep.subr.bf16.mxu0 0
    %2127 = vmatpush1.bf16.msra.mxu0 0
    %2128 = vmatprep.subr.bf16.mxu0 0
    %2129 = vmatpush1.bf16.msra.mxu0 0
    %2130 = vmatprep.subr.bf16.mxu0 0
    %2131 = vmatpush1.bf16.msra.mxu0 0
    %2132 = vmatprep.subr.bf16.mxu0 0
    %2133 = vmatpush1.bf16.msra.mxu0 0
    %2134 = vmatprep.subr.bf16.mxu0 0
    %2135 = vmatpush1.bf16.msra.mxu0 0
    %2136 = vmatprep.subr.bf16.mxu0 0
    %2137 = vmatpush1.bf16.msra.mxu0 0
    %2138 = vmatprep.subr.bf16.mxu0 0
    %2139 = vmatpush1.bf16.msra.mxu0 0
    %2140 = vmatprep.subr.bf16.mxu0 0
    %2141 = vmatpush1.bf16.msra.mxu0 0
    %2142 = vmatprep.mubr.bf16.mxu0 0
    %2143 = vmatmul.mubr.bf16.gmra.mrb[0].mxu0 %v808
    %v2144 = vpop.f32.mrb[0].mxu0
    %v2145 = vadd.f32 0.0, %v2144
    %v2146 = vpop.f32.mrb[0].mxu0
    %v2147 = vpop.f32.mrb[0].mxu0
    %v2148 = vadd.f32 0.0, %v2147
    %v2149 = vpop.f32.mrb[0].mxu0
    %2150 = vmatprep.mubr.bf16.mxu0 0
    %2151 = vmatmul.mubr.bf16.gmra.mrb[0].mxu0 %v811
    %v2152 = vpop.f32.mrb[0].mxu0
    %v2153 = vadd.f32 0.0, %v2152
    %v2154 = vpop.f32.mrb[0].mxu0
    %v2155 = vpop.f32.mrb[0].mxu0
    %v2156 = vadd.f32 0.0, %v2155
    %v2157 = vpop.f32.mrb[0].mxu0
    %2158 = vdwg.mxu0
    %v2159 = vpack.c.bf16 %v2148, %v2145
    %v2160 = vpack.c.bf16 %v2156, %v2153
    %2161 = vmatprep.subr.bf16.mxu0 0
    %2162 = vmatpush1.bf16.msra.mxu0 %v2108
    %2163 = vmatprep.subr.bf16.mxu0 0
    %2164 = vmatpush1.bf16.msra.mxu0 %v2109
    %2165 = vmatprep.subr.bf16.mxu0 0
    %2166 = vmatpush1.bf16.msra.mxu0 0
    %2167 = vmatprep.subr.bf16.mxu0 0
    %2168 = vmatpush1.bf16.msra.mxu0 0
    %2169 = vmatprep.subr.bf16.mxu0 0
    %2170 = vmatpush1.bf16.msra.mxu0 0
    %2171 = vmatprep.subr.bf16.mxu0 0
    %2172 = vmatpush1.bf16.msra.mxu0 0
    %2173 = vmatprep.subr.bf16.mxu0 0
    %2174 = vmatpush1.bf16.msra.mxu0 0
    %2175 = vmatprep.subr.bf16.mxu0 0
    %2176 = vmatpush1.bf16.msra.mxu0 0
    %2177 = vmatprep.subr.bf16.mxu0 0
    %2178 = vmatpush1.bf16.msra.mxu0 0
    %2179 = vmatprep.subr.bf16.mxu0 0
    %2180 = vmatpush1.bf16.msra.mxu0 0
    %2181 = vmatprep.subr.bf16.mxu0 0
    %2182 = vmatpush1.bf16.msra.mxu0 0
    %2183 = vmatprep.subr.bf16.mxu0 0
    %2184 = vmatpush1.bf16.msra.mxu0 0
    %2185 = vmatprep.subr.bf16.mxu0 0
    %2186 = vmatpush1.bf16.msra.mxu0 0
    %2187 = vmatprep.subr.bf16.mxu0 0
    %2188 = vmatpush1.bf16.msra.mxu0 0
    %2189 = vmatprep.subr.bf16.mxu0 0
    %2190 = vmatpush1.bf16.msra.mxu0 0
    %2191 = vmatprep.subr.bf16.mxu0 0
    %2192 = vmatpush1.bf16.msra.mxu0 0
    %2193 = vmatprep.mubr.bf16.mxu0 0
    %2194 = vmatmul.mubr.bf16.gmra.mrb[0].mxu0 %v875
    %v2195 = vpop.f32.mrb[0].mxu0
    %v2196 = vadd.f32 0.0, %v2195
    %v2197 = vpop.f32.mrb[0].mxu0
    %v2198 = vpop.f32.mrb[0].mxu0
    %v2199 = vadd.f32 0.0, %v2198
    %v2200 = vpop.f32.mrb[0].mxu0
    %2201 = vmatprep.mubr.bf16.mxu0 0
    %2202 = vmatmul.mubr.bf16.gmra.mrb[0].mxu0 %v878
    %v2203 = vpop.f32.mrb[0].mxu0
    %v2204 = vadd.f32 0.0, %v2203
    %v2205 = vpop.f32.mrb[0].mxu0
    %v2206 = vpop.f32.mrb[0].mxu0
    %v2207 = vadd.f32 0.0, %v2206
    %v2208 = vpop.f32.mrb[0].mxu0
    %2209 = vdwg.mxu0
    %v2210 = vpack.c.bf16 %v2199, %v2196
    %v2211 = vpack.c.bf16 %v2207, %v2204
    %v2212 = vld [vmem:[%s18] sm:$0xf]
    %v2213 = vld [vmem:[%s18 + $0x4] sm:$0xf]
    %v2214 = vld [vmem:[%s18 + $0x8] sm:$0xf]
    %v2215 = vld [vmem:[%s18 + $0xc] sm:$0xf]
    %v2216 = vld [vmem:[%s18 + $0x10] sm:$0xf]
    %v2217 = vld [vmem:[%s18 + $0x14] sm:$0xf]
    %v2218 = vld [vmem:[%s18 + $0x18] sm:$0xf]
    %v2219 = vld [vmem:[%s18 + $0x1c] sm:$0xf]
    %v2220 = vld [vmem:[%s18 + $0x20] sm:$0xf]
    %v2221 = vld [vmem:[%s18 + $0x24] sm:$0xf]
    %v2222 = vld [vmem:[%s18 + $0x28] sm:$0xf]
    %v2223 = vld [vmem:[%s18 + $0x2c] sm:$0xf]
    %v2224 = vld [vmem:[%s18 + $0x30] sm:$0xf]
    %v2225 = vld [vmem:[%s18 + $0x34] sm:$0xf]
    %v2226 = vld [vmem:[%s18 + $0x38] sm:$0xf]
    %v2227 = vld [vmem:[%s18 + $0x3c] sm:$0xf]
    %s2228 = scalar_lea.vmem %s18, 64
    %v2229 = vld [vmem:[%s2228] sm:$0xf]
    %v2230 = vld [vmem:[%s2228 + $0x4] sm:$0xf]
    %v2231 = vld [vmem:[%s2228 + $0x8] sm:$0xf]
    %v2232 = vld [vmem:[%s2228 + $0xc] sm:$0xf]
    %v2233 = vld [vmem:[%s2228 + $0x10] sm:$0xf]
    %v2234 = vld [vmem:[%s2228 + $0x14] sm:$0xf]
    %v2235 = vld [vmem:[%s2228 + $0x18] sm:$0xf]
    %v2236 = vld [vmem:[%s2228 + $0x1c] sm:$0xf]
    %v2237 = vld [vmem:[%s2228 + $0x20] sm:$0xf]
    %v2238 = vld [vmem:[%s2228 + $0x24] sm:$0xf]
    %v2239 = vld [vmem:[%s2228 + $0x28] sm:$0xf]
    %v2240 = vld [vmem:[%s2228 + $0x2c] sm:$0xf]
    %v2241 = vld [vmem:[%s2228 + $0x30] sm:$0xf]
    %v2242 = vld [vmem:[%s2228 + $0x34] sm:$0xf]
    %v2243 = vld [vmem:[%s2228 + $0x38] sm:$0xf]
    %v2244 = vld [vmem:[%s2228 + $0x3c] sm:$0xf]
    %v2261 = vunpack.c.l.b16 %v2229
    %v2262 = vunpack.c.l.b16 %v2230
    %v2263 = vunpack.c.l.b16 %v2231
    %v2264 = vunpack.c.l.b16 %v2232
    %v2265 = vunpack.c.l.b16 %v2233
    %v2266 = vunpack.c.l.b16 %v2234
    %v2267 = vunpack.c.l.b16 %v2235
    %v2268 = vunpack.c.l.b16 %v2236
    %v2269 = vunpack.c.l.b16 %v2237
    %v2270 = vunpack.c.l.b16 %v2238
    %v2271 = vunpack.c.l.b16 %v2239
    %v2272 = vunpack.c.l.b16 %v2240
    %v2273 = vunpack.c.l.b16 %v2241
    %v2274 = vunpack.c.l.b16 %v2242
    %v2275 = vunpack.c.l.b16 %v2243
    %v2276 = vunpack.c.l.b16 %v2244
    %v2277 = vpack.c.b16 %v2262, %v2261
    %v2278 = vpack.c.b16 %v2264, %v2263
    %v2279 = vpack.c.b16 %v2266, %v2265
    %v2280 = vpack.c.b16 %v2268, %v2267
    %v2281 = vpack.c.b16 %v2270, %v2269
    %v2282 = vpack.c.b16 %v2272, %v2271
    %v2283 = vpack.c.b16 %v2274, %v2273
    %v2284 = vpack.c.b16 %v2276, %v2275
    %2293 = vmatprep.subr.bf16.mxu0 0
    %2294 = vmatpush1.bf16.msra.mxu0 %v2277
    %2295 = vmatprep.subr.bf16.mxu0 0
    %2296 = vmatpush1.bf16.msra.mxu0 %v2278
    %2297 = vmatprep.subr.bf16.mxu0 0
    %2298 = vmatpush1.bf16.msra.mxu0 %v2279
    %2299 = vmatprep.subr.bf16.mxu0 0
    %2300 = vmatpush1.bf16.msra.mxu0 %v2280
    %2301 = vmatprep.subr.bf16.mxu0 0
    %2302 = vmatpush1.bf16.msra.mxu0 %v2281
    %2303 = vmatprep.subr.bf16.mxu0 0
    %2304 = vmatpush1.bf16.msra.mxu0 %v2282
    %2305 = vmatprep.subr.bf16.mxu0 0
    %2306 = vmatpush1.bf16.msra.mxu0 %v2283
    %2307 = vmatprep.subr.bf16.mxu0 0
    %2308 = vmatpush1.bf16.msra.mxu0 %v2284
    %2309 = vmatprep.subr.bf16.mxu0 0
    %2310 = vmatpush1.bf16.msra.mxu0 0
    %2311 = vmatprep.subr.bf16.mxu0 0
    %2312 = vmatpush1.bf16.msra.mxu0 0
    %2313 = vmatprep.subr.bf16.mxu0 0
    %2314 = vmatpush1.bf16.msra.mxu0 0
    %2315 = vmatprep.subr.bf16.mxu0 0
    %2316 = vmatpush1.bf16.msra.mxu0 0
    %2317 = vmatprep.subr.bf16.mxu0 0
    %2318 = vmatpush1.bf16.msra.mxu0 0
    %2319 = vmatprep.subr.bf16.mxu0 0
    %2320 = vmatpush1.bf16.msra.mxu0 0
    %2321 = vmatprep.subr.bf16.mxu0 0
    %2322 = vmatpush1.bf16.msra.mxu0 0
    %2323 = vmatprep.subr.bf16.mxu0 0
    %2324 = vmatpush1.bf16.msra.mxu0 0
    %2325 = vmatprep.mubr.bf16.mxu0 0
    %2326 = vmatmul.mubr.bf16.gmra.mrb[0].mxu0 %v2108
    %v2327 = vpop.f32.mrb[0].mxu0
    %v2328 = vadd.f32 0.0, %v2327
    %v2329 = vpop.f32.mrb[0].mxu0
    %v2330 = vpop.f32.mrb[0].mxu0
    %v2331 = vadd.f32 0.0, %v2330
    %v2332 = vpop.f32.mrb[0].mxu0
    %2333 = vmatprep.mubr.bf16.mxu0 0
    %2334 = vmatmul.mubr.bf16.gmra.mrb[0].mxu0 %v2109
    %v2335 = vpop.f32.mrb[0].mxu0
    %v2336 = vadd.f32 0.0, %v2335
    %v2337 = vpop.f32.mrb[0].mxu0
    %v2338 = vpop.f32.mrb[0].mxu0
    %v2339 = vadd.f32 0.0, %v2338
    %v2340 = vpop.f32.mrb[0].mxu0
    %2341 = vdwg.mxu0
    %v2358 = vunpack.c.l.b16 %v2212
    %v2359 = vunpack.c.l.b16 %v2213
    %v2360 = vunpack.c.l.b16 %v2214
    %v2361 = vunpack.c.l.b16 %v2215
    %v2362 = vunpack.c.l.b16 %v2216
    %v2363 = vunpack.c.l.b16 %v2217
    %v2364 = vunpack.c.l.b16 %v2218
    %v2365 = vunpack.c.l.b16 %v2219
    %v2366 = vunpack.c.l.b16 %v2220
    %v2367 = vunpack.c.l.b16 %v2221
    %v2368 = vunpack.c.l.b16 %v2222
    %v2369 = vunpack.c.l.b16 %v2223
    %v2370 = vunpack.c.l.b16 %v2224
    %v2371 = vunpack.c.l.b16 %v2225
    %v2372 = vunpack.c.l.b16 %v2226
    %v2373 = vunpack.c.l.b16 %v2227
    %v2374 = vpack.c.b16 %v2359, %v2358
    %v2375 = vpack.c.b16 %v2361, %v2360
    %v2376 = vpack.c.b16 %v2363, %v2362
    %v2377 = vpack.c.b16 %v2365, %v2364
    %v2378 = vpack.c.b16 %v2367, %v2366
    %v2379 = vpack.c.b16 %v2369, %v2368
    %v2380 = vpack.c.b16 %v2371, %v2370
    %v2381 = vpack.c.b16 %v2373, %v2372
    %2390 = vmatprep.subr.bf16.mxu0 0
    %2391 = vmatpush1.bf16.msra.mxu0 %v2374
    %2392 = vmatprep.subr.bf16.mxu0 0
    %2393 = vmatpush1.bf16.msra.mxu0 %v2375
    %2394 = vmatprep.subr.bf16.mxu0 0
    %2395 = vmatpush1.bf16.msra.mxu0 %v2376
    %2396 = vmatprep.subr.bf16.mxu0 0
    %2397 = vmatpush1.bf16.msra.mxu0 %v2377
    %2398 = vmatprep.subr.bf16.mxu0 0
    %2399 = vmatpush1.bf16.msra.mxu0 %v2378
    %2400 = vmatprep.subr.bf16.mxu0 0
    %2401 = vmatpush1.bf16.msra.mxu0 %v2379
    %2402 = vmatprep.subr.bf16.mxu0 0
    %2403 = vmatpush1.bf16.msra.mxu0 %v2380
    %2404 = vmatprep.subr.bf16.mxu0 0
    %2405 = vmatpush1.bf16.msra.mxu0 %v2381
    %2406 = vmatprep.subr.bf16.mxu0 0
    %2407 = vmatpush1.bf16.msra.mxu0 0
    %2408 = vmatprep.subr.bf16.mxu0 0
    %2409 = vmatpush1.bf16.msra.mxu0 0
    %2410 = vmatprep.subr.bf16.mxu0 0
    %2411 = vmatpush1.bf16.msra.mxu0 0
    %2412 = vmatprep.subr.bf16.mxu0 0
    %2413 = vmatpush1.bf16.msra.mxu0 0
    %2414 = vmatprep.subr.bf16.mxu0 0
    %2415 = vmatpush1.bf16.msra.mxu0 0
    %2416 = vmatprep.subr.bf16.mxu0 0
    %2417 = vmatpush1.bf16.msra.mxu0 0
    %2418 = vmatprep.subr.bf16.mxu0 0
    %2419 = vmatpush1.bf16.msra.mxu0 0
    %2420 = vmatprep.subr.bf16.mxu0 0
    %2421 = vmatpush1.bf16.msra.mxu0 0
    %2422 = vmatprep.mubr.bf16.mxu0 0
    %2423 = vmatmul.mubr.bf16.gmra.mrb[0].mxu0 %v2159
    %v2424 = vpop.f32.mrb[0].mxu0
    %v2425 = vadd.f32 %v2328, %v2424
    %v2426 = vpop.f32.mrb[0].mxu0
    %v2427 = vpop.f32.mrb[0].mxu0
    %v2428 = vadd.f32 %v2331, %v2427
    %v2429 = vpop.f32.mrb[0].mxu0
    %2430 = vmatprep.mubr.bf16.mxu0 0
    %2431 = vmatmul.mubr.bf16.gmra.mrb[0].mxu0 %v2160
    %v2432 = vpop.f32.mrb[0].mxu0
    %v2433 = vadd.f32 %v2336, %v2432
    %v2434 = vpop.f32.mrb[0].mxu0
    %v2435 = vpop.f32.mrb[0].mxu0
    %v2436 = vadd.f32 %v2339, %v2435
    %v2437 = vpop.f32.mrb[0].mxu0
    %2438 = vdwg.mxu0
    %s2439 = scalar_lea.vmem %s18, 128
    %v2440 = vld [vmem:[%s2439] sm:$0xf]
    %v2441 = vld [vmem:[%s2439 + $0x4] sm:$0xf]
    %v2442 = vld [vmem:[%s2439 + $0x8] sm:$0xf]
    %v2443 = vld [vmem:[%s2439 + $0xc] sm:$0xf]
    %v2444 = vld [vmem:[%s2439 + $0x10] sm:$0xf]
    %v2445 = vld [vmem:[%s2439 + $0x14] sm:$0xf]
    %v2446 = vld [vmem:[%s2439 + $0x18] sm:$0xf]
    %v2447 = vld [vmem:[%s2439 + $0x1c] sm:$0xf]
    %v2448 = vld [vmem:[%s2439 + $0x20] sm:$0xf]
    %v2449 = vld [vmem:[%s2439 + $0x24] sm:$0xf]
    %v2450 = vld [vmem:[%s2439 + $0x28] sm:$0xf]
    %v2451 = vld [vmem:[%s2439 + $0x2c] sm:$0xf]
    %v2452 = vld [vmem:[%s2439 + $0x30] sm:$0xf]
    %v2453 = vld [vmem:[%s2439 + $0x34] sm:$0xf]
    %v2454 = vld [vmem:[%s2439 + $0x38] sm:$0xf]
    %v2455 = vld [vmem:[%s2439 + $0x3c] sm:$0xf]
    %v2472 = vunpack.c.l.b16 %v2440
    %v2473 = vunpack.c.l.b16 %v2441
    %v2474 = vunpack.c.l.b16 %v2442
    %v2475 = vunpack.c.l.b16 %v2443
    %v2476 = vunpack.c.l.b16 %v2444
    %v2477 = vunpack.c.l.b16 %v2445
    %v2478 = vunpack.c.l.b16 %v2446
    %v2479 = vunpack.c.l.b16 %v2447
    %v2480 = vunpack.c.l.b16 %v2448
    %v2481 = vunpack.c.l.b16 %v2449
    %v2482 = vunpack.c.l.b16 %v2450
    %v2483 = vunpack.c.l.b16 %v2451
    %v2484 = vunpack.c.l.b16 %v2452
    %v2485 = vunpack.c.l.b16 %v2453
    %v2486 = vunpack.c.l.b16 %v2454
    %v2487 = vunpack.c.l.b16 %v2455
    %v2488 = vpack.c.b16 %v2473, %v2472
    %v2489 = vpack.c.b16 %v2475, %v2474
    %v2490 = vpack.c.b16 %v2477, %v2476
    %v2491 = vpack.c.b16 %v2479, %v2478
    %v2492 = vpack.c.b16 %v2481, %v2480
    %v2493 = vpack.c.b16 %v2483, %v2482
    %v2494 = vpack.c.b16 %v2485, %v2484
    %v2495 = vpack.c.b16 %v2487, %v2486
    %2504 = vmatprep.subr.bf16.mxu0 0
    %2505 = vmatpush1.bf16.msra.mxu0 %v2488
    %2506 = vmatprep.subr.bf16.mxu0 0
    %2507 = vmatpush1.bf16.msra.mxu0 %v2489
    %2508 = vmatprep.subr.bf16.mxu0 0
    %2509 = vmatpush1.bf16.msra.mxu0 %v2490
    %2510 = vmatprep.subr.bf16.mxu0 0
    %2511 = vmatpush1.bf16.msra.mxu0 %v2491
    %2512 = vmatprep.subr.bf16.mxu0 0
    %2513 = vmatpush1.bf16.msra.mxu0 %v2492
    %2514 = vmatprep.subr.bf16.mxu0 0
    %2515 = vmatpush1.bf16.msra.mxu0 %v2493
    %2516 = vmatprep.subr.bf16.mxu0 0
    %2517 = vmatpush1.bf16.msra.mxu0 %v2494
    %2518 = vmatprep.subr.bf16.mxu0 0
    %2519 = vmatpush1.bf16.msra.mxu0 %v2495
    %2520 = vmatprep.subr.bf16.mxu0 0
    %2521 = vmatpush1.bf16.msra.mxu0 0
    %2522 = vmatprep.subr.bf16.mxu0 0
    %2523 = vmatpush1.bf16.msra.mxu0 0
    %2524 = vmatprep.subr.bf16.mxu0 0
    %2525 = vmatpush1.bf16.msra.mxu0 0
    %2526 = vmatprep.subr.bf16.mxu0 0
    %2527 = vmatpush1.bf16.msra.mxu0 0
    %2528 = vmatprep.subr.bf16.mxu0 0
    %2529 = vmatpush1.bf16.msra.mxu0 0
    %2530 = vmatprep.subr.bf16.mxu0 0
    %2531 = vmatpush1.bf16.msra.mxu0 0
    %2532 = vmatprep.subr.bf16.mxu0 0
    %2533 = vmatpush1.bf16.msra.mxu0 0
    %2534 = vmatprep.subr.bf16.mxu0 0
    %2535 = vmatpush1.bf16.msra.mxu0 0
    %2536 = vmatprep.mubr.bf16.mxu0 0
    %2537 = vmatmul.mubr.bf16.gmra.mrb[0].mxu0 %v2210
    %v2538 = vpop.f32.mrb[0].mxu0
    %v2539 = vadd.f32 0.0, %v2538
    %v2540 = vpop.f32.mrb[0].mxu0
    %v2541 = vpop.f32.mrb[0].mxu0
    %v2542 = vadd.f32 0.0, %v2541
    %v2543 = vpop.f32.mrb[0].mxu0
    %2544 = vmatprep.mubr.bf16.mxu0 0
    %2545 = vmatmul.mubr.bf16.gmra.mrb[0].mxu0 %v2211
    %v2546 = vpop.f32.mrb[0].mxu0
    %v2547 = vadd.f32 0.0, %v2546
    %v2548 = vpop.f32.mrb[0].mxu0
    %v2549 = vpop.f32.mrb[0].mxu0
    %v2550 = vadd.f32 0.0, %v2549
    %v2551 = vpop.f32.mrb[0].mxu0
    %2552 = vdwg.mxu0
    %v2553 = vadd.f32 %v2425, %v2539
    %v2554 = vadd.f32 %v2428, %v2542
    %v2555 = vadd.f32 %v2433, %v2547
    %v2556 = vadd.f32 %v2436, %v2550
    %v2558 = vlaneseq
    %v2559 = vshrl.u32 %v2558, 7
    %v2560 = vsub.s32 0, %v2559
    %v2561 = vrot.slane %v2107, %v2560
    %v2563 = vadd.f32 %v2553, %v2561
    %v2564 = vadd.f32 %v2554, %v2561
    %v2565 = vadd.f32 %v2555, %v2561
    %v2566 = vadd.f32 %v2556, %v2561
    %v2567 = vpack.c.bf16 %v74, %v73
    %v2568 = vpack.c.bf16 %v76, %v75
    %v2569 = vld [vmem:[%s20] sm:$0xf]
    %v2570 = vld [vmem:[%s20 + $0x4] sm:$0xf]
    %v2571 = vld [vmem:[%s20 + $0x8] sm:$0xf]
    %v2572 = vld [vmem:[%s20 + $0xc] sm:$0xf]
    %v2573 = vld [vmem:[%s20 + $0x10] sm:$0xf]
    %v2574 = vld [vmem:[%s20 + $0x14] sm:$0xf]
    %v2575 = vld [vmem:[%s20 + $0x18] sm:$0xf]
    %v2576 = vld [vmem:[%s20 + $0x1c] sm:$0xf]
    %v2577 = vld [vmem:[%s21] sm:$0x1]
    %v2579 = vlaneseq
    %v2580 = vshrl.u32 %v2579, 7
    %v2581 = vsub.s32 0, %v2580
    %v2582 = vrot.slane %v2577, %v2581
    %v2592 = vunpack.c.l.b16 %v2569
    %v2593 = vunpack.c.l.b16 %v2570
    %v2594 = vunpack.c.l.b16 %v2571
    %v2595 = vunpack.c.l.b16 %v2572
    %v2596 = vunpack.c.l.b16 %v2573
    %v2597 = vunpack.c.l.b16 %v2574
    %v2598 = vunpack.c.l.b16 %v2575
    %v2599 = vunpack.c.l.b16 %v2576
    %v2600 = vpack.c.b16 %v2593, %v2592
    %v2601 = vpack.c.b16 %v2595, %v2594
    %v2602 = vpack.c.b16 %v2597, %v2596
    %v2603 = vpack.c.b16 %v2599, %v2598
    %v2609 = vsel %vm252, %v2567, 0
    %v2612 = vsel %vm252, %v2568, 0
    %2614 = vmatprep.subr.bf16.mxu0 0
    %2615 = vmatpush1.bf16.msra.mxu0 %v2600
    %2616 = vmatprep.subr.bf16.mxu0 0
    %2617 = vmatpush1.bf16.msra.mxu0 %v2601
    %2618 = vmatprep.subr.bf16.mxu0 0
    %2619 = vmatpush1.bf16.msra.mxu0 %v2602
    %2620 = vmatprep.subr.bf16.mxu0 0
    %2621 = vmatpush1.bf16.msra.mxu0 %v2603
    %2622 = vmatprep.subr.bf16.mxu0 0
    %2623 = vmatpush1.bf16.msra.mxu0 0
    %2624 = vmatprep.subr.bf16.mxu0 0
    %2625 = vmatpush1.bf16.msra.mxu0 0
    %2626 = vmatprep.subr.bf16.mxu0 0
    %2627 = vmatpush1.bf16.msra.mxu0 0
    %2628 = vmatprep.subr.bf16.mxu0 0
    %2629 = vmatpush1.bf16.msra.mxu0 0
    %2630 = vmatprep.subr.bf16.mxu0 0
    %2631 = vmatpush1.bf16.msra.mxu0 0
    %2632 = vmatprep.subr.bf16.mxu0 0
    %2633 = vmatpush1.bf16.msra.mxu0 0
    %2634 = vmatprep.subr.bf16.mxu0 0
    %2635 = vmatpush1.bf16.msra.mxu0 0
    %2636 = vmatprep.subr.bf16.mxu0 0
    %2637 = vmatpush1.bf16.msra.mxu0 0
    %2638 = vmatprep.subr.bf16.mxu0 0
    %2639 = vmatpush1.bf16.msra.mxu0 0
    %2640 = vmatprep.subr.bf16.mxu0 0
    %2641 = vmatpush1.bf16.msra.mxu0 0
    %2642 = vmatprep.subr.bf16.mxu0 0
    %2643 = vmatpush1.bf16.msra.mxu0 0
    %2644 = vmatprep.subr.bf16.mxu0 0
    %2645 = vmatpush1.bf16.msra.mxu0 0
    %2646 = vmatprep.mubr.bf16.mxu0 0
    %2647 = vmatmul.mubr.bf16.gmra.mrb[0].mxu0 %v2609
    %v2648 = vpop.f32.mrb[0].mxu0
    %v2649 = vadd.f32 %v2582, %v2648
    %v2650 = vpop.f32.mrb[0].mxu0
    %v2651 = vpop.f32.mrb[0].mxu0
    %v2652 = vadd.f32 %v2582, %v2651
    %v2653 = vpop.f32.mrb[0].mxu0
    %2654 = vmatprep.mubr.bf16.mxu0 0
    %2655 = vmatmul.mubr.bf16.gmra.mrb[0].mxu0 %v2612
    %v2656 = vpop.f32.mrb[0].mxu0
    %v2657 = vadd.f32 %v2582, %v2656
    %v2658 = vpop.f32.mrb[0].mxu0
    %v2659 = vpop.f32.mrb[0].mxu0
    %v2660 = vadd.f32 %v2582, %v2659
    %v2661 = vpop.f32.mrb[0].mxu0
    %2662 = vdwg.mxu0
    %v2663 = vadd.f32 %v2649, %v2563
    %v2664 = vadd.f32 %v2652, %v2564
    %v2665 = vadd.f32 %v2657, %v2565
    %v2666 = vadd.f32 %v2660, %v2566
    %2667 = vst [vmem:[#allocation2] sm:$0xff] %v2663
    %2668 = vst [vmem:[#allocation2 + $0x8] sm:$0xff] %v2664
    %2669 = vst [vmem:[#allocation2 + $0x10] sm:$0xff] %v2665
    %2670 = vst [vmem:[#allocation2 + $0x18] sm:$0xff] %v2666
    // Predicated region
    $region90: #{resnet_block.1} parent=1 // pred_check
      _
    $region91: #{resnet_block.1} parent=1 // pred_check_branch
      %2672 = sbr.rel (0) target = $region93
    $region92: #{resnet_block.1} parent=1 // pred_region
      %s2674 = ssub.s32 512, 512
      %2675 = vsyncadd [#allocation3], %s2674
      %s2676 = sshll.u32 [#allocation2], 4
      %s2677 = int_to_ptr.vmem [resolvable:$true] %s2676
      %2682 = dma.vmem_to_hbm [thread:$0]  %s2677, 512, %s22, [#allocation3], 128, 128, 8
    $region93: #{resnet_block.1} parent=1 // pred_fallthru
      _
    // Predicated region
    $region94: #{resnet_block.1} parent=1 // pred_check
      _
    $region95: #{resnet_block.1} parent=1 // pred_check_branch
      %2684 = sbr.rel (0) target = $region97
    $region96: #{resnet_block.1} parent=1 // pred_region
      %2685 = dma.done [#allocation3], 512
    $region97: #{resnet_block.1} parent=1 // pred_fallthru
      _
    %2686 = vsyncpa [#allocation3], 1

</llo_original>
